<compile_context>
chip_gen: v7x
topology: tpu7x:2x2x1
jax: 0.10.0
libtpu: 0.0.40
codegen_flags: <defaults>
</compile_context>

<pallas_src>
import functools
import math

import numpy as np
import jax
import jax.numpy as jnp
from jax.experimental import pallas as pl
from jax.experimental.pallas import tpu as pltpu

LEAK = 0.2
F32 = jnp.float32
BF16 = jnp.bfloat16
HP = jax.lax.Precision.HIGHEST   # reference only


# --------------------- constant builders (numpy, trace-time) ----------------

def _conv3x3_masks(h, w):
    """(9, h*w) 0/1 masks: tap k=(dy,dx) valid at (i,j) iff the padded-conv
    source pixel (i+dy-1, j+dx-1) lies inside the image."""
    m = np.zeros((9, h * w), np.float32)
    k = 0
    for dy in range(3):
        for dx in range(3):
            for i in range(h):
                for j in range(w):
                    if 0 <= i + dy - 1 < h and 0 <= j + dx - 1 < w:
                        m[k, i * w + j] = 1.0
            k += 1
    return m


def _avgpool2_mat(h, w):
    """(h*w, (h//2)*(w//2)) matrix implementing 2x2/stride-2 average pooling."""
    p = np.zeros((h * w, (h // 2) * (w // 2)), np.float32)
    for i in range(h):
        for j in range(w):
            p[i * w + j, (i // 2) * (w // 2) + (j // 2)] = 0.25
    return p


def _valid3x3_taps(B, h):
    """(9*B*h*h, B*(h-2)*(h-2)) per-tap 0/1 gather matrices (tap-major rows,
    batch block-diagonal) for a VALID 3x3 conv with batch on the lane axis."""
    ho = h - 2
    eye = np.eye(B, dtype=np.float32)
    blocks = []
    for dy in range(3):
        for dx in range(3):
            v = np.zeros((h * h, ho * ho), np.float32)
            for oy in range(ho):
                for ox in range(ho):
                    v[(oy + dy) * h + (ox + dx), oy * ho + ox] = 1.0
            blocks.append(np.kron(eye, v))
    return np.concatenate(blocks, axis=0)


def _phase_scatter(B, hh):
    """(4*B*hh*hh, B*(2hh)*(2hh)) 0/1 matrix: lane [phase, b, i, j] of the
    polyphase from_rgb output -> lane [b, 2i+di, 2j+dj] of the full-res map.
    TODO(synk): O(H^4); restructure before production resolutions."""
    H = 2 * hh
    hwh = hh * hh
    u = np.zeros((4 * B * hwh, B * H * H), np.float32)
    for t, (di, dj) in enumerate(((0, 0), (0, 1), (1, 0), (1, 1))):
        for b in range(B):
            for i in range(hh):
                for j in range(hh):
                    u[t * B * hwh + b * hwh + i * hh + j,
                      b * H * H + (2 * i + di) * H + (2 * j + dj)] = 1.0
    return u


# --------------------- input packing (layout-only, trace-time) ---------------

def _pack_rows(named):
    """Pack named (rows, cols) matrices into one array along rows.

    Columns are zero-padded to the max width and row blocks to multiples of 8
    (sublane alignment), so in-kernel slices stay aligned.  Returns the packed
    array and {name: (row_offset, rows, cols)}."""
    width = max(int(m.shape[1]) for m in named.values())
    pieces, offs, row = [], {}, 0
    for name, m in named.items():
        r, c = int(m.shape[0]), int(m.shape[1])
        rp = -r % 8
        pieces.append(jnp.pad(m, ((0, rp), (0, width - c))))
        offs[name] = (row, r, c)
        row += r + rp
    return jnp.concatenate(pieces, axis=0), offs


# --------------------- pltpu.roll direction probe ----------------------------

def probe_roll_mode():
    """Direction convention of pltpu.roll on this backend:
      "np"  -> out[j] == x[j - shift]  (numpy.roll convention)
      "rev" -> out[j] == x[j + shift]
      None  -> primitive unavailable (kernel uses slice+concat shifts instead).
    Must be called outside jit."""
    try:
        def k(x_ref, o_ref):
            o_ref[...] = pltpu.roll(x_ref[...], 1, 1)
        x = jnp.arange(256, dtype=F32).reshape(2, 128)
        y = np.asarray(pl.pallas_call(
            k, out_shape=jax.ShapeDtypeStruct((2, 128), F32))(x))
        if y[0, 0] == 127.0 and y[0, 1] == 0.0:
            return "np"
        if y[0, 0] == 1.0 and y[0, 127] == 0.0:
            return "rev"
    except Exception:
        pass
    return None


# --------------------- the fused kernel --------------------------------------

def _make_kernel(*, B, H, n_blocks, w_offs, c_offs, m_offs, roll_mode):
    inv_sqrt2 = 1.0 / math.sqrt(2.0)
    Bh = B * (H // 2) ** 2   # lanes of one polyphase band

    def kernel(xph_ref, u_ref, masks_ref, cpack_ref, wpack_ref, whead_ref,
               linb_ref, o_ref):

        def wmat(name):
            off, r, c = w_offs[name]
            return wpack_ref[off:off + r, 0:c]

        def cmat(name):
            off, r, c = c_offs[name]
            return cpack_ref[off:off + r, 0:c]

        def mm(a, b):
            # bf16 MXU matmul, f32 accumulate (perf review: drop HIGHEST/f32).
            return jnp.dot(a.astype(BF16), b.astype(BF16),
                           preferred_element_type=F32)

        def lrelu(v):
            return jnp.where(v >= 0.0, v, LEAK * v)

        def aug(v):
            # constant-one row so the bias (last weight column) rides the matmul
            return jnp.concatenate([v, jnp.ones((1, v.shape[1]), F32)], axis=0)

        def shift_lanes(v, s):
            """out[:, j] = v[:, j + s] where out-of-range lanes are don't-care
            (the 0/1 tap masks zero every wrapped / out-of-image position)."""
            rows, L = v.shape
            if s == 0:
                return v
            if roll_mode is not None and L % 128 == 0:
                amt = (-s) % L if roll_mode == "np" else s % L
                return pltpu.roll(v, amt, 1)       # XLU slot, no VMEM copy
            if s > 0:                              # fallback: slice + concat
                return jnp.concatenate(
                    [v[:, s:], jnp.zeros((rows, s), v.dtype)], axis=1)
            return jnp.concatenate(
                [jnp.zeros((rows, -s), v.dtype), v[:, :L + s]], axis=1)

        def conv3x3_same(v, wa, mask, h):
            """'same' 3x3 conv on a (C, B*h*h) tile: 9 lane rolls + masks, then
            one (Co, 9C+1) x (9C+1, B*h*h) MXU matmul (bias folded).
            TODO(synk): on v7x switch to 9 accumulating per-tap matmuls."""
            L = v.shape[1]
            pieces = []
            for k in range(9):
                dy, dx = divmod(k, 3)
                s = (dy - 1) * h + (dx - 1)
                pieces.append(shift_lanes(v, s) * mask[k:k + 1, :])
            pieces.append(jnp.ones((1, L), F32))
            return mm(wa, jnp.concatenate(pieces, axis=0))

        # ---- Haar DWT (J=1, mode='zero'): exact polyphase butterflies, f32 ----
        xph = xph_ref[...]
        p = xph[:, 0 * Bh:1 * Bh]
        q = xph[:, 1 * Bh:2 * Bh]
        r = xph[:, 2 * Bh:3 * Bh]
        t = xph[:, 3 * Bh:4 * Bh]
        ll = 0.5 * (p + q + r + t)
        lh = 0.5 * (p + q - r - t)
        hl = 0.5 * (p - q + r - t)
        hh = 0.5 * (p - q - r + t)

        # RGBtoWave: 1x1 Conv2d on LL, 1x1x1 Conv3d on the 3 high bands
        # (bands batched on the lane axis -> one matmul).
        yl2 = lrelu(mm(wmat("w2"), aug(ll)))
        yh = lrelu(mm(wmat("w3"), aug(jnp.concatenate([lh, hl, hh], axis=1))))
        lh2 = yh[:, 0 * Bh:1 * Bh]
        hl2 = yh[:, 1 * Bh:2 * Bh]
        hh2 = yh[:, 2 * Bh:3 * Bh]

        # Inverse Haar -> polyphase wave_img; add x; from_rgb (1x1) on all
        # four phases in one matmul.
        w00 = 0.5 * (yl2 + lh2 + hl2 + hh2)
        w01 = 0.5 * (yl2 + lh2 - hl2 - hh2)
        w10 = 0.5 * (yl2 - lh2 + hl2 - hh2)
        w11 = 0.5 * (yl2 - lh2 - hl2 + hh2)
        xw = jnp.concatenate([p + w00, q + w01, r + w10, t + w11], axis=1)
        f = lrelu(mm(wmat("rgb"), aug(xw)))                  # (nf, 4*Bh)

        # Polyphase -> full-res lane interleave, single 0/1 matmul.
        xa = mm(f, u_ref[...])                               # (nf, B*H*H)

        # ---- WaveDiscriminatorBlocks ----
        h = H
        for i in range(n_blocks):
            L = B * h * h
            mask = masks_ref[:, m_offs[i]:m_offs[i] + L]
            pool = cmat(f"pool{i}")
            res = mm(wmat(f"res_{i}"), aug(mm(xa, pool)))    # avgpool -> 1x1
            y = lrelu(conv3x3_same(xa, wmat(f"c1_{i}"), mask, h))
            y = lrelu(conv3x3_same(y, wmat(f"c2_{i}"), mask, h))
            xa = (mm(y, pool) + res) * inv_sqrt2
            h //= 2

        # ---- minibatch_std: unbiased std over batch, averaged to one scalar,
        # appended as ONE extra channel row (batch lives on lanes). ----
        hw = h * h
        xs_b = [xa[:, b * hw:(b + 1) * hw] for b in range(B)]
        mean = sum(xs_b) / B
        var = sum((xb - mean) ** 2 for xb in xs_b) / (B - 1)
        stat = jnp.mean(jnp.sqrt(var))
        xs = jnp.concatenate([xa, jnp.zeros((1, B * hw), F32) + stat], axis=0)

        # ---- Final VALID 3x3 conv (4x4 -> 2x2) via per-tap 0/1 gathers ----
        vt = cmat("vtaps")
        wo = B * (h - 2) * (h - 2)
        g = [mm(xs, vt[k * B * hw:(k + 1) * B * hw, :]) for k in range(9)]
        ya = mm(wmat("fc"),
                jnp.concatenate(g + [jnp.ones((1, wo), F32)], axis=0))

        # ---- Equalized linear head: (1, B), reshaped to (B, 1) by the wrapper.
        whead = whead_ref[...]                               # (cf, 4) f32
        per_b = [jnp.sum(ya[:, b * 4:(b + 1) * 4] * whead, keepdims=True)
                 for b in range(B)]
        o_ref[...] = jnp.concatenate(per_b, axis=1) + linb_ref[...]

    return kernel


# --------------------- wrapper ------------------------------------------------

def wave_discriminator_forward(x, params, *, log_resolution, n_features,
                               max_features, roll_mode=None):
    """x: (B, 3, 2**log_resolution, 2**log_resolution) NCHW.  Returns (B, 1).

    roll_mode: result of probe_roll_mode() ("np"/"rev") or None for the
    slice+concat lane-shift fallback."""
    B, cin, H, W = x.shape
    assert cin == 3 and H == W == 2 ** log_resolution and B >= 2
    feats = [min(max_features, n_features * 2 ** i)
             for i in range(log_resolution - 1)]
    n_blocks = len(feats) - 1
    cf = feats[-1] + 1
    hh = H // 2
    hf = H >> n_blocks
    assert hf == 4  # final conv is 3x3 VALID on a 4x4 map -> 2x2 for the head

    # Activation: polyphase split, lanes ordered [phase, batch, i, j].
    xr = x.astype(F32).reshape(B, 3, hh, 2, hh, 2)
    ph = jnp.stack([xr[:, :, :, 0, :, 0], xr[:, :, :, 0, :, 1],
                    xr[:, :, :, 1, :, 0], xr[:, :, :, 1, :, 1]], axis=0)
    xph = ph.transpose(2, 0, 1, 3, 4).reshape(3, 4 * B * hh * hh)

    # Learned weights (equalized-lr scale already folded by init_params); the
    # bias is folded as the last column; everything packed into one bf16 array.
    def aug_w(w, b):
        return jnp.concatenate([w.astype(F32), b.astype(F32)[:, None]], axis=1)

    def tap_w(w, b):
        cols = [w[:, :, dy, dx].astype(F32)
                for dy in range(3) for dx in range(3)]
        return jnp.concatenate(cols + [b.astype(F32)[:, None]], axis=1)

    wmats = {"w2": aug_w(params["w2"], params["b2"]),
             "w3": aug_w(params["w3"], params["b3"]),
             "rgb": aug_w(params["rgb_w"], params["rgb_b"])}
    for i, bp in enumerate(params["blocks"]):
        wmats[f"c1_{i}"] = tap_w(bp["c1_w"], bp["c1_b"])
        wmats[f"c2_{i}"] = tap_w(bp["c2_w"], bp["c2_b"])
        wmats[f"res_{i}"] = aug_w(bp["res_w"], bp["res_b"])
    wmats["fc"] = tap_w(params["fc_w"], params["fc_b"])
    wpack, w_offs = _pack_rows(wmats)
    wpack = wpack.astype(BF16)

    # Structural 0/1/0.25 constants, packed into one bf16 array.
    cmats = {}
    h = H
    for i in range(n_blocks):
        cmats[f"pool{i}"] = jnp.asarray(
            np.kron(np.eye(B, dtype=np.float32), _avgpool2_mat(h, h)))
        h //= 2
    cmats["vtaps"] = jnp.asarray(_valid3x3_taps(B, hf))
    cpack, c_offs = _pack_rows(cmats)
    cpack = cpack.astype(BF16)

    # Per-tap validity masks for the 'same' 3x3 convs, lane-concatenated.
    m_list, m_offs = [], []
    h, off = H, 0
    for i in range(n_blocks):
        m = np.tile(_conv3x3_masks(h, h), (1, B))
        m_list.append(m)
        m_offs.append(off)
        off += m.shape[1]
        h //= 2
    masks = jnp.asarray(np.concatenate(m_list, axis=1), dtype=BF16)

    u = jnp.asarray(_phase_scatter(B, hh), dtype=BF16)
    whead = params["lin_w"].reshape(cf, (hf - 2) * (hf - 2)).astype(F32)
    linb = params["lin_b"].reshape(1, 1).astype(F32)

    kernel = _make_kernel(B=B, H=H, n_blocks=n_blocks, w_offs=w_offs,
                          c_offs=c_offs, m_offs=tuple(m_offs),
                          roll_mode=roll_mode)

    # Single fused call, no grid: every operand is a whole-array VMEM block
    # with a single buffer (nothing to pipeline with one step).
    out = pl.pallas_call(
        kernel,
        out_shape=jax.ShapeDtypeStruct((1, B), F32),
    )(xph, u, masks, cpack, wpack, whead, linb)
    return out.reshape(B, 1)


# --------------------- synthetic parameters ----------------------------------

def init_params(key, *, log_resolution, n_features, max_features):
    """Deterministic synthetic params matching the module's shapes.
    EqualizedWeight's 1/sqrt(fan_in) scale is folded into the stored weights;
    constant-initialized biases are perturbed so layout bugs would show."""
    feats = [min(max_features, n_features * 2 ** i)
             for i in range(log_resolution - 1)]
    n_blocks = len(feats) - 1
    nf = feats[0]
    cf = feats[-1] + 1
    keys = iter(jax.random.split(key, 16 + 8 * n_blocks))
    nrm = lambda shape, scale: scale * jax.random.normal(next(keys), shape, F32)

    params = dict(
        w2=nrm((3, 3), 1.0 / math.sqrt(3)), b2=nrm((3,), 0.1),
        w3=nrm((3, 3), 1.0 / math.sqrt(3)), b3=nrm((3,), 0.1),
        rgb_w=nrm((nf, 3), 1.0 / math.sqrt(3)), rgb_b=1.0 + nrm((nf,), 0.1),
        blocks=[],
        fc_w=nrm((cf, cf, 3, 3), 1.0 / math.sqrt(cf * 9)),
        fc_b=1.0 + nrm((cf,), 0.1),
        lin_w=nrm((1, 4 * cf), 1.0 / math.sqrt(4 * cf)),
        lin_b=0.1 + nrm((1,), 0.01),
    )
    for i in range(n_blocks):
        ci, co = feats[i], feats[i + 1]
        params["blocks"].append(dict(
            c1_w=nrm((ci, ci, 3, 3), 1.0 / math.sqrt(ci * 9)),
            c1_b=1.0 + nrm((ci,), 0.1),
            c2_w=nrm((co, ci, 3, 3), 1.0 / math.sqrt(ci * 9)),
            c2_b=1.0 + nrm((co,), 0.1),
            res_w=nrm((co, ci), 1.0 / math.sqrt(ci)),
            res_b=1.0 + nrm((co,), 0.1),
        ))
    return params


# --------------------- pure-JAX reference ------------------------------------

def ref_forward(x, params, *, log_resolution, n_features, max_features):
    feats = [min(max_features, n_features * 2 ** i)
             for i in range(log_resolution - 1)]
    n_blocks = len(feats) - 1
    B, _, H, W = x.shape
    lr = lambda v: jnp.where(v >= 0.0, v, LEAK * v)

    def mix1x1(w, b, t):
        return jnp.einsum("oc,bchw->bohw", w, t, precision=HP) + b[None, :, None, None]

    def conv3x3(t, w, b, pad):
        y = jax.lax.conv_general_dilated(
            t, w, (1, 1), [(pad, pad), (pad, pad)],
            dimension_numbers=("NCHW", "OIHW", "NCHW"), precision=HP)
        return y + b[None, :, None, None]

    def avgpool2(t):
        b_, c_, h_, w_ = t.shape
        return t.reshape(b_, c_, h_ // 2, 2, w_ // 2, 2).mean(axis=(3, 5))

    # RGBtoWave + DWTInverse (haar, J=1, mode='zero').
    xr = x.reshape(B, 3, H // 2, 2, W // 2, 2)
    p, q = xr[:, :, :, 0, :, 0], xr[:, :, :, 0, :, 1]
    r, s = xr[:, :, :, 1, :, 0], xr[:, :, :, 1, :, 1]
    ll, lh = 0.5 * (p + q + r + s), 0.5 * (p + q - r - s)
    hl, hh = 0.5 * (p - q + r - s), 0.5 * (p - q - r + s)
    yl2 = lr(mix1x1(params["w2"], params["b2"], ll))
    lh2 = lr(mix1x1(params["w3"], params["b3"], lh))
    hl2 = lr(mix1x1(params["w3"], params["b3"], hl))
    hh2 = lr(mix1x1(params["w3"], params["b3"], hh))
    wave = jnp.zeros_like(x)
    wave = wave.at[:, :, 0::2, 0::2].set(0.5 * (yl2 + lh2 + hl2 + hh2))
    wave = wave.at[:, :, 0::2, 1::2].set(0.5 * (yl2 + lh2 - hl2 - hh2))
    wave = wave.at[:, :, 1::2, 0::2].set(0.5 * (yl2 - lh2 + hl2 - hh2))
    wave = wave.at[:, :, 1::2, 1::2].set(0.5 * (yl2 - lh2 - hl2 + hh2))

    y = lr(mix1x1(params["rgb_w"], params["rgb_b"], x + wave))

    for i in range(n_blocks):
        bp = params["blocks"][i]
        res = jnp.einsum("oi,bihw->bohw", bp["res_w"], avgpool2(y),
                         precision=HP) + bp["res_b"][None, :, None, None]
        t = lr(conv3x3(y, bp["c1_w"], bp["c1_b"], 1))
        t = lr(conv3x3(t, bp["c2_w"], bp["c2_b"], 1))
        y = (avgpool2(t) + res) * (1.0 / math.sqrt(2.0))

    stat = jnp.mean(jnp.std(y, axis=0, ddof=1))
    y = jnp.concatenate(
        [y, jnp.full((B, 1, y.shape[2], y.shape[3]), stat, F32)], axis=1)
    y = conv3x3(y, params["fc_w"], params["fc_b"], 0)
    y = y.reshape(B, -1)
    return jnp.einsum("bi,oi->bo", y, params["lin_w"],
                      precision=HP) + params["lin_b"][None, :]


if __name__ == "__main__":
    LOG_RES, NF, MAXF = 4, 4, 8          # features = [4, 8, 8], 2 blocks
    B, H = 2, 2 ** LOG_RES               # x: (2, 3, 16, 16)

    key = jax.random.PRNGKey(0)
    kx, kp = jax.random.split(key)
    x = jax.random.normal(kx, (B, 3, H, H), F32)
    params = init_params(kp, log_resolution=LOG_RES, n_features=NF,
                         max_features=MAXF)

    def run(mode):
        fwd = jax.jit(functools.partial(
            wave_discriminator_forward, log_resolution=LOG_RES, n_features=NF,
            max_features=MAXF, roll_mode=mode))
        return jax.block_until_ready(fwd(x, params))

    mode = probe_roll_mode()
    try:
        out = run(mode)
    except Exception:
        if mode is None:
            raise
        out = run(None)                   # conservative slice+concat shifts

    ref = ref_forward(x, params, log_resolution=LOG_RES, n_features=NF,
                      max_features=MAXF)
    # bf16 MXU matmuls (perf review) => looser tolerance than the f32 version.
    np.testing.assert_allclose(np.asarray(out), np.asarray(ref),
                               rtol=5e-2, atol=1e-1)
    print("KERNEL_OK")
</pallas_src>

<mosaic_0001>
module attributes {stable_mosaic.version = 11 : i64} {
  func.func @k(%arg0: memref<2x128xf32, #tpu.memory_space<vmem>>, %arg1: memref<2x128xf32, #tpu.memory_space<vmem>>) attributes {dimension_semantics = [], scalar_prefetch = 0 : i64, scratch_operands = 0 : i64, tpu.core_type = #tpu.core_type<tc>} {
    %c0 = arith.constant 0 : index
    %c0_0 = arith.constant 0 : index
    %0 = vector.load %arg0[%c0, %c0_0] : memref<2x128xf32, #tpu.memory_space<vmem>>, vector<2x128xf32>
    %c1_i32 = arith.constant 1 : i32
    %1 = tpu.dynamic_rotate %0 by %c1_i32 dim 1 : vector<2x128xf32>, i32 -> vector<2x128xf32>
    %c0_1 = arith.constant 0 : index
    %c0_2 = arith.constant 0 : index
    %2 = vector.load %arg1[%c0_1, %c0_2] : memref<2x128xf32, #tpu.memory_space<vmem>>, vector<2x128xf32>
    tpu.vector_store %arg1[%c0_1, %c0_2], %1 {strides = array<i32>} : memref<2x128xf32, #tpu.memory_space<vmem>>, vector<2x128xf32>,
    return
  }
}

module attributes {stable_mosaic.version = 11 : i64} {
  func.func @kernel(%arg0: memref<3x512xf32, #tpu.memory_space<vmem>>, %arg1: memref<512x512xbf16, #tpu.memory_space<vmem>>, %arg2: memref<9x640xbf16, #tpu.memory_space<vmem>>, %arg3: memref<928x128xbf16, #tpu.memory_space<vmem>>, %arg4: memref<88x82xbf16, #tpu.memory_space<vmem>>, %arg5: memref<9x4xf32, #tpu.memory_space<vmem>>, %arg6: memref<1x1xf32, #tpu.memory_space<vmem>>, %arg7: memref<1x2xf32, #tpu.memory_space<vmem>>) attributes {dimension_semantics = [], scalar_prefetch = 0 : i64, scratch_operands = 0 : i64, tpu.core_type = #tpu.core_type<tc>} {
    %c0 = arith.constant 0 : index
    %c0_0 = arith.constant 0 : index
    %0 = vector.load %arg0[%c0, %c0_0] : memref<3x512xf32, #tpu.memory_space<vmem>>, vector<3x512xf32>
    %1 = vector.extract_strided_slice %0 {offsets = [0, 0], sizes = [3, 128], strides = [1, 1]} : vector<3x512xf32> to vector<3x128xf32>
    %2 = vector.extract_strided_slice %0 {offsets = [0, 128], sizes = [3, 128], strides = [1, 1]} : vector<3x512xf32> to vector<3x128xf32>
    %3 = vector.extract_strided_slice %0 {offsets = [0, 256], sizes = [3, 128], strides = [1, 1]} : vector<3x512xf32> to vector<3x128xf32>
    %4 = vector.extract_strided_slice %0 {offsets = [0, 384], sizes = [3, 128], strides = [1, 1]} : vector<3x512xf32> to vector<3x128xf32>
    %5 = arith.addf %1, %2 : vector<3x128xf32>
    %6 = arith.addf %5, %3 : vector<3x128xf32>
    %7 = arith.addf %6, %4 : vector<3x128xf32>
    %cst = arith.constant 5.000000e-01 : f32
    %8 = vector.broadcast %cst : f32 to vector<3x128xf32>
    %9 = arith.mulf %8, %7 : vector<3x128xf32>
    %10 = arith.addf %1, %2 : vector<3x128xf32>
    %11 = arith.subf %10, %3 : vector<3x128xf32>
    %12 = arith.subf %11, %4 : vector<3x128xf32>
    %cst_1 = arith.constant 5.000000e-01 : f32
    %13 = vector.broadcast %cst_1 : f32 to vector<3x128xf32>
    %14 = arith.mulf %13, %12 : vector<3x128xf32>
    %15 = arith.subf %1, %2 : vector<3x128xf32>
    %16 = arith.addf %15, %3 : vector<3x128xf32>
    %17 = arith.subf %16, %4 : vector<3x128xf32>
    %cst_2 = arith.constant 5.000000e-01 : f32
    %18 = vector.broadcast %cst_2 : f32 to vector<3x128xf32>
    %19 = arith.mulf %18, %17 : vector<3x128xf32>
    %20 = arith.subf %1, %2 : vector<3x128xf32>
    %21 = arith.subf %20, %3 : vector<3x128xf32>
    %22 = arith.addf %21, %4 : vector<3x128xf32>
    %cst_3 = arith.constant 5.000000e-01 : f32
    %23 = vector.broadcast %cst_3 : f32 to vector<3x128xf32>
    %24 = arith.mulf %23, %22 : vector<3x128xf32>
    %c0_4 = arith.constant 0 : index
    %c0_5 = arith.constant 0 : index
    %25 = vector.load %arg4[%c0_4, %c0_5] : memref<88x82xbf16, #tpu.memory_space<vmem>>, vector<3x4xbf16>
    %cst_6 = arith.constant 1.000000e+00 : f32
    %26 = vector.broadcast %cst_6 : f32 to vector<1x128xf32>
    %27 = tpu.concatenate %9, %26 in 0 : vector<3x128xf32>, vector<1x128xf32> -> vector<4x128xf32>
    %28 = arith.truncf %27 : vector<4x128xf32> to vector<4x128xbf16>
    %cst_7 = arith.constant dense<0.000000e+00> : vector<3x128xf32>
    %29 = tpu.matmul %25, %28, %cst_7 {dimension_numbers = #tpu.dot_dimension_numbers<[1], [0], [0], [1], [0, 0, 1, 1], [], []>} : vector<3x4xbf16>, vector<4x128xbf16>, vector<3x128xf32> -> vector<3x128xf32>
    %cst_8 = arith.constant 0.000000e+00 : f32
    %30 = vector.broadcast %cst_8 : f32 to vector<3x128xf32>
    %31 = arith.cmpf oge, %29, %30 : vector<3x128xf32>
    %cst_9 = arith.constant 2.000000e-01 : f32
    %32 = vector.broadcast %cst_9 : f32 to vector<3x128xf32>
    %33 = arith.mulf %32, %29 : vector<3x128xf32>
    %34 = arith.select %31, %29, %33 : vector<3x128xi1>, vector<3x128xf32>
    %c8 = arith.constant 8 : index
    %c0_10 = arith.constant 0 : index
    %35 = vector.load %arg4[%c8, %c0_10] : memref<88x82xbf16, #tpu.memory_space<vmem>>, vector<3x4xbf16>
    %36 = tpu.concatenate %14, %19, %24 in 1 : vector<3x128xf32>, vector<3x128xf32>, vector<3x128xf32> -> vector<3x384xf32>
    %cst_11 = arith.constant 1.000000e+00 : f32
    %37 = vector.broadcast %cst_11 : f32 to vector<1x384xf32>
    %38 = tpu.concatenate %36, %37 in 0 : vector<3x384xf32>, vector<1x384xf32> -> vector<4x384xf32>
    %39 = arith.truncf %38 : vector<4x384xf32> to vector<4x384xbf16>
    %cst_12 = arith.constant dense<0.000000e+00> : vector<3x384xf32>
    %40 = tpu.matmul %35, %39, %cst_12 {dimension_numbers = #tpu.dot_dimension_numbers<[1], [0], [0], [1], [0, 0, 1, 1], [], []>} : vector<3x4xbf16>, vector<4x384xbf16>, vector<3x384xf32> -> vector<3x384xf32>
    %cst_13 = arith.constant 0.000000e+00 : f32
    %41 = vector.broadcast %cst_13 : f32 to vector<3x384xf32>
    %42 = arith.cmpf oge, %40, %41 : vector<3x384xf32>
    %cst_14 = arith.constant 2.000000e-01 : f32
    %43 = vector.broadcast %cst_14 : f32 to vector<3x384xf32>
    %44 = arith.mulf %43, %40 : vector<3x384xf32>
    %45 = arith.select %42, %40, %44 : vector<3x384xi1>, vector<3x384xf32>
    %46 = vector.extract_strided_slice %45 {offsets = [0, 0], sizes = [3, 128], strides = [1, 1]} : vector<3x384xf32> to vector<3x128xf32>
    %47 = vector.extract_strided_slice %45 {offsets = [0, 128], sizes = [3, 128], strides = [1, 1]} : vector<3x384xf32> to vector<3x128xf32>
    %48 = vector.extract_strided_slice %45 {offsets = [0, 256], sizes = [3, 128], strides = [1, 1]} : vector<3x384xf32> to vector<3x128xf32>
    %49 = arith.addf %34, %46 : vector<3x128xf32>
    %50 = arith.addf %49, %47 : vector<3x128xf32>
    %51 = arith.addf %50, %48 : vector<3x128xf32>
    %cst_15 = arith.constant 5.000000e-01 : f32
    %52 = vector.broadcast %cst_15 : f32 to vector<3x128xf32>
    %53 = arith.mulf %52, %51 : vector<3x128xf32>
    %54 = arith.addf %34, %46 : vector<3x128xf32>
    %55 = arith.subf %54, %47 : vector<3x128xf32>
    %56 = arith.subf %55, %48 : vector<3x128xf32>
    %cst_16 = arith.constant 5.000000e-01 : f32
    %57 = vector.broadcast %cst_16 : f32 to vector<3x128xf32>
    %58 = arith.mulf %57, %56 : vector<3x128xf32>
    %59 = arith.subf %34, %46 : vector<3x128xf32>
    %60 = arith.addf %59, %47 : vector<3x128xf32>
    %61 = arith.subf %60, %48 : vector<3x128xf32>
    %cst_17 = arith.constant 5.000000e-01 : f32
    %62 = vector.broadcast %cst_17 : f32 to vector<3x128xf32>
    %63 = arith.mulf %62, %61 : vector<3x128xf32>
    %64 = arith.subf %34, %46 : vector<3x128xf32>
    %65 = arith.subf %64, %47 : vector<3x128xf32>
    %66 = arith.addf %65, %48 : vector<3x128xf32>
    %cst_18 = arith.constant 5.000000e-01 : f32
    %67 = vector.broadcast %cst_18 : f32 to vector<3x128xf32>
    %68 = arith.mulf %67, %66 : vector<3x128xf32>
    %69 = arith.addf %1, %53 : vector<3x128xf32>
    %70 = arith.addf %2, %58 : vector<3x128xf32>
    %71 = arith.addf %3, %63 : vector<3x128xf32>
    %72 = arith.addf %4, %68 : vector<3x128xf32>
    %73 = tpu.concatenate %69, %70, %71, %72 in 1 : vector<3x128xf32>, vector<3x128xf32>, vector<3x128xf32>, vector<3x128xf32> -> vector<3x512xf32>
    %c16 = arith.constant 16 : index
    %c0_19 = arith.constant 0 : index
    %74 = vector.load %arg4[%c16, %c0_19] : memref<88x82xbf16, #tpu.memory_space<vmem>>, vector<4x4xbf16>
    %cst_20 = arith.constant 1.000000e+00 : f32
    %75 = vector.broadcast %cst_20 : f32 to vector<1x512xf32>
    %76 = tpu.concatenate %73, %75 in 0 : vector<3x512xf32>, vector<1x512xf32> -> vector<4x512xf32>
    %77 = arith.truncf %76 : vector<4x512xf32> to vector<4x512xbf16>
    %cst_21 = arith.constant dense<0.000000e+00> : vector<4x512xf32>
    %78 = tpu.matmul %74, %77, %cst_21 {dimension_numbers = #tpu.dot_dimension_numbers<[1], [0], [0], [1], [0, 0, 1, 1], [], []>} : vector<4x4xbf16>, vector<4x512xbf16>, vector<4x512xf32> -> vector<4x512xf32>
    %cst_22 = arith.constant 0.000000e+00 : f32
    %79 = vector.broadcast %cst_22 : f32 to vector<4x512xf32>
    %80 = arith.cmpf oge, %78, %79 : vector<4x512xf32>
    %cst_23 = arith.constant 2.000000e-01 : f32
    %81 = vector.broadcast %cst_23 : f32 to vector<4x512xf32>
    %82 = arith.mulf %81, %78 : vector<4x512xf32>
    %83 = arith.select %80, %78, %82 : vector<4x512xi1>, vector<4x512xf32>
    %c0_24 = arith.constant 0 : index
    %c0_25 = arith.constant 0 : index
    %84 = vector.load %arg1[%c0_24, %c0_25] : memref<512x512xbf16, #tpu.memory_space<vmem>>, vector<512x512xbf16>
    %85 = arith.truncf %83 : vector<4x512xf32> to vector<4x512xbf16>
    %cst_26 = arith.constant dense<0.000000e+00> : vector<4x512xf32>
    %86 = tpu.matmul %85, %84, %cst_26 {dimension_numbers = #tpu.dot_dimension_numbers<[1], [0], [0], [1], [0, 0, 1, 1], [], []>} : vector<4x512xbf16>, vector<512x512xbf16>, vector<4x512xf32> -> vector<4x512xf32>
    %c0_27 = arith.constant 0 : index
    %c0_28 = arith.constant 0 : index
    %87 = vector.load %arg2[%c0_27, %c0_28] : memref<9x640xbf16, #tpu.memory_space<vmem>>, vector<9x512xbf16>
    %c0_29 = arith.constant 0 : index
    %c0_30 = arith.constant 0 : index
    %88 = vector.load %arg3[%c0_29, %c0_30] : memref<928x128xbf16, #tpu.memory_space<vmem>>, vector<512x128xbf16>
    %c40 = arith.constant 40 : index
    %c0_31 = arith.constant 0 : index
    %89 = vector.load %arg4[%c40, %c0_31] : memref<88x82xbf16, #tpu.memory_space<vmem>>, vector<8x5xbf16>
    %90 = arith.truncf %86 : vector<4x512xf32> to vector<4x512xbf16>
    %cst_32 = arith.constant dense<0.000000e+00> : vector<4x128xf32>
    %91 = tpu.matmul %90, %88, %cst_32 {dimension_numbers = #tpu.dot_dimension_numbers<[1], [0], [0], [1], [0, 0, 1, 1], [], []>} : vector<4x512xbf16>, vector<512x128xbf16>, vector<4x128xf32> -> vector<4x128xf32>
    %cst_33 = arith.constant 1.000000e+00 : f32
    %92 = vector.broadcast %cst_33 : f32 to vector<1x128xf32>
    %93 = tpu.concatenate %91, %92 in 0 : vector<4x128xf32>, vector<1x128xf32> -> vector<5x128xf32>
    %94 = arith.truncf %93 : vector<5x128xf32> to vector<5x128xbf16>
    %cst_34 = arith.constant dense<0.000000e+00> : vector<8x128xf32>
    %95 = tpu.matmul %89, %94, %cst_34 {dimension_numbers = #tpu.dot_dimension_numbers<[1], [0], [0], [1], [0, 0, 1, 1], [], []>} : vector<8x5xbf16>, vector<5x128xbf16>, vector<8x128xf32> -> vector<8x128xf32>
    %c24 = arith.constant 24 : index
    %c0_35 = arith.constant 0 : index
    %96 = vector.load %arg4[%c24, %c0_35] : memref<88x82xbf16, #tpu.memory_space<vmem>>, vector<4x37xbf16>
    %cst_36 = arith.constant 0.000000e+00 : f32
    %97 = vector.broadcast %cst_36 : f32 to vector<4x17xf32>
    %98 = vector.extract_strided_slice %86 {offsets = [0, 0], sizes = [4, 495], strides = [1, 1]} : vector<4x512xf32> to vector<4x495xf32>
    %99 = tpu.concatenate %97, %98 in 1 : vector<4x17xf32>, vector<4x495xf32> -> vector<4x512xf32>
    %100 = vector.extract_strided_slice %87 {offsets = [0, 0], sizes = [1, 512], strides = [1, 1]} : vector<9x512xbf16> to vector<1x512xbf16>
    %101 = arith.extf %100 : vector<1x512xbf16> to vector<1x512xf32>
    %102 = vector.broadcast %101 : vector<1x512xf32> to vector<4x512xf32>
    %103 = arith.mulf %99, %102 : vector<4x512xf32>
    %cst_37 = arith.constant 0.000000e+00 : f32
    %104 = vector.broadcast %cst_37 : f32 to vector<4x16xf32>
    %105 = vector.extract_strided_slice %86 {offsets = [0, 0], sizes = [4, 496], strides = [1, 1]} : vector<4x512xf32> to vector<4x496xf32>
    %106 = tpu.concatenate %104, %105 in 1 : vector<4x16xf32>, vector<4x496xf32> -> vector<4x512xf32>
    %107 = vector.extract_strided_slice %87 {offsets = [1, 0], sizes = [1, 512], strides = [1, 1]} : vector<9x512xbf16> to vector<1x512xbf16>
    %108 = arith.extf %107 : vector<1x512xbf16> to vector<1x512xf32>
    %109 = vector.broadcast %108 : vector<1x512xf32> to vector<4x512xf32>
    %110 = arith.mulf %106, %109 : vector<4x512xf32>
    %cst_38 = arith.constant 0.000000e+00 : f32
    %111 = vector.broadcast %cst_38 : f32 to vector<4x15xf32>
    %112 = vector.extract_strided_slice %86 {offsets = [0, 0], sizes = [4, 497], strides = [1, 1]} : vector<4x512xf32> to vector<4x497xf32>
    %113 = tpu.concatenate %111, %112 in 1 : vector<4x15xf32>, vector<4x497xf32> -> vector<4x512xf32>
    %114 = vector.extract_strided_slice %87 {offsets = [2, 0], sizes = [1, 512], strides = [1, 1]} : vector<9x512xbf16> to vector<1x512xbf16>
    %115 = arith.extf %114 : vector<1x512xbf16> to vector<1x512xf32>
    %116 = vector.broadcast %115 : vector<1x512xf32> to vector<4x512xf32>
    %117 = arith.mulf %113, %116 : vector<4x512xf32>
    %cst_39 = arith.constant 0.000000e+00 : f32
    %118 = vector.broadcast %cst_39 : f32 to vector<4x1xf32>
    %119 = vector.extract_strided_slice %86 {offsets = [0, 0], sizes = [4, 511], strides = [1, 1]} : vector<4x512xf32> to vector<4x511xf32>
    %120 = tpu.concatenate %118, %119 in 1 : vector<4x1xf32>, vector<4x511xf32> -> vector<4x512xf32>
    %121 = vector.extract_strided_slice %87 {offsets = [3, 0], sizes = [1, 512], strides = [1, 1]} : vector<9x512xbf16> to vector<1x512xbf16>
    %122 = arith.extf %121 : vector<1x512xbf16> to vector<1x512xf32>
    %123 = vector.broadcast %122 : vector<1x512xf32> to vector<4x512xf32>
    %124 = arith.mulf %120, %123 : vector<4x512xf32>
    %125 = vector.extract_strided_slice %87 {offsets = [4, 0], sizes = [1, 512], strides = [1, 1]} : vector<9x512xbf16> to vector<1x512xbf16>
    %126 = arith.extf %125 : vector<1x512xbf16> to vector<1x512xf32>
    %127 = vector.broadcast %126 : vector<1x512xf32> to vector<4x512xf32>
    %128 = arith.mulf %86, %127 : vector<4x512xf32>
    %129 = vector.extract_strided_slice %86 {offsets = [0, 1], sizes = [4, 511], strides = [1, 1]} : vector<4x512xf32> to vector<4x511xf32>
    %cst_40 = arith.constant 0.000000e+00 : f32
    %130 = vector.broadcast %cst_40 : f32 to vector<4x1xf32>
    %131 = tpu.concatenate %129, %130 in 1 : vector<4x511xf32>, vector<4x1xf32> -> vector<4x512xf32>
    %132 = vector.extract_strided_slice %87 {offsets = [5, 0], sizes = [1, 512], strides = [1, 1]} : vector<9x512xbf16> to vector<1x512xbf16>
    %133 = arith.extf %132 : vector<1x512xbf16> to vector<1x512xf32>
    %134 = vector.broadcast %133 : vector<1x512xf32> to vector<4x512xf32>
    %135 = arith.mulf %131, %134 : vector<4x512xf32>
    %136 = vector.extract_strided_slice %86 {offsets = [0, 15], sizes = [4, 497], strides = [1, 1]} : vector<4x512xf32> to vector<4x497xf32>
    %cst_41 = arith.constant 0.000000e+00 : f32
    %137 = vector.broadcast %cst_41 : f32 to vector<4x15xf32>
    %138 = tpu.concatenate %136, %137 in 1 : vector<4x497xf32>, vector<4x15xf32> -> vector<4x512xf32>
    %139 = vector.extract_strided_slice %87 {offsets = [6, 0], sizes = [1, 512], strides = [1, 1]} : vector<9x512xbf16> to vector<1x512xbf16>
    %140 = arith.extf %139 : vector<1x512xbf16> to vector<1x512xf32>
    %141 = vector.broadcast %140 : vector<1x512xf32> to vector<4x512xf32>
    %142 = arith.mulf %138, %141 : vector<4x512xf32>
    %143 = vector.extract_strided_slice %86 {offsets = [0, 16], sizes = [4, 496], strides = [1, 1]} : vector<4x512xf32> to vector<4x496xf32>
    %cst_42 = arith.constant 0.000000e+00 : f32
    %144 = vector.broadcast %cst_42 : f32 to vector<4x16xf32>
    %145 = tpu.concatenate %143, %144 in 1 : vector<4x496xf32>, vector<4x16xf32> -> vector<4x512xf32>
    %146 = vector.extract_strided_slice %87 {offsets = [7, 0], sizes = [1, 512], strides = [1, 1]} : vector<9x512xbf16> to vector<1x512xbf16>
    %147 = arith.extf %146 : vector<1x512xbf16> to vector<1x512xf32>
    %148 = vector.broadcast %147 : vector<1x512xf32> to vector<4x512xf32>
    %149 = arith.mulf %145, %148 : vector<4x512xf32>
    %150 = vector.extract_strided_slice %86 {offsets = [0, 17], sizes = [4, 495], strides = [1, 1]} : vector<4x512xf32> to vector<4x495xf32>
    %cst_43 = arith.constant 0.000000e+00 : f32
    %151 = vector.broadcast %cst_43 : f32 to vector<4x17xf32>
    %152 = tpu.concatenate %150, %151 in 1 : vector<4x495xf32>, vector<4x17xf32> -> vector<4x512xf32>
    %153 = vector.extract_strided_slice %87 {offsets = [8, 0], sizes = [1, 512], strides = [1, 1]} : vector<9x512xbf16> to vector<1x512xbf16>
    %154 = arith.extf %153 : vector<1x512xbf16> to vector<1x512xf32>
    %155 = vector.broadcast %154 : vector<1x512xf32> to vector<4x512xf32>
    %156 = arith.mulf %152, %155 : vector<4x512xf32>
    %cst_44 = arith.constant 1.000000e+00 : f32
    %157 = vector.broadcast %cst_44 : f32 to vector<1x512xf32>
    %158 = tpu.concatenate %103, %110, %117, %124, %128, %135, %142, %149, %156, %157 in 0 : vector<4x512xf32>, vector<4x512xf32>, vector<4x512xf32>, vector<4x512xf32>, vector<4x512xf32>, vector<4x512xf32>, vector<4x512xf32>, vector<4x512xf32>, vector<4x512xf32>, vector<1x512xf32> -> vector<37x512xf32>
    %159 = arith.truncf %158 : vector<37x512xf32> to vector<37x512xbf16>
    %cst_45 = arith.constant dense<0.000000e+00> : vector<4x512xf32>
    %160 = tpu.matmul %96, %159, %cst_45 {dimension_numbers = #tpu.dot_dimension_numbers<[1], [0], [0], [1], [0, 0, 1, 1], [], []>} : vector<4x37xbf16>, vector<37x512xbf16>, vector<4x512xf32> -> vector<4x512xf32>
    %cst_46 = arith.constant 0.000000e+00 : f32
    %161 = vector.broadcast %cst_46 : f32 to vector<4x512xf32>
    %162 = arith.cmpf oge, %160, %161 : vector<4x512xf32>
    %cst_47 = arith.constant 2.000000e-01 : f32
    %163 = vector.broadcast %cst_47 : f32 to vector<4x512xf32>
    %164 = arith.mulf %163, %160 : vector<4x512xf32>
    %165 = arith.select %162, %160, %164 : vector<4x512xi1>, vector<4x512xf32>
    %c32 = arith.constant 32 : index
    %c0_48 = arith.constant 0 : index
    %166 = vector.load %arg4[%c32, %c0_48] : memref<88x82xbf16, #tpu.memory_space<vmem>>, vector<8x37xbf16>
    %cst_49 = arith.constant 0.000000e+00 : f32
    %167 = vector.broadcast %cst_49 : f32 to vector<4x17xf32>
    %168 = vector.extract_strided_slice %165 {offsets = [0, 0], sizes = [4, 495], strides = [1, 1]} : vector<4x512xf32> to vector<4x495xf32>
    %169 = tpu.concatenate %167, %168 in 1 : vector<4x17xf32>, vector<4x495xf32> -> vector<4x512xf32>
    %170 = vector.extract_strided_slice %87 {offsets = [0, 0], sizes = [1, 512], strides = [1, 1]} : vector<9x512xbf16> to vector<1x512xbf16>
    %171 = arith.extf %170 : vector<1x512xbf16> to vector<1x512xf32>
    %172 = vector.broadcast %171 : vector<1x512xf32> to vector<4x512xf32>
    %173 = arith.mulf %169, %172 : vector<4x512xf32>
    %cst_50 = arith.constant 0.000000e+00 : f32
    %174 = vector.broadcast %cst_50 : f32 to vector<4x16xf32>
    %175 = vector.extract_strided_slice %165 {offsets = [0, 0], sizes = [4, 496], strides = [1, 1]} : vector<4x512xf32> to vector<4x496xf32>
    %176 = tpu.concatenate %174, %175 in 1 : vector<4x16xf32>, vector<4x496xf32> -> vector<4x512xf32>
    %177 = vector.extract_strided_slice %87 {offsets = [1, 0], sizes = [1, 512], strides = [1, 1]} : vector<9x512xbf16> to vector<1x512xbf16>
    %178 = arith.extf %177 : vector<1x512xbf16> to vector<1x512xf32>
    %179 = vector.broadcast %178 : vector<1x512xf32> to vector<4x512xf32>
    %180 = arith.mulf %176, %179 : vector<4x512xf32>
    %cst_51 = arith.constant 0.000000e+00 : f32
    %181 = vector.broadcast %cst_51 : f32 to vector<4x15xf32>
    %182 = vector.extract_strided_slice %165 {offsets = [0, 0], sizes = [4, 497], strides = [1, 1]} : vector<4x512xf32> to vector<4x497xf32>
    %183 = tpu.concatenate %181, %182 in 1 : vector<4x15xf32>, vector<4x497xf32> -> vector<4x512xf32>
    %184 = vector.extract_strided_slice %87 {offsets = [2, 0], sizes = [1, 512], strides = [1, 1]} : vector<9x512xbf16> to vector<1x512xbf16>
    %185 = arith.extf %184 : vector<1x512xbf16> to vector<1x512xf32>
    %186 = vector.broadcast %185 : vector<1x512xf32> to vector<4x512xf32>
    %187 = arith.mulf %183, %186 : vector<4x512xf32>
    %cst_52 = arith.constant 0.000000e+00 : f32
    %188 = vector.broadcast %cst_52 : f32 to vector<4x1xf32>
    %189 = vector.extract_strided_slice %165 {offsets = [0, 0], sizes = [4, 511], strides = [1, 1]} : vector<4x512xf32> to vector<4x511xf32>
    %190 = tpu.concatenate %188, %189 in 1 : vector<4x1xf32>, vector<4x511xf32> -> vector<4x512xf32>
    %191 = vector.extract_strided_slice %87 {offsets = [3, 0], sizes = [1, 512], strides = [1, 1]} : vector<9x512xbf16> to vector<1x512xbf16>
    %192 = arith.extf %191 : vector<1x512xbf16> to vector<1x512xf32>
    %193 = vector.broadcast %192 : vector<1x512xf32> to vector<4x512xf32>
    %194 = arith.mulf %190, %193 : vector<4x512xf32>
    %195 = vector.extract_strided_slice %87 {offsets = [4, 0], sizes = [1, 512], strides = [1, 1]} : vector<9x512xbf16> to vector<1x512xbf16>
    %196 = arith.extf %195 : vector<1x512xbf16> to vector<1x512xf32>
    %197 = vector.broadcast %196 : vector<1x512xf32> to vector<4x512xf32>
    %198 = arith.mulf %165, %197 : vector<4x512xf32>
    %199 = vector.extract_strided_slice %165 {offsets = [0, 1], sizes = [4, 511], strides = [1, 1]} : vector<4x512xf32> to vector<4x511xf32>
    %cst_53 = arith.constant 0.000000e+00 : f32
    %200 = vector.broadcast %cst_53 : f32 to vector<4x1xf32>
    %201 = tpu.concatenate %199, %200 in 1 : vector<4x511xf32>, vector<4x1xf32> -> vector<4x512xf32>
    %202 = vector.extract_strided_slice %87 {offsets = [5, 0], sizes = [1, 512], strides = [1, 1]} : vector<9x512xbf16> to vector<1x512xbf16>
    %203 = arith.extf %202 : vector<1x512xbf16> to vector<1x512xf32>
    %204 = vector.broadcast %203 : vector<1x512xf32> to vector<4x512xf32>
    %205 = arith.mulf %201, %204 : vector<4x512xf32>
    %206 = vector.extract_strided_slice %165 {offsets = [0, 15], sizes = [4, 497], strides = [1, 1]} : vector<4x512xf32> to vector<4x497xf32>
    %cst_54 = arith.constant 0.000000e+00 : f32
    %207 = vector.broadcast %cst_54 : f32 to vector<4x15xf32>
    %208 = tpu.concatenate %206, %207 in 1 : vector<4x497xf32>, vector<4x15xf32> -> vector<4x512xf32>
    %209 = vector.extract_strided_slice %87 {offsets = [6, 0], sizes = [1, 512], strides = [1, 1]} : vector<9x512xbf16> to vector<1x512xbf16>
    %210 = arith.extf %209 : vector<1x512xbf16> to vector<1x512xf32>
    %211 = vector.broadcast %210 : vector<1x512xf32> to vector<4x512xf32>
    %212 = arith.mulf %208, %211 : vector<4x512xf32>
    %213 = vector.extract_strided_slice %165 {offsets = [0, 16], sizes = [4, 496], strides = [1, 1]} : vector<4x512xf32> to vector<4x496xf32>
    %cst_55 = arith.constant 0.000000e+00 : f32
    %214 = vector.broadcast %cst_55 : f32 to vector<4x16xf32>
    %215 = tpu.concatenate %213, %214 in 1 : vector<4x496xf32>, vector<4x16xf32> -> vector<4x512xf32>
    %216 = vector.extract_strided_slice %87 {offsets = [7, 0], sizes = [1, 512], strides = [1, 1]} : vector<9x512xbf16> to vector<1x512xbf16>
    %217 = arith.extf %216 : vector<1x512xbf16> to vector<1x512xf32>
    %218 = vector.broadcast %217 : vector<1x512xf32> to vector<4x512xf32>
    %219 = arith.mulf %215, %218 : vector<4x512xf32>
    %220 = vector.extract_strided_slice %165 {offsets = [0, 17], sizes = [4, 495], strides = [1, 1]} : vector<4x512xf32> to vector<4x495xf32>
    %cst_56 = arith.constant 0.000000e+00 : f32
    %221 = vector.broadcast %cst_56 : f32 to vector<4x17xf32>
    %222 = tpu.concatenate %220, %221 in 1 : vector<4x495xf32>, vector<4x17xf32> -> vector<4x512xf32>
    %223 = vector.extract_strided_slice %87 {offsets = [8, 0], sizes = [1, 512], strides = [1, 1]} : vector<9x512xbf16> to vector<1x512xbf16>
    %224 = arith.extf %223 : vector<1x512xbf16> to vector<1x512xf32>
    %225 = vector.broadcast %224 : vector<1x512xf32> to vector<4x512xf32>
    %226 = arith.mulf %222, %225 : vector<4x512xf32>
    %cst_57 = arith.constant 1.000000e+00 : f32
    %227 = vector.broadcast %cst_57 : f32 to vector<1x512xf32>
    %228 = tpu.concatenate %173, %180, %187, %194, %198, %205, %212, %219, %226, %227 in 0 : vector<4x512xf32>, vector<4x512xf32>, vector<4x512xf32>, vector<4x512xf32>, vector<4x512xf32>, vector<4x512xf32>, vector<4x512xf32>, vector<4x512xf32>, vector<4x512xf32>, vector<1x512xf32> -> vector<37x512xf32>
    %229 = arith.truncf %228 : vector<37x512xf32> to vector<37x512xbf16>
    %cst_58 = arith.constant dense<0.000000e+00> : vector<8x512xf32>
    %230 = tpu.matmul %166, %229, %cst_58 {dimension_numbers = #tpu.dot_dimension_numbers<[1], [0], [0], [1], [0, 0, 1, 1], [], []>} : vector<8x37xbf16>, vector<37x512xbf16>, vector<8x512xf32> -> vector<8x512xf32>
    %cst_59 = arith.constant 0.000000e+00 : f32
    %231 = vector.broadcast %cst_59 : f32 to vector<8x512xf32>
    %232 = arith.cmpf oge, %230, %231 : vector<8x512xf32>
    %cst_60 = arith.constant 2.000000e-01 : f32
    %233 = vector.broadcast %cst_60 : f32 to vector<8x512xf32>
    %234 = arith.mulf %233, %230 : vector<8x512xf32>
    %235 = arith.select %232, %230, %234 : vector<8x512xi1>, vector<8x512xf32>
    %236 = arith.truncf %235 : vector<8x512xf32> to vector<8x512xbf16>
    %cst_61 = arith.constant dense<0.000000e+00> : vector<8x128xf32>
    %237 = tpu.matmul %236, %88, %cst_61 {dimension_numbers = #tpu.dot_dimension_numbers<[1], [0], [0], [1], [0, 0, 1, 1], [], []>} : vector<8x512xbf16>, vector<512x128xbf16>, vector<8x128xf32> -> vector<8x128xf32>
    %238 = arith.addf %237, %95 : vector<8x128xf32>
    %cst_62 = arith.constant 0.707106769 : f32
    %239 = vector.broadcast %cst_62 : f32 to vector<8x128xf32>
    %240 = arith.mulf %238, %239 : vector<8x128xf32>
    %c0_63 = arith.constant 0 : index
    %c512 = arith.constant 512 : index
    %241 = vector.load %arg2[%c0_63, %c512] : memref<9x640xbf16, #tpu.memory_space<vmem>>, vector<9x128xbf16>
    %c512_64 = arith.constant 512 : index
    %c0_65 = arith.constant 0 : index
    %242 = vector.load %arg3[%c512_64, %c0_65] : memref<928x128xbf16, #tpu.memory_space<vmem>>, vector<128x32xbf16>
    %c64 = arith.constant 64 : index
    %c0_66 = arith.constant 0 : index
    %243 = vector.load %arg4[%c64, %c0_66] : memref<88x82xbf16, #tpu.memory_space<vmem>>, vector<8x9xbf16>
    %244 = arith.truncf %240 : vector<8x128xf32> to vector<8x128xbf16>
    %cst_67 = arith.constant dense<0.000000e+00> : vector<8x32xf32>
    %245 = tpu.matmul %244, %242, %cst_67 {dimension_numbers = #tpu.dot_dimension_numbers<[1], [0], [0], [1], [0, 0, 1, 1], [], []>} : vector<8x128xbf16>, vector<128x32xbf16>, vector<8x32xf32> -> vector<8x32xf32>
    %cst_68 = arith.constant 1.000000e+00 : f32
    %246 = vector.broadcast %cst_68 : f32 to vector<1x32xf32>
    %247 = tpu.concatenate %245, %246 in 0 : vector<8x32xf32>, vector<1x32xf32> -> vector<9x32xf32>
    %248 = arith.truncf %247 : vector<9x32xf32> to vector<9x32xbf16>
    %cst_69 = arith.constant dense<0.000000e+00> : vector<8x32xf32>
    %249 = tpu.matmul %243, %248, %cst_69 {dimension_numbers = #tpu.dot_dimension_numbers<[1], [0], [0], [1], [0, 0, 1, 1], [], []>} : vector<8x9xbf16>, vector<9x32xbf16>, vector<8x32xf32> -> vector<8x32xf32>
    %c48 = arith.constant 48 : index
    %c0_70 = arith.constant 0 : index
    %250 = vector.load %arg4[%c48, %c0_70] : memref<88x82xbf16, #tpu.memory_space<vmem>>, vector<8x73xbf16>
    %cst_71 = arith.constant 0.000000e+00 : f32
    %251 = vector.broadcast %cst_71 : f32 to vector<8x9xf32>
    %252 = vector.extract_strided_slice %240 {offsets = [0, 0], sizes = [8, 119], strides = [1, 1]} : vector<8x128xf32> to vector<8x119xf32>
    %253 = tpu.concatenate %251, %252 in 1 : vector<8x9xf32>, vector<8x119xf32> -> vector<8x128xf32>
    %254 = vector.extract_strided_slice %241 {offsets = [0, 0], sizes = [1, 128], strides = [1, 1]} : vector<9x128xbf16> to vector<1x128xbf16>
    %255 = arith.extf %254 : vector<1x128xbf16> to vector<1x128xf32>
    %256 = vector.broadcast %255 : vector<1x128xf32> to vector<8x128xf32>
    %257 = arith.mulf %253, %256 : vector<8x128xf32>
    %cst_72 = arith.constant 0.000000e+00 : f32
    %258 = vector.broadcast %cst_72 : f32 to vector<8x8xf32>
    %259 = vector.extract_strided_slice %240 {offsets = [0, 0], sizes = [8, 120], strides = [1, 1]} : vector<8x128xf32> to vector<8x120xf32>
    %260 = tpu.concatenate %258, %259 in 1 : vector<8x8xf32>, vector<8x120xf32> -> vector<8x128xf32>
    %261 = vector.extract_strided_slice %241 {offsets = [1, 0], sizes = [1, 128], strides = [1, 1]} : vector<9x128xbf16> to vector<1x128xbf16>
    %262 = arith.extf %261 : vector<1x128xbf16> to vector<1x128xf32>
    %263 = vector.broadcast %262 : vector<1x128xf32> to vector<8x128xf32>
    %264 = arith.mulf %260, %263 : vector<8x128xf32>
    %cst_73 = arith.constant 0.000000e+00 : f32
    %265 = vector.broadcast %cst_73 : f32 to vector<8x7xf32>
    %266 = vector.extract_strided_slice %240 {offsets = [0, 0], sizes = [8, 121], strides = [1, 1]} : vector<8x128xf32> to vector<8x121xf32>
    %267 = tpu.concatenate %265, %266 in 1 : vector<8x7xf32>, vector<8x121xf32> -> vector<8x128xf32>
    %268 = vector.extract_strided_slice %241 {offsets = [2, 0], sizes = [1, 128], strides = [1, 1]} : vector<9x128xbf16> to vector<1x128xbf16>
    %269 = arith.extf %268 : vector<1x128xbf16> to vector<1x128xf32>
    %270 = vector.broadcast %269 : vector<1x128xf32> to vector<8x128xf32>
    %271 = arith.mulf %267, %270 : vector<8x128xf32>
    %cst_74 = arith.constant 0.000000e+00 : f32
    %272 = vector.broadcast %cst_74 : f32 to vector<8x1xf32>
    %273 = vector.extract_strided_slice %240 {offsets = [0, 0], sizes = [8, 127], strides = [1, 1]} : vector<8x128xf32> to vector<8x127xf32>
    %274 = tpu.concatenate %272, %273 in 1 : vector<8x1xf32>, vector<8x127xf32> -> vector<8x128xf32>
    %275 = vector.extract_strided_slice %241 {offsets = [3, 0], sizes = [1, 128], strides = [1, 1]} : vector<9x128xbf16> to vector<1x128xbf16>
    %276 = arith.extf %275 : vector<1x128xbf16> to vector<1x128xf32>
    %277 = vector.broadcast %276 : vector<1x128xf32> to vector<8x128xf32>
    %278 = arith.mulf %274, %277 : vector<8x128xf32>
    %279 = vector.extract_strided_slice %241 {offsets = [4, 0], sizes = [1, 128], strides = [1, 1]} : vector<9x128xbf16> to vector<1x128xbf16>
    %280 = arith.extf %279 : vector<1x128xbf16> to vector<1x128xf32>
    %281 = vector.broadcast %280 : vector<1x128xf32> to vector<8x128xf32>
    %282 = arith.mulf %240, %281 : vector<8x128xf32>
    %283 = vector.extract_strided_slice %240 {offsets = [0, 1], sizes = [8, 127], strides = [1, 1]} : vector<8x128xf32> to vector<8x127xf32>
    %cst_75 = arith.constant 0.000000e+00 : f32
    %284 = vector.broadcast %cst_75 : f32 to vector<8x1xf32>
    %285 = tpu.concatenate %283, %284 in 1 : vector<8x127xf32>, vector<8x1xf32> -> vector<8x128xf32>
    %286 = vector.extract_strided_slice %241 {offsets = [5, 0], sizes = [1, 128], strides = [1, 1]} : vector<9x128xbf16> to vector<1x128xbf16>
    %287 = arith.extf %286 : vector<1x128xbf16> to vector<1x128xf32>
    %288 = vector.broadcast %287 : vector<1x128xf32> to vector<8x128xf32>
    %289 = arith.mulf %285, %288 : vector<8x128xf32>
    %290 = vector.extract_strided_slice %240 {offsets = [0, 7], sizes = [8, 121], strides = [1, 1]} : vector<8x128xf32> to vector<8x121xf32>
    %cst_76 = arith.constant 0.000000e+00 : f32
    %291 = vector.broadcast %cst_76 : f32 to vector<8x7xf32>
    %292 = tpu.concatenate %290, %291 in 1 : vector<8x121xf32>, vector<8x7xf32> -> vector<8x128xf32>
    %293 = vector.extract_strided_slice %241 {offsets = [6, 0], sizes = [1, 128], strides = [1, 1]} : vector<9x128xbf16> to vector<1x128xbf16>
    %294 = arith.extf %293 : vector<1x128xbf16> to vector<1x128xf32>
    %295 = vector.broadcast %294 : vector<1x128xf32> to vector<8x128xf32>
    %296 = arith.mulf %292, %295 : vector<8x128xf32>
    %297 = vector.extract_strided_slice %240 {offsets = [0, 8], sizes = [8, 120], strides = [1, 1]} : vector<8x128xf32> to vector<8x120xf32>
    %cst_77 = arith.constant 0.000000e+00 : f32
    %298 = vector.broadcast %cst_77 : f32 to vector<8x8xf32>
    %299 = tpu.concatenate %297, %298 in 1 : vector<8x120xf32>, vector<8x8xf32> -> vector<8x128xf32>
    %300 = vector.extract_strided_slice %241 {offsets = [7, 0], sizes = [1, 128], strides = [1, 1]} : vector<9x128xbf16> to vector<1x128xbf16>
    %301 = arith.extf %300 : vector<1x128xbf16> to vector<1x128xf32>
    %302 = vector.broadcast %301 : vector<1x128xf32> to vector<8x128xf32>
    %303 = arith.mulf %299, %302 : vector<8x128xf32>
    %304 = vector.extract_strided_slice %240 {offsets = [0, 9], sizes = [8, 119], strides = [1, 1]} : vector<8x128xf32> to vector<8x119xf32>
    %cst_78 = arith.constant 0.000000e+00 : f32
    %305 = vector.broadcast %cst_78 : f32 to vector<8x9xf32>
    %306 = tpu.concatenate %304, %305 in 1 : vector<8x119xf32>, vector<8x9xf32> -> vector<8x128xf32>
    %307 = vector.extract_strided_slice %241 {offsets = [8, 0], sizes = [1, 128], strides = [1, 1]} : vector<9x128xbf16> to vector<1x128xbf16>
    %308 = arith.extf %307 : vector<1x128xbf16> to vector<1x128xf32>
    %309 = vector.broadcast %308 : vector<1x128xf32> to vector<8x128xf32>
    %310 = arith.mulf %306, %309 : vector<8x128xf32>
    %cst_79 = arith.constant 1.000000e+00 : f32
    %311 = vector.broadcast %cst_79 : f32 to vector<1x128xf32>
    %312 = tpu.concatenate %257, %264, %271, %278, %282, %289, %296, %303, %310, %311 in 0 : vector<8x128xf32>, vector<8x128xf32>, vector<8x128xf32>, vector<8x128xf32>, vector<8x128xf32>, vector<8x128xf32>, vector<8x128xf32>, vector<8x128xf32>, vector<8x128xf32>, vector<1x128xf32> -> vector<73x128xf32>
    %313 = arith.truncf %312 : vector<73x128xf32> to vector<73x128xbf16>
    %cst_80 = arith.constant dense<0.000000e+00> : vector<8x128xf32>
    %314 = tpu.matmul %250, %313, %cst_80 {dimension_numbers = #tpu.dot_dimension_numbers<[1], [0], [0], [1], [0, 0, 1, 1], [], []>} : vector<8x73xbf16>, vector<73x128xbf16>, vector<8x128xf32> -> vector<8x128xf32>
    %cst_81 = arith.constant 0.000000e+00 : f32
    %315 = vector.broadcast %cst_81 : f32 to vector<8x128xf32>
    %316 = arith.cmpf oge, %314, %315 : vector<8x128xf32>
    %cst_82 = arith.constant 2.000000e-01 : f32
    %317 = vector.broadcast %cst_82 : f32 to vector<8x128xf32>
    %318 = arith.mulf %317, %314 : vector<8x128xf32>
    %319 = arith.select %316, %314, %318 : vector<8x128xi1>, vector<8x128xf32>
    %c56 = arith.constant 56 : index
    %c0_83 = arith.constant 0 : index
    %320 = vector.load %arg4[%c56, %c0_83] : memref<88x82xbf16, #tpu.memory_space<vmem>>, vector<8x73xbf16>
    %cst_84 = arith.constant 0.000000e+00 : f32
    %321 = vector.broadcast %cst_84 : f32 to vector<8x9xf32>
    %322 = vector.extract_strided_slice %319 {offsets = [0, 0], sizes = [8, 119], strides = [1, 1]} : vector<8x128xf32> to vector<8x119xf32>
    %323 = tpu.concatenate %321, %322 in 1 : vector<8x9xf32>, vector<8x119xf32> -> vector<8x128xf32>
    %324 = vector.extract_strided_slice %241 {offsets = [0, 0], sizes = [1, 128], strides = [1, 1]} : vector<9x128xbf16> to vector<1x128xbf16>
    %325 = arith.extf %324 : vector<1x128xbf16> to vector<1x128xf32>
    %326 = vector.broadcast %325 : vector<1x128xf32> to vector<8x128xf32>
    %327 = arith.mulf %323, %326 : vector<8x128xf32>
    %cst_85 = arith.constant 0.000000e+00 : f32
    %328 = vector.broadcast %cst_85 : f32 to vector<8x8xf32>
    %329 = vector.extract_strided_slice %319 {offsets = [0, 0], sizes = [8, 120], strides = [1, 1]} : vector<8x128xf32> to vector<8x120xf32>
    %330 = tpu.concatenate %328, %329 in 1 : vector<8x8xf32>, vector<8x120xf32> -> vector<8x128xf32>
    %331 = vector.extract_strided_slice %241 {offsets = [1, 0], sizes = [1, 128], strides = [1, 1]} : vector<9x128xbf16> to vector<1x128xbf16>
    %332 = arith.extf %331 : vector<1x128xbf16> to vector<1x128xf32>
    %333 = vector.broadcast %332 : vector<1x128xf32> to vector<8x128xf32>
    %334 = arith.mulf %330, %333 : vector<8x128xf32>
    %cst_86 = arith.constant 0.000000e+00 : f32
    %335 = vector.broadcast %cst_86 : f32 to vector<8x7xf32>
    %336 = vector.extract_strided_slice %319 {offsets = [0, 0], sizes = [8, 121], strides = [1, 1]} : vector<8x128xf32> to vector<8x121xf32>
    %337 = tpu.concatenate %335, %336 in 1 : vector<8x7xf32>, vector<8x121xf32> -> vector<8x128xf32>
    %338 = vector.extract_strided_slice %241 {offsets = [2, 0], sizes = [1, 128], strides = [1, 1]} : vector<9x128xbf16> to vector<1x128xbf16>
    %339 = arith.extf %338 : vector<1x128xbf16> to vector<1x128xf32>
    %340 = vector.broadcast %339 : vector<1x128xf32> to vector<8x128xf32>
    %341 = arith.mulf %337, %340 : vector<8x128xf32>
    %cst_87 = arith.constant 0.000000e+00 : f32
    %342 = vector.broadcast %cst_87 : f32 to vector<8x1xf32>
    %343 = vector.extract_strided_slice %319 {offsets = [0, 0], sizes = [8, 127], strides = [1, 1]} : vector<8x128xf32> to vector<8x127xf32>
    %344 = tpu.concatenate %342, %343 in 1 : vector<8x1xf32>, vector<8x127xf32> -> vector<8x128xf32>
    %345 = vector.extract_strided_slice %241 {offsets = [3, 0], sizes = [1, 128], strides = [1, 1]} : vector<9x128xbf16> to vector<1x128xbf16>
    %346 = arith.extf %345 : vector<1x128xbf16> to vector<1x128xf32>
    %347 = vector.broadcast %346 : vector<1x128xf32> to vector<8x128xf32>
    %348 = arith.mulf %344, %347 : vector<8x128xf32>
    %349 = vector.extract_strided_slice %241 {offsets = [4, 0], sizes = [1, 128], strides = [1, 1]} : vector<9x128xbf16> to vector<1x128xbf16>
    %350 = arith.extf %349 : vector<1x128xbf16> to vector<1x128xf32>
    %351 = vector.broadcast %350 : vector<1x128xf32> to vector<8x128xf32>
    %352 = arith.mulf %319, %351 : vector<8x128xf32>
    %353 = vector.extract_strided_slice %319 {offsets = [0, 1], sizes = [8, 127], strides = [1, 1]} : vector<8x128xf32> to vector<8x127xf32>
    %cst_88 = arith.constant 0.000000e+00 : f32
    %354 = vector.broadcast %cst_88 : f32 to vector<8x1xf32>
    %355 = tpu.concatenate %353, %354 in 1 : vector<8x127xf32>, vector<8x1xf32> -> vector<8x128xf32>
    %356 = vector.extract_strided_slice %241 {offsets = [5, 0], sizes = [1, 128], strides = [1, 1]} : vector<9x128xbf16> to vector<1x128xbf16>
    %357 = arith.extf %356 : vector<1x128xbf16> to vector<1x128xf32>
    %358 = vector.broadcast %357 : vector<1x128xf32> to vector<8x128xf32>
    %359 = arith.mulf %355, %358 : vector<8x128xf32>
    %360 = vector.extract_strided_slice %319 {offsets = [0, 7], sizes = [8, 121], strides = [1, 1]} : vector<8x128xf32> to vector<8x121xf32>
    %cst_89 = arith.constant 0.000000e+00 : f32
    %361 = vector.broadcast %cst_89 : f32 to vector<8x7xf32>
    %362 = tpu.concatenate %360, %361 in 1 : vector<8x121xf32>, vector<8x7xf32> -> vector<8x128xf32>
    %363 = vector.extract_strided_slice %241 {offsets = [6, 0], sizes = [1, 128], strides = [1, 1]} : vector<9x128xbf16> to vector<1x128xbf16>
    %364 = arith.extf %363 : vector<1x128xbf16> to vector<1x128xf32>
    %365 = vector.broadcast %364 : vector<1x128xf32> to vector<8x128xf32>
    %366 = arith.mulf %362, %365 : vector<8x128xf32>
    %367 = vector.extract_strided_slice %319 {offsets = [0, 8], sizes = [8, 120], strides = [1, 1]} : vector<8x128xf32> to vector<8x120xf32>
    %cst_90 = arith.constant 0.000000e+00 : f32
    %368 = vector.broadcast %cst_90 : f32 to vector<8x8xf32>
    %369 = tpu.concatenate %367, %368 in 1 : vector<8x120xf32>, vector<8x8xf32> -> vector<8x128xf32>
    %370 = vector.extract_strided_slice %241 {offsets = [7, 0], sizes = [1, 128], strides = [1, 1]} : vector<9x128xbf16> to vector<1x128xbf16>
    %371 = arith.extf %370 : vector<1x128xbf16> to vector<1x128xf32>
    %372 = vector.broadcast %371 : vector<1x128xf32> to vector<8x128xf32>
    %373 = arith.mulf %369, %372 : vector<8x128xf32>
    %374 = vector.extract_strided_slice %319 {offsets = [0, 9], sizes = [8, 119], strides = [1, 1]} : vector<8x128xf32> to vector<8x119xf32>
    %cst_91 = arith.constant 0.000000e+00 : f32
    %375 = vector.broadcast %cst_91 : f32 to vector<8x9xf32>
    %376 = tpu.concatenate %374, %375 in 1 : vector<8x119xf32>, vector<8x9xf32> -> vector<8x128xf32>
    %377 = vector.extract_strided_slice %241 {offsets = [8, 0], sizes = [1, 128], strides = [1, 1]} : vector<9x128xbf16> to vector<1x128xbf16>
    %378 = arith.extf %377 : vector<1x128xbf16> to vector<1x128xf32>
    %379 = vector.broadcast %378 : vector<1x128xf32> to vector<8x128xf32>
    %380 = arith.mulf %376, %379 : vector<8x128xf32>
    %cst_92 = arith.constant 1.000000e+00 : f32
    %381 = vector.broadcast %cst_92 : f32 to vector<1x128xf32>
    %382 = tpu.concatenate %327, %334, %341, %348, %352, %359, %366, %373, %380, %381 in 0 : vector<8x128xf32>, vector<8x128xf32>, vector<8x128xf32>, vector<8x128xf32>, vector<8x128xf32>, vector<8x128xf32>, vector<8x128xf32>, vector<8x128xf32>, vector<8x128xf32>, vector<1x128xf32> -> vector<73x128xf32>
    %383 = arith.truncf %382 : vector<73x128xf32> to vector<73x128xbf16>
    %cst_93 = arith.constant dense<0.000000e+00> : vector<8x128xf32>
    %384 = tpu.matmul %320, %383, %cst_93 {dimension_numbers = #tpu.dot_dimension_numbers<[1], [0], [0], [1], [0, 0, 1, 1], [], []>} : vector<8x73xbf16>, vector<73x128xbf16>, vector<8x128xf32> -> vector<8x128xf32>
    %cst_94 = arith.constant 0.000000e+00 : f32
    %385 = vector.broadcast %cst_94 : f32 to vector<8x128xf32>
    %386 = arith.cmpf oge, %384, %385 : vector<8x128xf32>
    %cst_95 = arith.constant 2.000000e-01 : f32
    %387 = vector.broadcast %cst_95 : f32 to vector<8x128xf32>
    %388 = arith.mulf %387, %384 : vector<8x128xf32>
    %389 = arith.select %386, %384, %388 : vector<8x128xi1>, vector<8x128xf32>
    %390 = arith.truncf %389 : vector<8x128xf32> to vector<8x128xbf16>
    %cst_96 = arith.constant dense<0.000000e+00> : vector<8x32xf32>
    %391 = tpu.matmul %390, %242, %cst_96 {dimension_numbers = #tpu.dot_dimension_numbers<[1], [0], [0], [1], [0, 0, 1, 1], [], []>} : vector<8x128xbf16>, vector<128x32xbf16>, vector<8x32xf32> -> vector<8x32xf32>
    %392 = arith.addf %391, %249 : vector<8x32xf32>
    %cst_97 = arith.constant 0.707106769 : f32
    %393 = vector.broadcast %cst_97 : f32 to vector<8x32xf32>
    %394 = arith.mulf %392, %393 : vector<8x32xf32>
    %395 = vector.extract_strided_slice %394 {offsets = [0, 0], sizes = [8, 16], strides = [1, 1]} : vector<8x32xf32> to vector<8x16xf32>
    %396 = vector.extract_strided_slice %394 {offsets = [0, 16], sizes = [8, 16], strides = [1, 1]} : vector<8x32xf32> to vector<8x16xf32>
    %cst_98 = arith.constant 0.000000e+00 : f32
    %397 = vector.broadcast %cst_98 : f32 to vector<8x16xf32>
    %398 = arith.addf %397, %395 : vector<8x16xf32>
    %399 = arith.addf %398, %396 : vector<8x16xf32>
    %cst_99 = arith.constant 2.000000e+00 : f32
    %400 = vector.broadcast %cst_99 : f32 to vector<8x16xf32>
    %401 = arith.divf %399, %400 : vector<8x16xf32>
    %402 = arith.subf %395, %401 : vector<8x16xf32>
    %403 = arith.mulf %402, %402 : vector<8x16xf32>
    %cst_100 = arith.constant 0.000000e+00 : f32
    %404 = vector.broadcast %cst_100 : f32 to vector<8x16xf32>
    %405 = arith.addf %404, %403 : vector<8x16xf32>
    %406 = arith.subf %396, %401 : vector<8x16xf32>
    %407 = arith.mulf %406, %406 : vector<8x16xf32>
    %408 = arith.addf %405, %407 : vector<8x16xf32>
    %cst_101 = arith.constant 1.000000e+00 : f32
    %409 = vector.broadcast %cst_101 : f32 to vector<8x16xf32>
    %410 = arith.divf %408, %409 : vector<8x16xf32>
    %411 = math.sqrt %410 : vector<8x16xf32>
    %412 = vector.shape_cast %411 : vector<8x16xf32> to vector<1x8x16xf32>
    %cst_102 = arith.constant dense<0.000000e+00> : vector<1xf32>
    %413 = vector.multi_reduction <add>, %412, %cst_102 [1, 2] : vector<1x8x16xf32> to vector<1xf32>
    %414 = vector.shape_cast %413 : vector<1xf32> to vector<1x1x1xf32>
    %415 = vector.extract %414[0, 0, 0] : f32 from vector<1x1x1xf32>
    %cst_103 = arith.constant 1.280000e+02 : f32
    %416 = arith.divf %415, %cst_103 : f32
    %cst_104 = arith.constant 0.000000e+00 : f32
    %417 = vector.broadcast %cst_104 : f32 to vector<1x32xf32>
    %418 = vector.broadcast %416 : f32 to vector<1x32xf32>
    %419 = arith.addf %417, %418 : vector<1x32xf32>
    %420 = tpu.concatenate %394, %419 in 0 : vector<8x32xf32>, vector<1x32xf32> -> vector<9x32xf32>
    %c640 = arith.constant 640 : index
    %c0_105 = arith.constant 0 : index
    %421 = vector.load %arg3[%c640, %c0_105] : memref<928x128xbf16, #tpu.memory_space<vmem>>, vector<288x8xbf16>
    %422 = vector.extract_strided_slice %421 {offsets = [0, 0], sizes = [32, 8], strides = [1, 1]} : vector<288x8xbf16> to vector<32x8xbf16>
    %423 = arith.truncf %420 : vector<9x32xf32> to vector<9x32xbf16>
    %cst_106 = arith.constant dense<0.000000e+00> : vector<9x8xf32>
    %424 = tpu.matmul %423, %422, %cst_106 {dimension_numbers = #tpu.dot_dimension_numbers<[1], [0], [0], [1], [0, 0, 1, 1], [], []>} : vector<9x32xbf16>, vector<32x8xbf16>, vector<9x8xf32> -> vector<9x8xf32>
    %425 = vector.extract_strided_slice %421 {offsets = [32, 0], sizes = [32, 8], strides = [1, 1]} : vector<288x8xbf16> to vector<32x8xbf16>
    %426 = arith.truncf %420 : vector<9x32xf32> to vector<9x32xbf16>
    %cst_107 = arith.constant dense<0.000000e+00> : vector<9x8xf32>
    %427 = tpu.matmul %426, %425, %cst_107 {dimension_numbers = #tpu.dot_dimension_numbers<[1], [0], [0], [1], [0, 0, 1, 1], [], []>} : vector<9x32xbf16>, vector<32x8xbf16>, vector<9x8xf32> -> vector<9x8xf32>
    %428 = vector.extract_strided_slice %421 {offsets = [64, 0], sizes = [32, 8], strides = [1, 1]} : vector<288x8xbf16> to vector<32x8xbf16>
    %429 = arith.truncf %420 : vector<9x32xf32> to vector<9x32xbf16>
    %cst_108 = arith.constant dense<0.000000e+00> : vector<9x8xf32>
    %430 = tpu.matmul %429, %428, %cst_108 {dimension_numbers = #tpu.dot_dimension_numbers<[1], [0], [0], [1], [0, 0, 1, 1], [], []>} : vector<9x32xbf16>, vector<32x8xbf16>, vector<9x8xf32> -> vector<9x8xf32>
    %431 = vector.extract_strided_slice %421 {offsets = [96, 0], sizes = [32, 8], strides = [1, 1]} : vector<288x8xbf16> to vector<32x8xbf16>
    %432 = arith.truncf %420 : vector<9x32xf32> to vector<9x32xbf16>
    %cst_109 = arith.constant dense<0.000000e+00> : vector<9x8xf32>
    %433 = tpu.matmul %432, %431, %cst_109 {dimension_numbers = #tpu.dot_dimension_numbers<[1], [0], [0], [1], [0, 0, 1, 1], [], []>} : vector<9x32xbf16>, vector<32x8xbf16>, vector<9x8xf32> -> vector<9x8xf32>
    %434 = vector.extract_strided_slice %421 {offsets = [128, 0], sizes = [32, 8], strides = [1, 1]} : vector<288x8xbf16> to vector<32x8xbf16>
    %435 = arith.truncf %420 : vector<9x32xf32> to vector<9x32xbf16>
    %cst_110 = arith.constant dense<0.000000e+00> : vector<9x8xf32>
    %436 = tpu.matmul %435, %434, %cst_110 {dimension_numbers = #tpu.dot_dimension_numbers<[1], [0], [0], [1], [0, 0, 1, 1], [], []>} : vector<9x32xbf16>, vector<32x8xbf16>, vector<9x8xf32> -> vector<9x8xf32>
    %437 = vector.extract_strided_slice %421 {offsets = [160, 0], sizes = [32, 8], strides = [1, 1]} : vector<288x8xbf16> to vector<32x8xbf16>
    %438 = arith.truncf %420 : vector<9x32xf32> to vector<9x32xbf16>
    %cst_111 = arith.constant dense<0.000000e+00> : vector<9x8xf32>
    %439 = tpu.matmul %438, %437, %cst_111 {dimension_numbers = #tpu.dot_dimension_numbers<[1], [0], [0], [1], [0, 0, 1, 1], [], []>} : vector<9x32xbf16>, vector<32x8xbf16>, vector<9x8xf32> -> vector<9x8xf32>
    %440 = vector.extract_strided_slice %421 {offsets = [192, 0], sizes = [32, 8], strides = [1, 1]} : vector<288x8xbf16> to vector<32x8xbf16>
    %441 = arith.truncf %420 : vector<9x32xf32> to vector<9x32xbf16>
    %cst_112 = arith.constant dense<0.000000e+00> : vector<9x8xf32>
    %442 = tpu.matmul %441, %440, %cst_112 {dimension_numbers = #tpu.dot_dimension_numbers<[1], [0], [0], [1], [0, 0, 1, 1], [], []>} : vector<9x32xbf16>, vector<32x8xbf16>, vector<9x8xf32> -> vector<9x8xf32>
    %443 = vector.extract_strided_slice %421 {offsets = [224, 0], sizes = [32, 8], strides = [1, 1]} : vector<288x8xbf16> to vector<32x8xbf16>
    %444 = arith.truncf %420 : vector<9x32xf32> to vector<9x32xbf16>
    %cst_113 = arith.constant dense<0.000000e+00> : vector<9x8xf32>
    %445 = tpu.matmul %444, %443, %cst_113 {dimension_numbers = #tpu.dot_dimension_numbers<[1], [0], [0], [1], [0, 0, 1, 1], [], []>} : vector<9x32xbf16>, vector<32x8xbf16>, vector<9x8xf32> -> vector<9x8xf32>
    %446 = vector.extract_strided_slice %421 {offsets = [256, 0], sizes = [32, 8], strides = [1, 1]} : vector<288x8xbf16> to vector<32x8xbf16>
    %447 = arith.truncf %420 : vector<9x32xf32> to vector<9x32xbf16>
    %cst_114 = arith.constant dense<0.000000e+00> : vector<9x8xf32>
    %448 = tpu.matmul %447, %446, %cst_114 {dimension_numbers = #tpu.dot_dimension_numbers<[1], [0], [0], [1], [0, 0, 1, 1], [], []>} : vector<9x32xbf16>, vector<32x8xbf16>, vector<9x8xf32> -> vector<9x8xf32>
    %c72 = arith.constant 72 : index
    %c0_115 = arith.constant 0 : index
    %449 = vector.load %arg4[%c72, %c0_115] : memref<88x82xbf16, #tpu.memory_space<vmem>>, vector<9x82xbf16>
    %cst_116 = arith.constant 1.000000e+00 : f32
    %450 = vector.broadcast %cst_116 : f32 to vector<1x8xf32>
    %451 = tpu.concatenate %424, %427, %430, %433, %436, %439, %442, %445, %448, %450 in 0 : vector<9x8xf32>, vector<9x8xf32>, vector<9x8xf32>, vector<9x8xf32>, vector<9x8xf32>, vector<9x8xf32>, vector<9x8xf32>, vector<9x8xf32>, vector<9x8xf32>, vector<1x8xf32> -> vector<82x8xf32>
    %452 = arith.truncf %451 : vector<82x8xf32> to vector<82x8xbf16>
    %cst_117 = arith.constant dense<0.000000e+00> : vector<9x8xf32>
    %453 = tpu.matmul %449, %452, %cst_117 {dimension_numbers = #tpu.dot_dimension_numbers<[1], [0], [0], [1], [0, 0, 1, 1], [], []>} : vector<9x82xbf16>, vector<82x8xbf16>, vector<9x8xf32> -> vector<9x8xf32>
    %c0_118 = arith.constant 0 : index
    %c0_119 = arith.constant 0 : index
    %454 = vector.load %arg5[%c0_118, %c0_119] : memref<9x4xf32, #tpu.memory_space<vmem>>, vector<9x4xf32>
    %455 = vector.extract_strided_slice %453 {offsets = [0, 0], sizes = [9, 4], strides = [1, 1]} : vector<9x8xf32> to vector<9x4xf32>
    %456 = arith.mulf %455, %454 : vector<9x4xf32>
    %457 = vector.shape_cast %456 : vector<9x4xf32> to vector<1x9x4xf32>
    %cst_120 = arith.constant dense<0.000000e+00> : vector<1xf32>
    %458 = vector.multi_reduction <add>, %457, %cst_120 [1, 2] : vector<1x9x4xf32> to vector<1xf32>
    %459 = vector.shape_cast %458 : vector<1xf32> to vector<1x1x1xf32>
    %460 = vector.extract %459[0, 0, 0] : f32 from vector<1x1x1xf32>
    %461 = vector.broadcast %460 : f32 to vector<1x1xf32>
    %462 = vector.extract_strided_slice %453 {offsets = [0, 4], sizes = [9, 4], strides = [1, 1]} : vector<9x8xf32> to vector<9x4xf32>
    %463 = arith.mulf %462, %454 : vector<9x4xf32>
    %464 = vector.shape_cast %463 : vector<9x4xf32> to vector<1x9x4xf32>
    %cst_121 = arith.constant dense<0.000000e+00> : vector<1xf32>
    %465 = vector.multi_reduction <add>, %464, %cst_121 [1, 2] : vector<1x9x4xf32> to vector<1xf32>
    %466 = vector.shape_cast %465 : vector<1xf32> to vector<1x1x1xf32>
    %467 = vector.extract %466[0, 0, 0] : f32 from vector<1x1x1xf32>
    %468 = vector.broadcast %467 : f32 to vector<1x1xf32>
    %469 = tpu.concatenate %461, %468 in 1 : vector<1x1xf32>, vector<1x1xf32> -> vector<1x2xf32>
    %c0_122 = arith.constant 0 : index
    %c0_123 = arith.constant 0 : index
    %470 = vector.load %arg6[%c0_122, %c0_123] : memref<1x1xf32, #tpu.memory_space<vmem>>, vector<1x1xf32>
    %471 = vector.broadcast %470 : vector<1x1xf32> to vector<1x2xf32>
    %472 = arith.addf %469, %471 : vector<1x2xf32>
    %c0_124 = arith.constant 0 : index
    %c0_125 = arith.constant 0 : index
    %473 = vector.load %arg7[%c0_124, %c0_125] : memref<1x2xf32, #tpu.memory_space<vmem>>, vector<1x2xf32>
    tpu.vector_store %arg7[%c0_124, %c0_125], %472 {strides = array<i32>} : memref<1x2xf32, #tpu.memory_space<vmem>>, vector<1x2xf32>,
    return
  }
}

</mosaic_0001>

<llo_original>
// kernel: tpu_custom_call.1
$region0: #{tpu_custom_call.1}
  #allocation0 [shape = 'u32[]', space=smem, size = 0x4, offset = 0x4, fixed_abs, tag = 'smem constant byte address 0x4 - core index']
  #allocation1 [shape = 'u32[144,128]{1,0:T(1,128)}', space=vmem, size = 0x12000, scoped, tag = 'internal scratch']
  %s0 = inlined_call_operand.hbm [shape: f32[2,128], index: 0, kind: input, shape index: {}]
  %s1 = inlined_call_operand.hbm [shape: f32[2,128], index: 1, kind: output, shape index: {}]
  %s2 = sld [smem:[#allocation0]]
  $region18: #{tpu_custom_call.1} parent=0
    _
  %s4 = ssub.s32 1, %s2
  %s5 = scalar_select 0, %s4, %s2
  $region1: #{tpu_custom_call.1} parent=0
    #allocation2 [shape = 'u8[1024]{0}', space=vmem, size = 0x400, scoped, tag = 'input window, operand 0, single buffered']
    #allocation3 [shape = 's32[1]{0}', space=sflag, size = 0x4, scoped, tag = 'scoped memory for tpu_custom_call.1']
    #allocation4 [shape = 's32[1]{0}', space=sflag, size = 0x4, scoped, tag = 'scoped memory for tpu_custom_call.1']
    #allocation5 [shape = 'u8[1024]{0}', space=vmem, size = 0x400, scoped, tag = 'output window, operand 0, single buffered']
    %6 = vsyncpa [#allocation3], 0
    %7 = vsyncpa [#allocation4], 0
    // Predicated region
    $region2: #{tpu_custom_call.1} parent=1 // pred_check
      _
    $region3: #{tpu_custom_call.1} parent=1 // pred_check_branch
      %9 = sbr.rel (0) target = $region5
    $region4: #{tpu_custom_call.1} parent=1 // pred_region
      %s11 = ssub.s32 32, 32
      %12 = vsyncadd [#allocation3], %s11
      %s14 = sshll.u32 [#allocation2], 4
      %s15 = int_to_ptr.vmem [resolvable:$true] %s14
      %17 = dma.hbm_to_vmem [thread:$0]  %s0, 32, %s15, [#allocation3]
    $region5: #{tpu_custom_call.1} parent=1 // pred_fallthru
      _
    // Predicated region
    $region6: #{tpu_custom_call.1} parent=1 // pred_check
      _
    $region7: #{tpu_custom_call.1} parent=1 // pred_check_branch
      %19 = sbr.rel (0) target = $region9
    $region8: #{tpu_custom_call.1} parent=1 // pred_region
      %20 = dma.done [#allocation3], 32
    $region9: #{tpu_custom_call.1} parent=1 // pred_fallthru
      _
    %v21 = vld [vmem:[#allocation2] sm:$0x3]
    %22 = vrot.lane.b32.xlu0 %v21, 1
    %v23 = vpop.permute.xlu0 %22
    %24 = vst [vmem:[#allocation5] sm:$0x3] %v23
    // Predicated region
    $region10: #{tpu_custom_call.1} parent=1 // pred_check
      _
    $region11: #{tpu_custom_call.1} parent=1 // pred_check_branch
      %26 = sbr.rel (0) target = $region13
    $region12: #{tpu_custom_call.1} parent=1 // pred_region
      %s28 = ssub.s32 32, 32
      %29 = vsyncadd [#allocation4], %s28
      %s31 = sshll.u32 [#allocation5], 4
      %s32 = int_to_ptr.vmem [resolvable:$true] %s31
      %34 = dma.vmem_to_hbm [thread:$0]  %s32, 32, %s1, [#allocation4]
    $region13: #{tpu_custom_call.1} parent=1 // pred_fallthru
      _
    // Predicated region
    $region14: #{tpu_custom_call.1} parent=1 // pred_check
      _
    $region15: #{tpu_custom_call.1} parent=1 // pred_check_branch
      %36 = sbr.rel (0) target = $region17
    $region16: #{tpu_custom_call.1} parent=1 // pred_region
      %37 = dma.done [#allocation4], 32
    $region17: #{tpu_custom_call.1} parent=1 // pred_fallthru
      _
    %38 = vsyncpa [#allocation3], 1
    %39 = vsyncpa [#allocation4], 1

// kernel: wave_discriminator_forward.1
$region0: #{wave_discriminator_forward.1}
  #allocation0 [shape = 'u32[]', space=smem, size = 0x4, offset = 0x4, fixed_abs, tag = 'smem constant byte address 0x4 - core index']
  #allocation1 [shape = 'u32[144,128]{1,0:T(1,128)}', space=vmem, size = 0x12000, scoped, tag = 'internal scratch']
  #allocation2 [shape = 'f32[1,1]{1,0:T(1,128)S(1)}', space=vmem, size = 0x200, scoped, tag = 'scoped memory for wave_discriminator_forward.1']
  %s0 = inlined_call_operand.vmem [shape: f32[3,512], index: 0, kind: input, shape index: {}]
  %s1 = inlined_call_operand.vmem [shape: bf16[512,512], index: 1, kind: input, shape index: {}]
  %s2 = inlined_call_operand.vmem [shape: bf16[9,640], index: 2, kind: input, shape index: {}]
  %s3 = inlined_call_operand.vmem [shape: bf16[928,128], index: 3, kind: input, shape index: {}]
  %s4 = inlined_call_operand.vmem [shape: bf16[88,82], index: 4, kind: input, shape index: {}]
  %s5 = inlined_call_operand.vmem [shape: f32[9,4], index: 5, kind: input, shape index: {}]
  %s6 = inlined_call_operand.<no memory space> [shape: f32[1,1], index: 6, kind: input, shape index: {}]
  %s7 = inlined_call_operand.hbm [shape: f32[1,2], index: 7, kind: output, shape index: {}]
  %s8 = sld [smem:[#allocation0]]
  $region38: #{wave_discriminator_forward.1} parent=0
    _
  %s10 = ssub.s32 1, %s8
  %s11 = scalar_select 0, %s10, %s8
  %v12 = vstv %s6
  %13 = vst [vmem:[#allocation2] sm:$0x1] %v12
  $region1: #{wave_discriminator_forward.1} parent=0
    #allocation3 [shape = 'u8[512]{0}', space=vmem, size = 0x400, scoped, tag = 'output window, operand 0, single buffered']
    #allocation4 [shape = 's32[1]{0}', space=sflag, size = 0x4, scoped, tag = 'scoped memory for wave_discriminator_forward.1']
    %14 = vsyncpa [#allocation4], 0
    // Predicated region
    $region2: #{wave_discriminator_forward.1} parent=1 // pred_check
      _
    $region3: #{wave_discriminator_forward.1} parent=1 // pred_check_branch
      %16 = sbr.rel (0) target = $region5
    $region4: #{wave_discriminator_forward.1} parent=1 // pred_region
      _
    $region5: #{wave_discriminator_forward.1} parent=1 // pred_fallthru
      _
    // Predicated region
    $region6: #{wave_discriminator_forward.1} parent=1 // pred_check
      _
    $region7: #{wave_discriminator_forward.1} parent=1 // pred_check_branch
      %18 = sbr.rel (0) target = $region9
    $region8: #{wave_discriminator_forward.1} parent=1 // pred_region
      _
    $region9: #{wave_discriminator_forward.1} parent=1 // pred_fallthru
      _
    // Predicated region
    $region10: #{wave_discriminator_forward.1} parent=1 // pred_check
      _
    $region11: #{wave_discriminator_forward.1} parent=1 // pred_check_branch
      %20 = sbr.rel (0) target = $region13
    $region12: #{wave_discriminator_forward.1} parent=1 // pred_region
      _
    $region13: #{wave_discriminator_forward.1} parent=1 // pred_fallthru
      _
    // Predicated region
    $region14: #{wave_discriminator_forward.1} parent=1 // pred_check
      _
    $region15: #{wave_discriminator_forward.1} parent=1 // pred_check_branch
      %22 = sbr.rel (0) target = $region17
    $region16: #{wave_discriminator_forward.1} parent=1 // pred_region
      _
    $region17: #{wave_discriminator_forward.1} parent=1 // pred_fallthru
      _
    // Predicated region
    $region18: #{wave_discriminator_forward.1} parent=1 // pred_check
      _
    $region19: #{wave_discriminator_forward.1} parent=1 // pred_check_branch
      %24 = sbr.rel (0) target = $region21
    $region20: #{wave_discriminator_forward.1} parent=1 // pred_region
      _
    $region21: #{wave_discriminator_forward.1} parent=1 // pred_fallthru
      _
    // Predicated region
    $region22: #{wave_discriminator_forward.1} parent=1 // pred_check
      _
    $region23: #{wave_discriminator_forward.1} parent=1 // pred_check_branch
      %26 = sbr.rel (0) target = $region25
    $region24: #{wave_discriminator_forward.1} parent=1 // pred_region
      _
    $region25: #{wave_discriminator_forward.1} parent=1 // pred_fallthru
      _
    // Predicated region
    $region26: #{wave_discriminator_forward.1} parent=1 // pred_check
      _
    $region27: #{wave_discriminator_forward.1} parent=1 // pred_check_branch
      %28 = sbr.rel (0) target = $region29
    $region28: #{wave_discriminator_forward.1} parent=1 // pred_region
      _
    $region29: #{wave_discriminator_forward.1} parent=1 // pred_fallthru
      _
    %v30 = vld [vmem:[%s0] sm:$0x77]
    %v31 = vld [vmem:[%s0 + $0x8] sm:$0x77]
    %v33 = vrot.slane %v30, 4
    %v35 = vadd.f32 %v30, %v33
    %v36 = vadd.f32 %v35, %v31
    %v38 = vrot.slane %v31, 4
    %v40 = vadd.f32 %v36, %v38
    %v41 = vmul.f32 %v40, 0.5
    %v42 = vsub.f32 %v35, %v31
    %v43 = vsub.f32 %v42, %v38
    %v44 = vmul.f32 %v43, 0.5
    %v45 = vsub.f32 %v30, %v33
    %v46 = vadd.f32 %v45, %v31
    %v47 = vsub.f32 %v46, %v38
    %v48 = vmul.f32 %v47, 0.5
    %v49 = vsub.f32 %v45, %v31
    %v50 = vadd.f32 %v49, %v38
    %v51 = vmul.f32 %v50, 0.5
    %v52 = vld [vmem:[%s4] sm:$0x3]
    %vm53 = vcmask 1042432
    %v54 = vsel %vm53, %v41, 1.0
    %v55 = vpack.c.bf16 %v54, %v54
    %vm56 = vcmask 31744
    %v58 = vsel %vm56, %v52, 0
    %vm60 = vcmask 1041408
    %v62 = vsel %vm60, %v55, 0
    %64 = vmatprep.subr.bf16.mxu0 0
    %65 = vmatpush1.bf16.msra.mxu0 %v62
    %66 = vmatprep.subr.bf16.mxu0 0
    %67 = vmatpush1.bf16.msra.mxu0 0
    %68 = vmatprep.subr.bf16.mxu0 0
    %69 = vmatpush1.bf16.msra.mxu0 0
    %70 = vmatprep.subr.bf16.mxu0 0
    %71 = vmatpush1.bf16.msra.mxu0 0
    %72 = vmatprep.subr.bf16.mxu0 0
    %73 = vmatpush1.bf16.msra.mxu0 0
    %74 = vmatprep.subr.bf16.mxu0 0
    %75 = vmatpush1.bf16.msra.mxu0 0
    %76 = vmatprep.subr.bf16.mxu0 0
    %77 = vmatpush1.bf16.msra.mxu0 0
    %78 = vmatprep.subr.bf16.mxu0 0
    %79 = vmatpush1.bf16.msra.mxu0 0
    %80 = vmatprep.subr.bf16.mxu0 0
    %81 = vmatpush1.bf16.msra.mxu0 0
    %82 = vmatprep.subr.bf16.mxu0 0
    %83 = vmatpush1.bf16.msra.mxu0 0
    %84 = vmatprep.subr.bf16.mxu0 0
    %85 = vmatpush1.bf16.msra.mxu0 0
    %86 = vmatprep.subr.bf16.mxu0 0
    %87 = vmatpush1.bf16.msra.mxu0 0
    %88 = vmatprep.subr.bf16.mxu0 0
    %89 = vmatpush1.bf16.msra.mxu0 0
    %90 = vmatprep.subr.bf16.mxu0 0
    %91 = vmatpush1.bf16.msra.mxu0 0
    %92 = vmatprep.subr.bf16.mxu0 0
    %93 = vmatpush1.bf16.msra.mxu0 0
    %94 = vmatprep.subr.bf16.mxu0 0
    %95 = vmatpush1.bf16.msra.mxu0 0
    %96 = vmatprep.mubr.bf16.mxu0 0
    %97 = vmatmul.mubr.bf16.gmra.mrb[0].mxu0 %v58
    %v98 = vpop.f32.mrb[0].mxu0
    %v99 = vadd.f32 0.0, %v98
    %v100 = vpop.f32.mrb[0].mxu0
    %v101 = vpop.f32.mrb[0].mxu0
    %v102 = vpop.f32.mrb[0].mxu0
    %103 = vdwg.mxu0
    %vm104 = vcmp.ge.f32.partialorder %v99, 0.0
    %v105 = vmul.f32 %v99, 0.2
    %v106 = vsel %vm104, %v99, %v105
    %v107 = vld [vmem:[%s4 + $0x4] sm:$0x3]
    %v108 = vsel %vm53, %v44, 1.0
    %v109 = vsel %vm53, %v48, 1.0
    %v110 = vsel %vm53, %v51, 1.0
    %v111 = vpack.c.bf16 %v108, %v108
    %v112 = vpack.c.bf16 %v109, %v109
    %v113 = vpack.c.bf16 %v110, %v110
    %v115 = vsel %vm56, %v107, 0
    %v118 = vsel %vm60, %v111, 0
    %v121 = vsel %vm60, %v112, 0
    %v124 = vsel %vm60, %v113, 0
    %126 = vmatprep.subr.bf16.mxu0 %v121
    %127 = vmatpush1.bf16.msra.mxu0 %v118
    %128 = vmatprep.subr.bf16.mxu0 0
    %129 = vmatpush1.bf16.msra.mxu0 0
    %130 = vmatprep.subr.bf16.mxu0 0
    %131 = vmatpush1.bf16.msra.mxu0 0
    %132 = vmatprep.subr.bf16.mxu0 0
    %133 = vmatpush1.bf16.msra.mxu0 0
    %134 = vmatprep.subr.bf16.mxu0 0
    %135 = vmatpush1.bf16.msra.mxu0 0
    %136 = vmatprep.subr.bf16.mxu0 0
    %137 = vmatpush1.bf16.msra.mxu0 0
    %138 = vmatprep.subr.bf16.mxu0 0
    %139 = vmatpush1.bf16.msra.mxu0 0
    %140 = vmatprep.subr.bf16.mxu0 0
    %141 = vmatpush1.bf16.msra.mxu0 0
    %142 = vmatprep.subr.bf16.mxu0 0
    %143 = vmatpush1.bf16.msra.mxu0 0
    %144 = vmatprep.subr.bf16.mxu0 0
    %145 = vmatpush1.bf16.msra.mxu0 0
    %146 = vmatprep.subr.bf16.mxu0 0
    %147 = vmatpush1.bf16.msra.mxu0 0
    %148 = vmatprep.subr.bf16.mxu0 0
    %149 = vmatpush1.bf16.msra.mxu0 0
    %150 = vmatprep.subr.bf16.mxu0 0
    %151 = vmatpush1.bf16.msra.mxu0 0
    %152 = vmatprep.subr.bf16.mxu0 0
    %153 = vmatpush1.bf16.msra.mxu0 0
    %154 = vmatprep.subr.bf16.mxu0 0
    %155 = vmatpush1.bf16.msra.mxu0 0
    %156 = vmatprep.subr.bf16.mxu0 0
    %157 = vmatpush1.bf16.msra.mxu0 0
    %158 = vmatprep.mubr.bf16.mxu0 0
    %159 = vmatmul.mubr.bf16.gmra.mrb[0].mxu0 %v115
    %v160 = vpop.f32.mrb[0].mxu0
    %v161 = vadd.f32 0.0, %v160
    %v162 = vpop.f32.mrb[0].mxu0
    %v163 = vadd.f32 0.0, %v162
    %v164 = vpop.f32.mrb[0].mxu0
    %v165 = vpop.f32.mrb[0].mxu0
    %166 = vdwg.mxu0
    %167 = vmatprep.subr.bf16.mxu0 0
    %168 = vmatpush1.bf16.msra.mxu0 %v124
    %169 = vmatprep.subr.bf16.mxu0 0
    %170 = vmatpush1.bf16.msra.mxu0 0
    %171 = vmatprep.subr.bf16.mxu0 0
    %172 = vmatpush1.bf16.msra.mxu0 0
    %173 = vmatprep.subr.bf16.mxu0 0
    %174 = vmatpush1.bf16.msra.mxu0 0
    %175 = vmatprep.subr.bf16.mxu0 0
    %176 = vmatpush1.bf16.msra.mxu0 0
    %177 = vmatprep.subr.bf16.mxu0 0
    %178 = vmatpush1.bf16.msra.mxu0 0
    %179 = vmatprep.subr.bf16.mxu0 0
    %180 = vmatpush1.bf16.msra.mxu0 0
    %181 = vmatprep.subr.bf16.mxu0 0
    %182 = vmatpush1.bf16.msra.mxu0 0
    %183 = vmatprep.subr.bf16.mxu0 0
    %184 = vmatpush1.bf16.msra.mxu0 0
    %185 = vmatprep.subr.bf16.mxu0 0
    %186 = vmatpush1.bf16.msra.mxu0 0
    %187 = vmatprep.subr.bf16.mxu0 0
    %188 = vmatpush1.bf16.msra.mxu0 0
    %189 = vmatprep.subr.bf16.mxu0 0
    %190 = vmatpush1.bf16.msra.mxu0 0
    %191 = vmatprep.subr.bf16.mxu0 0
    %192 = vmatpush1.bf16.msra.mxu0 0
    %193 = vmatprep.subr.bf16.mxu0 0
    %194 = vmatpush1.bf16.msra.mxu0 0
    %195 = vmatprep.subr.bf16.mxu0 0
    %196 = vmatpush1.bf16.msra.mxu0 0
    %197 = vmatprep.subr.bf16.mxu0 0
    %198 = vmatpush1.bf16.msra.mxu0 0
    %199 = vmatprep.mubr.bf16.mxu0 0
    %200 = vmatmul.mubr.bf16.gmra.mrb[0].mxu0 %v115
    %v201 = vpop.f32.mrb[0].mxu0
    %v202 = vadd.f32 0.0, %v201
    %v203 = vpop.f32.mrb[0].mxu0
    %v204 = vpop.f32.mrb[0].mxu0
    %v205 = vpop.f32.mrb[0].mxu0
    %206 = vdwg.mxu0
    %vm207 = vcmp.ge.f32.partialorder %v161, 0.0
    %vm208 = vcmp.ge.f32.partialorder %v163, 0.0
    %vm209 = vcmp.ge.f32.partialorder %v202, 0.0
    %v210 = vmul.f32 %v161, 0.2
    %v211 = vmul.f32 %v163, 0.2
    %v212 = vmul.f32 %v202, 0.2
    %v213 = vsel %vm207, %v161, %v210
    %v214 = vsel %vm208, %v163, %v211
    %v215 = vsel %vm209, %v202, %v212
    %v216 = vadd.f32 %v106, %v213
    %v217 = vadd.f32 %v216, %v214
    %v218 = vadd.f32 %v217, %v215
    %v219 = vmul.f32 %v218, 0.5
    %v220 = vsub.f32 %v216, %v214
    %v221 = vsub.f32 %v220, %v215
    %v222 = vmul.f32 %v221, 0.5
    %v223 = vsub.f32 %v106, %v213
    %v224 = vadd.f32 %v223, %v214
    %v225 = vsub.f32 %v224, %v215
    %v226 = vmul.f32 %v225, 0.5
    %v227 = vsub.f32 %v223, %v214
    %v228 = vadd.f32 %v227, %v215
    %v229 = vmul.f32 %v228, 0.5
    %v230 = vadd.f32 %v30, %v219
    %v231 = vadd.f32 %v33, %v222
    %v232 = vadd.f32 %v31, %v226
    %v233 = vadd.f32 %v38, %v229
    %v234 = vld [vmem:[%s4 + $0x8] sm:$0x3]
    %v235 = vsel %vm53, %v230, 1.0
    %v236 = vsel %vm53, %v231, 1.0
    %v237 = vsel %vm53, %v232, 1.0
    %v238 = vsel %vm53, %v233, 1.0
    %v239 = vpack.c.bf16 %v235, %v235
    %v240 = vpack.c.bf16 %v236, %v236
    %v241 = vpack.c.bf16 %v237, %v237
    %v242 = vpack.c.bf16 %v238, %v238
    %v244 = vsel %vm56, %v234, 0
    %v247 = vsel %vm60, %v239, 0
    %v250 = vsel %vm60, %v240, 0
    %v253 = vsel %vm60, %v241, 0
    %v256 = vsel %vm60, %v242, 0
    %258 = vmatprep.subr.bf16.mxu0 %v250
    %259 = vmatpush1.bf16.msra.mxu0 %v247
    %260 = vmatprep.subr.bf16.mxu0 0
    %261 = vmatpush1.bf16.msra.mxu0 0
    %262 = vmatprep.subr.bf16.mxu0 0
    %263 = vmatpush1.bf16.msra.mxu0 0
    %264 = vmatprep.subr.bf16.mxu0 0
    %265 = vmatpush1.bf16.msra.mxu0 0
    %266 = vmatprep.subr.bf16.mxu0 0
    %267 = vmatpush1.bf16.msra.mxu0 0
    %268 = vmatprep.subr.bf16.mxu0 0
    %269 = vmatpush1.bf16.msra.mxu0 0
    %270 = vmatprep.subr.bf16.mxu0 0
    %271 = vmatpush1.bf16.msra.mxu0 0
    %272 = vmatprep.subr.bf16.mxu0 0
    %273 = vmatpush1.bf16.msra.mxu0 0
    %274 = vmatprep.subr.bf16.mxu0 0
    %275 = vmatpush1.bf16.msra.mxu0 0
    %276 = vmatprep.subr.bf16.mxu0 0
    %277 = vmatpush1.bf16.msra.mxu0 0
    %278 = vmatprep.subr.bf16.mxu0 0
    %279 = vmatpush1.bf16.msra.mxu0 0
    %280 = vmatprep.subr.bf16.mxu0 0
    %281 = vmatpush1.bf16.msra.mxu0 0
    %282 = vmatprep.subr.bf16.mxu0 0
    %283 = vmatpush1.bf16.msra.mxu0 0
    %284 = vmatprep.subr.bf16.mxu0 0
    %285 = vmatpush1.bf16.msra.mxu0 0
    %286 = vmatprep.subr.bf16.mxu0 0
    %287 = vmatpush1.bf16.msra.mxu0 0
    %288 = vmatprep.subr.bf16.mxu0 0
    %289 = vmatpush1.bf16.msra.mxu0 0
    %290 = vmatprep.mubr.bf16.mxu0 0
    %291 = vmatmul.mubr.bf16.gmra.mrb[0].mxu0 %v244
    %v292 = vpop.f32.mrb[0].mxu0
    %v293 = vadd.f32 0.0, %v292
    %v294 = vpop.f32.mrb[0].mxu0
    %v295 = vadd.f32 0.0, %v294
    %v296 = vpop.f32.mrb[0].mxu0
    %v297 = vpop.f32.mrb[0].mxu0
    %298 = vdwg.mxu0
    %299 = vmatprep.subr.bf16.mxu0 %v256
    %300 = vmatpush1.bf16.msra.mxu0 %v253
    %301 = vmatprep.subr.bf16.mxu0 0
    %302 = vmatpush1.bf16.msra.mxu0 0
    %303 = vmatprep.subr.bf16.mxu0 0
    %304 = vmatpush1.bf16.msra.mxu0 0
    %305 = vmatprep.subr.bf16.mxu0 0
    %306 = vmatpush1.bf16.msra.mxu0 0
    %307 = vmatprep.subr.bf16.mxu0 0
    %308 = vmatpush1.bf16.msra.mxu0 0
    %309 = vmatprep.subr.bf16.mxu0 0
    %310 = vmatpush1.bf16.msra.mxu0 0
    %311 = vmatprep.subr.bf16.mxu0 0
    %312 = vmatpush1.bf16.msra.mxu0 0
    %313 = vmatprep.subr.bf16.mxu0 0
    %314 = vmatpush1.bf16.msra.mxu0 0
    %315 = vmatprep.subr.bf16.mxu0 0
    %316 = vmatpush1.bf16.msra.mxu0 0
    %317 = vmatprep.subr.bf16.mxu0 0
    %318 = vmatpush1.bf16.msra.mxu0 0
    %319 = vmatprep.subr.bf16.mxu0 0
    %320 = vmatpush1.bf16.msra.mxu0 0
    %321 = vmatprep.subr.bf16.mxu0 0
    %322 = vmatpush1.bf16.msra.mxu0 0
    %323 = vmatprep.subr.bf16.mxu0 0
    %324 = vmatpush1.bf16.msra.mxu0 0
    %325 = vmatprep.subr.bf16.mxu0 0
    %326 = vmatpush1.bf16.msra.mxu0 0
    %327 = vmatprep.subr.bf16.mxu0 0
    %328 = vmatpush1.bf16.msra.mxu0 0
    %329 = vmatprep.subr.bf16.mxu0 0
    %330 = vmatpush1.bf16.msra.mxu0 0
    %331 = vmatprep.mubr.bf16.mxu0 0
    %332 = vmatmul.mubr.bf16.gmra.mrb[0].mxu0 %v244
    %v333 = vpop.f32.mrb[0].mxu0
    %v334 = vadd.f32 0.0, %v333
    %v335 = vpop.f32.mrb[0].mxu0
    %v336 = vadd.f32 0.0, %v335
    %v337 = vpop.f32.mrb[0].mxu0
    %v338 = vpop.f32.mrb[0].mxu0
    %339 = vdwg.mxu0
    %vm340 = vcmp.ge.f32.partialorder %v293, 0.0
    %vm341 = vcmp.ge.f32.partialorder %v295, 0.0
    %vm342 = vcmp.ge.f32.partialorder %v334, 0.0
    %vm343 = vcmp.ge.f32.partialorder %v336, 0.0
    %v344 = vmul.f32 %v293, 0.2
    %v345 = vmul.f32 %v295, 0.2
    %v346 = vmul.f32 %v334, 0.2
    %v347 = vmul.f32 %v336, 0.2
    %v348 = vsel %vm340, %v293, %v344
    %v349 = vsel %vm341, %v295, %v345
    %v350 = vsel %vm342, %v334, %v346
    %v351 = vsel %vm343, %v336, %v347
    %v352 = vld [vmem:[%s1] sm:$0xff]
    %v353 = vld [vmem:[%s1 + $0x8] sm:$0xff]
    %v354 = vld [vmem:[%s1 + $0x10] sm:$0xff]
    %v355 = vld [vmem:[%s1 + $0x18] sm:$0xff]
    %v356 = vld [vmem:[%s1 + $0x20] sm:$0xff]
    %v357 = vld [vmem:[%s1 + $0x28] sm:$0xff]
    %v358 = vld [vmem:[%s1 + $0x30] sm:$0xff]
    %v359 = vld [vmem:[%s1 + $0x38] sm:$0xff]
    %v360 = vld [vmem:[%s1 + $0x40] sm:$0xff]
    %v361 = vld [vmem:[%s1 + $0x48] sm:$0xff]
    %v362 = vld [vmem:[%s1 + $0x50] sm:$0xff]
    %v363 = vld [vmem:[%s1 + $0x58] sm:$0xff]
    %v364 = vld [vmem:[%s1 + $0x60] sm:$0xff]
    %v365 = vld [vmem:[%s1 + $0x68] sm:$0xff]
    %v366 = vld [vmem:[%s1 + $0x70] sm:$0xff]
    %v367 = vld [vmem:[%s1 + $0x78] sm:$0xff]
    %v368 = vld [vmem:[%s1 + $0x80] sm:$0xff]
    %v369 = vld [vmem:[%s1 + $0x88] sm:$0xff]
    %v370 = vld [vmem:[%s1 + $0x90] sm:$0xff]
    %v371 = vld [vmem:[%s1 + $0x98] sm:$0xff]
    %v372 = vld [vmem:[%s1 + $0xa0] sm:$0xff]
    %v373 = vld [vmem:[%s1 + $0xa8] sm:$0xff]
    %v374 = vld [vmem:[%s1 + $0xb0] sm:$0xff]
    %v375 = vld [vmem:[%s1 + $0xb8] sm:$0xff]
    %v376 = vld [vmem:[%s1 + $0xc0] sm:$0xff]
    %v377 = vld [vmem:[%s1 + $0xc8] sm:$0xff]
    %v378 = vld [vmem:[%s1 + $0xd0] sm:$0xff]
    %v379 = vld [vmem:[%s1 + $0xd8] sm:$0xff]
    %v380 = vld [vmem:[%s1 + $0xe0] sm:$0xff]
    %v381 = vld [vmem:[%s1 + $0xe8] sm:$0xff]
    %v382 = vld [vmem:[%s1 + $0xf0] sm:$0xff]
    %v383 = vld [vmem:[%s1 + $0xf8] sm:$0xff]
    %v384 = vld [vmem:[%s1 + $0x100] sm:$0xff]
    %v385 = vld [vmem:[%s1 + $0x108] sm:$0xff]
    %v386 = vld [vmem:[%s1 + $0x110] sm:$0xff]
    %v387 = vld [vmem:[%s1 + $0x118] sm:$0xff]
    %v388 = vld [vmem:[%s1 + $0x120] sm:$0xff]
    %v389 = vld [vmem:[%s1 + $0x128] sm:$0xff]
    %v390 = vld [vmem:[%s1 + $0x130] sm:$0xff]
    %v391 = vld [vmem:[%s1 + $0x138] sm:$0xff]
    %v392 = vld [vmem:[%s1 + $0x140] sm:$0xff]
    %v393 = vld [vmem:[%s1 + $0x148] sm:$0xff]
    %v394 = vld [vmem:[%s1 + $0x150] sm:$0xff]
    %v395 = vld [vmem:[%s1 + $0x158] sm:$0xff]
    %v396 = vld [vmem:[%s1 + $0x160] sm:$0xff]
    %v397 = vld [vmem:[%s1 + $0x168] sm:$0xff]
    %v398 = vld [vmem:[%s1 + $0x170] sm:$0xff]
    %v399 = vld [vmem:[%s1 + $0x178] sm:$0xff]
    %v400 = vld [vmem:[%s1 + $0x180] sm:$0xff]
    %v401 = vld [vmem:[%s1 + $0x188] sm:$0xff]
    %v402 = vld [vmem:[%s1 + $0x190] sm:$0xff]
    %v403 = vld [vmem:[%s1 + $0x198] sm:$0xff]
    %v404 = vld [vmem:[%s1 + $0x1a0] sm:$0xff]
    %v405 = vld [vmem:[%s1 + $0x1a8] sm:$0xff]
    %v406 = vld [vmem:[%s1 + $0x1b0] sm:$0xff]
    %v407 = vld [vmem:[%s1 + $0x1b8] sm:$0xff]
    %v408 = vld [vmem:[%s1 + $0x1c0] sm:$0xff]
    %v409 = vld [vmem:[%s1 + $0x1c8] sm:$0xff]
    %v410 = vld [vmem:[%s1 + $0x1d0] sm:$0xff]
    %v411 = vld [vmem:[%s1 + $0x1d8] sm:$0xff]
    %v412 = vld [vmem:[%s1 + $0x1e0] sm:$0xff]
    %v413 = vld [vmem:[%s1 + $0x1e8] sm:$0xff]
    %v414 = vld [vmem:[%s1 + $0x1f0] sm:$0xff]
    %v415 = vld [vmem:[%s1 + $0x1f8] sm:$0xff]
    %v416 = vld [vmem:[%s1 + $0x200] sm:$0xff]
    %v417 = vld [vmem:[%s1 + $0x208] sm:$0xff]
    %v418 = vld [vmem:[%s1 + $0x210] sm:$0xff]
    %v419 = vld [vmem:[%s1 + $0x218] sm:$0xff]
    %v420 = vld [vmem:[%s1 + $0x220] sm:$0xff]
    %v421 = vld [vmem:[%s1 + $0x228] sm:$0xff]
    %v422 = vld [vmem:[%s1 + $0x230] sm:$0xff]
    %v423 = vld [vmem:[%s1 + $0x238] sm:$0xff]
    %v424 = vld [vmem:[%s1 + $0x240] sm:$0xff]
    %v425 = vld [vmem:[%s1 + $0x248] sm:$0xff]
    %v426 = vld [vmem:[%s1 + $0x250] sm:$0xff]
    %v427 = vld [vmem:[%s1 + $0x258] sm:$0xff]
    %v428 = vld [vmem:[%s1 + $0x260] sm:$0xff]
    %v429 = vld [vmem:[%s1 + $0x268] sm:$0xff]
    %v430 = vld [vmem:[%s1 + $0x270] sm:$0xff]
    %v431 = vld [vmem:[%s1 + $0x278] sm:$0xff]
    %v432 = vld [vmem:[%s1 + $0x280] sm:$0xff]
    %v433 = vld [vmem:[%s1 + $0x288] sm:$0xff]
    %v434 = vld [vmem:[%s1 + $0x290] sm:$0xff]
    %v435 = vld [vmem:[%s1 + $0x298] sm:$0xff]
    %v436 = vld [vmem:[%s1 + $0x2a0] sm:$0xff]
    %v437 = vld [vmem:[%s1 + $0x2a8] sm:$0xff]
    %v438 = vld [vmem:[%s1 + $0x2b0] sm:$0xff]
    %v439 = vld [vmem:[%s1 + $0x2b8] sm:$0xff]
    %v440 = vld [vmem:[%s1 + $0x2c0] sm:$0xff]
    %v441 = vld [vmem:[%s1 + $0x2c8] sm:$0xff]
    %v442 = vld [vmem:[%s1 + $0x2d0] sm:$0xff]
    %v443 = vld [vmem:[%s1 + $0x2d8] sm:$0xff]
    %v444 = vld [vmem:[%s1 + $0x2e0] sm:$0xff]
    %v445 = vld [vmem:[%s1 + $0x2e8] sm:$0xff]
    %v446 = vld [vmem:[%s1 + $0x2f0] sm:$0xff]
    %v447 = vld [vmem:[%s1 + $0x2f8] sm:$0xff]
    %v448 = vld [vmem:[%s1 + $0x300] sm:$0xff]
    %v449 = vld [vmem:[%s1 + $0x308] sm:$0xff]
    %v450 = vld [vmem:[%s1 + $0x310] sm:$0xff]
    %v451 = vld [vmem:[%s1 + $0x318] sm:$0xff]
    %v452 = vld [vmem:[%s1 + $0x320] sm:$0xff]
    %v453 = vld [vmem:[%s1 + $0x328] sm:$0xff]
    %v454 = vld [vmem:[%s1 + $0x330] sm:$0xff]
    %v455 = vld [vmem:[%s1 + $0x338] sm:$0xff]
    %v456 = vld [vmem:[%s1 + $0x340] sm:$0xff]
    %v457 = vld [vmem:[%s1 + $0x348] sm:$0xff]
    %v458 = vld [vmem:[%s1 + $0x350] sm:$0xff]
    %v459 = vld [vmem:[%s1 + $0x358] sm:$0xff]
    %v460 = vld [vmem:[%s1 + $0x360] sm:$0xff]
    %v461 = vld [vmem:[%s1 + $0x368] sm:$0xff]
    %v462 = vld [vmem:[%s1 + $0x370] sm:$0xff]
    %v463 = vld [vmem:[%s1 + $0x378] sm:$0xff]
    %v464 = vld [vmem:[%s1 + $0x380] sm:$0xff]
    %v465 = vld [vmem:[%s1 + $0x388] sm:$0xff]
    %v466 = vld [vmem:[%s1 + $0x390] sm:$0xff]
    %v467 = vld [vmem:[%s1 + $0x398] sm:$0xff]
    %v468 = vld [vmem:[%s1 + $0x3a0] sm:$0xff]
    %v469 = vld [vmem:[%s1 + $0x3a8] sm:$0xff]
    %v470 = vld [vmem:[%s1 + $0x3b0] sm:$0xff]
    %v471 = vld [vmem:[%s1 + $0x3b8] sm:$0xff]
    %v472 = vld [vmem:[%s1 + $0x3c0] sm:$0xff]
    %v473 = vld [vmem:[%s1 + $0x3c8] sm:$0xff]
    %v474 = vld [vmem:[%s1 + $0x3d0] sm:$0xff]
    %v475 = vld [vmem:[%s1 + $0x3d8] sm:$0xff]
    %v476 = vld [vmem:[%s1 + $0x3e0] sm:$0xff]
    %v477 = vld [vmem:[%s1 + $0x3e8] sm:$0xff]
    %v478 = vld [vmem:[%s1 + $0x3f0] sm:$0xff]
    %v479 = vld [vmem:[%s1 + $0x3f8] sm:$0xff]
    %v480 = vpack.c.bf16 %v348, %v348
    %v481 = vpack.c.bf16 %v349, %v349
    %v482 = vpack.c.bf16 %v350, %v350
    %v483 = vpack.c.bf16 %v351, %v351
    %v612 = vunpack.c.l.b16 %v352
    %v613 = vunpack.c.h.b16 %v352
    %v614 = vunpack.c.l.b16 %v353
    %v615 = vunpack.c.h.b16 %v353
    %v616 = vunpack.c.l.b16 %v354
    %v617 = vunpack.c.h.b16 %v354
    %v618 = vunpack.c.l.b16 %v355
    %v619 = vunpack.c.h.b16 %v355
    %v620 = vunpack.c.l.b16 %v356
    %v621 = vunpack.c.h.b16 %v356
    %v622 = vunpack.c.l.b16 %v357
    %v623 = vunpack.c.h.b16 %v357
    %v624 = vunpack.c.l.b16 %v358
    %v625 = vunpack.c.h.b16 %v358
    %v626 = vunpack.c.l.b16 %v359
    %v627 = vunpack.c.h.b16 %v359
    %v628 = vunpack.c.l.b16 %v360
    %v629 = vunpack.c.h.b16 %v360
    %v630 = vunpack.c.l.b16 %v361
    %v631 = vunpack.c.h.b16 %v361
    %v632 = vunpack.c.l.b16 %v362
    %v633 = vunpack.c.h.b16 %v362
    %v634 = vunpack.c.l.b16 %v363
    %v635 = vunpack.c.h.b16 %v363
    %v636 = vunpack.c.l.b16 %v364
    %v637 = vunpack.c.h.b16 %v364
    %v638 = vunpack.c.l.b16 %v365
    %v639 = vunpack.c.h.b16 %v365
    %v640 = vunpack.c.l.b16 %v366
    %v641 = vunpack.c.h.b16 %v366
    %v642 = vunpack.c.l.b16 %v367
    %v643 = vunpack.c.h.b16 %v367
    %v644 = vunpack.c.l.b16 %v368
    %v645 = vunpack.c.h.b16 %v368
    %v646 = vunpack.c.l.b16 %v369
    %v647 = vunpack.c.h.b16 %v369
    %v648 = vunpack.c.l.b16 %v370
    %v649 = vunpack.c.h.b16 %v370
    %v650 = vunpack.c.l.b16 %v371
    %v651 = vunpack.c.h.b16 %v371
    %v652 = vunpack.c.l.b16 %v372
    %v653 = vunpack.c.h.b16 %v372
    %v654 = vunpack.c.l.b16 %v373
    %v655 = vunpack.c.h.b16 %v373
    %v656 = vunpack.c.l.b16 %v374
    %v657 = vunpack.c.h.b16 %v374
    %v658 = vunpack.c.l.b16 %v375
    %v659 = vunpack.c.h.b16 %v375
    %v660 = vunpack.c.l.b16 %v376
    %v661 = vunpack.c.h.b16 %v376
    %v662 = vunpack.c.l.b16 %v377
    %v663 = vunpack.c.h.b16 %v377
    %v664 = vunpack.c.l.b16 %v378
    %v665 = vunpack.c.h.b16 %v378
    %v666 = vunpack.c.l.b16 %v379
    %v667 = vunpack.c.h.b16 %v379
    %v668 = vunpack.c.l.b16 %v380
    %v669 = vunpack.c.h.b16 %v380
    %v670 = vunpack.c.l.b16 %v381
    %v671 = vunpack.c.h.b16 %v381
    %v672 = vunpack.c.l.b16 %v382
    %v673 = vunpack.c.h.b16 %v382
    %v674 = vunpack.c.l.b16 %v383
    %v675 = vunpack.c.h.b16 %v383
    %v676 = vunpack.c.l.b16 %v384
    %v677 = vunpack.c.h.b16 %v384
    %v678 = vunpack.c.l.b16 %v385
    %v679 = vunpack.c.h.b16 %v385
    %v680 = vunpack.c.l.b16 %v386
    %v681 = vunpack.c.h.b16 %v386
    %v682 = vunpack.c.l.b16 %v387
    %v683 = vunpack.c.h.b16 %v387
    %v684 = vunpack.c.l.b16 %v388
    %v685 = vunpack.c.h.b16 %v388
    %v686 = vunpack.c.l.b16 %v389
    %v687 = vunpack.c.h.b16 %v389
    %v688 = vunpack.c.l.b16 %v390
    %v689 = vunpack.c.h.b16 %v390
    %v690 = vunpack.c.l.b16 %v391
    %v691 = vunpack.c.h.b16 %v391
    %v692 = vunpack.c.l.b16 %v392
    %v693 = vunpack.c.h.b16 %v392
    %v694 = vunpack.c.l.b16 %v393
    %v695 = vunpack.c.h.b16 %v393
    %v696 = vunpack.c.l.b16 %v394
    %v697 = vunpack.c.h.b16 %v394
    %v698 = vunpack.c.l.b16 %v395
    %v699 = vunpack.c.h.b16 %v395
    %v700 = vunpack.c.l.b16 %v396
    %v701 = vunpack.c.h.b16 %v396
    %v702 = vunpack.c.l.b16 %v397
    %v703 = vunpack.c.h.b16 %v397
    %v704 = vunpack.c.l.b16 %v398
    %v705 = vunpack.c.h.b16 %v398
    %v706 = vunpack.c.l.b16 %v399
    %v707 = vunpack.c.h.b16 %v399
    %v708 = vunpack.c.l.b16 %v400
    %v709 = vunpack.c.h.b16 %v400
    %v710 = vunpack.c.l.b16 %v401
    %v711 = vunpack.c.h.b16 %v401
    %v712 = vunpack.c.l.b16 %v402
    %v713 = vunpack.c.h.b16 %v402
    %v714 = vunpack.c.l.b16 %v403
    %v715 = vunpack.c.h.b16 %v403
    %v716 = vunpack.c.l.b16 %v404
    %v717 = vunpack.c.h.b16 %v404
    %v718 = vunpack.c.l.b16 %v405
    %v719 = vunpack.c.h.b16 %v405
    %v720 = vunpack.c.l.b16 %v406
    %v721 = vunpack.c.h.b16 %v406
    %v722 = vunpack.c.l.b16 %v407
    %v723 = vunpack.c.h.b16 %v407
    %v724 = vunpack.c.l.b16 %v408
    %v725 = vunpack.c.h.b16 %v408
    %v726 = vunpack.c.l.b16 %v409
    %v727 = vunpack.c.h.b16 %v409
    %v728 = vunpack.c.l.b16 %v410
    %v729 = vunpack.c.h.b16 %v410
    %v730 = vunpack.c.l.b16 %v411
    %v731 = vunpack.c.h.b16 %v411
    %v732 = vunpack.c.l.b16 %v412
    %v733 = vunpack.c.h.b16 %v412
    %v734 = vunpack.c.l.b16 %v413
    %v735 = vunpack.c.h.b16 %v413
    %v736 = vunpack.c.l.b16 %v414
    %v737 = vunpack.c.h.b16 %v414
    %v738 = vunpack.c.l.b16 %v415
    %v739 = vunpack.c.h.b16 %v415
    %v740 = vunpack.c.l.b16 %v416
    %v741 = vunpack.c.h.b16 %v416
    %v742 = vunpack.c.l.b16 %v417
    %v743 = vunpack.c.h.b16 %v417
    %v744 = vunpack.c.l.b16 %v418
    %v745 = vunpack.c.h.b16 %v418
    %v746 = vunpack.c.l.b16 %v419
    %v747 = vunpack.c.h.b16 %v419
    %v748 = vunpack.c.l.b16 %v420
    %v749 = vunpack.c.h.b16 %v420
    %v750 = vunpack.c.l.b16 %v421
    %v751 = vunpack.c.h.b16 %v421
    %v752 = vunpack.c.l.b16 %v422
    %v753 = vunpack.c.h.b16 %v422
    %v754 = vunpack.c.l.b16 %v423
    %v755 = vunpack.c.h.b16 %v423
    %v756 = vunpack.c.l.b16 %v424
    %v757 = vunpack.c.h.b16 %v424
    %v758 = vunpack.c.l.b16 %v425
    %v759 = vunpack.c.h.b16 %v425
    %v760 = vunpack.c.l.b16 %v426
    %v761 = vunpack.c.h.b16 %v426
    %v762 = vunpack.c.l.b16 %v427
    %v763 = vunpack.c.h.b16 %v427
    %v764 = vunpack.c.l.b16 %v428
    %v765 = vunpack.c.h.b16 %v428
    %v766 = vunpack.c.l.b16 %v429
    %v767 = vunpack.c.h.b16 %v429
    %v768 = vunpack.c.l.b16 %v430
    %v769 = vunpack.c.h.b16 %v430
    %v770 = vunpack.c.l.b16 %v431
    %v771 = vunpack.c.h.b16 %v431
    %v772 = vunpack.c.l.b16 %v432
    %v773 = vunpack.c.h.b16 %v432
    %v774 = vunpack.c.l.b16 %v433
    %v775 = vunpack.c.h.b16 %v433
    %v776 = vunpack.c.l.b16 %v434
    %v777 = vunpack.c.h.b16 %v434
    %v778 = vunpack.c.l.b16 %v435
    %v779 = vunpack.c.h.b16 %v435
    %v780 = vunpack.c.l.b16 %v436
    %v781 = vunpack.c.h.b16 %v436
    %v782 = vunpack.c.l.b16 %v437
    %v783 = vunpack.c.h.b16 %v437
    %v784 = vunpack.c.l.b16 %v438
    %v785 = vunpack.c.h.b16 %v438
    %v786 = vunpack.c.l.b16 %v439
    %v787 = vunpack.c.h.b16 %v439
    %v788 = vunpack.c.l.b16 %v440
    %v789 = vunpack.c.h.b16 %v440
    %v790 = vunpack.c.l.b16 %v441
    %v791 = vunpack.c.h.b16 %v441
    %v792 = vunpack.c.l.b16 %v442
    %v793 = vunpack.c.h.b16 %v442
    %v794 = vunpack.c.l.b16 %v443
    %v795 = vunpack.c.h.b16 %v443
    %v796 = vunpack.c.l.b16 %v444
    %v797 = vunpack.c.h.b16 %v444
    %v798 = vunpack.c.l.b16 %v445
    %v799 = vunpack.c.h.b16 %v445
    %v800 = vunpack.c.l.b16 %v446
    %v801 = vunpack.c.h.b16 %v446
    %v802 = vunpack.c.l.b16 %v447
    %v803 = vunpack.c.h.b16 %v447
    %v804 = vunpack.c.l.b16 %v448
    %v805 = vunpack.c.h.b16 %v448
    %v806 = vunpack.c.l.b16 %v449
    %v807 = vunpack.c.h.b16 %v449
    %v808 = vunpack.c.l.b16 %v450
    %v809 = vunpack.c.h.b16 %v450
    %v810 = vunpack.c.l.b16 %v451
    %v811 = vunpack.c.h.b16 %v451
    %v812 = vunpack.c.l.b16 %v452
    %v813 = vunpack.c.h.b16 %v452
    %v814 = vunpack.c.l.b16 %v453
    %v815 = vunpack.c.h.b16 %v453
    %v816 = vunpack.c.l.b16 %v454
    %v817 = vunpack.c.h.b16 %v454
    %v818 = vunpack.c.l.b16 %v455
    %v819 = vunpack.c.h.b16 %v455
    %v820 = vunpack.c.l.b16 %v456
    %v821 = vunpack.c.h.b16 %v456
    %v822 = vunpack.c.l.b16 %v457
    %v823 = vunpack.c.h.b16 %v457
    %v824 = vunpack.c.l.b16 %v458
    %v825 = vunpack.c.h.b16 %v458
    %v826 = vunpack.c.l.b16 %v459
    %v827 = vunpack.c.h.b16 %v459
    %v828 = vunpack.c.l.b16 %v460
    %v829 = vunpack.c.h.b16 %v460
    %v830 = vunpack.c.l.b16 %v461
    %v831 = vunpack.c.h.b16 %v461
    %v832 = vunpack.c.l.b16 %v462
    %v833 = vunpack.c.h.b16 %v462
    %v834 = vunpack.c.l.b16 %v463
    %v835 = vunpack.c.h.b16 %v463
    %v836 = vunpack.c.l.b16 %v464
    %v837 = vunpack.c.h.b16 %v464
    %v838 = vunpack.c.l.b16 %v465
    %v839 = vunpack.c.h.b16 %v465
    %v840 = vunpack.c.l.b16 %v466
    %v841 = vunpack.c.h.b16 %v466
    %v842 = vunpack.c.l.b16 %v467
    %v843 = vunpack.c.h.b16 %v467
    %v844 = vunpack.c.l.b16 %v468
    %v845 = vunpack.c.h.b16 %v468
    %v846 = vunpack.c.l.b16 %v469
    %v847 = vunpack.c.h.b16 %v469
    %v848 = vunpack.c.l.b16 %v470
    %v849 = vunpack.c.h.b16 %v470
    %v850 = vunpack.c.l.b16 %v471
    %v851 = vunpack.c.h.b16 %v471
    %v852 = vunpack.c.l.b16 %v472
    %v853 = vunpack.c.h.b16 %v472
    %v854 = vunpack.c.l.b16 %v473
    %v855 = vunpack.c.h.b16 %v473
    %v856 = vunpack.c.l.b16 %v474
    %v857 = vunpack.c.h.b16 %v474
    %v858 = vunpack.c.l.b16 %v475
    %v859 = vunpack.c.h.b16 %v475
    %v860 = vunpack.c.l.b16 %v476
    %v861 = vunpack.c.h.b16 %v476
    %v862 = vunpack.c.l.b16 %v477
    %v863 = vunpack.c.h.b16 %v477
    %v864 = vunpack.c.l.b16 %v478
    %v865 = vunpack.c.h.b16 %v478
    %v866 = vunpack.c.l.b16 %v479
    %v867 = vunpack.c.h.b16 %v479
    %v868 = vpack.c.b16 %v616, %v612
    %v869 = vpack.c.b16 %v617, %v613
    %v870 = vpack.c.b16 %v618, %v614
    %v871 = vpack.c.b16 %v619, %v615
    %v872 = vpack.c.b16 %v624, %v620
    %v873 = vpack.c.b16 %v625, %v621
    %v874 = vpack.c.b16 %v626, %v622
    %v875 = vpack.c.b16 %v627, %v623
    %v876 = vpack.c.b16 %v632, %v628
    %v877 = vpack.c.b16 %v633, %v629
    %v878 = vpack.c.b16 %v634, %v630
    %v879 = vpack.c.b16 %v635, %v631
    %v880 = vpack.c.b16 %v640, %v636
    %v881 = vpack.c.b16 %v641, %v637
    %v882 = vpack.c.b16 %v642, %v638
    %v883 = vpack.c.b16 %v643, %v639
    %v884 = vpack.c.b16 %v648, %v644
    %v885 = vpack.c.b16 %v649, %v645
    %v886 = vpack.c.b16 %v650, %v646
    %v887 = vpack.c.b16 %v651, %v647
    %v888 = vpack.c.b16 %v656, %v652
    %v889 = vpack.c.b16 %v657, %v653
    %v890 = vpack.c.b16 %v658, %v654
    %v891 = vpack.c.b16 %v659, %v655
    %v892 = vpack.c.b16 %v664, %v660
    %v893 = vpack.c.b16 %v665, %v661
    %v894 = vpack.c.b16 %v666, %v662
    %v895 = vpack.c.b16 %v667, %v663
    %v896 = vpack.c.b16 %v672, %v668
    %v897 = vpack.c.b16 %v673, %v669
    %v898 = vpack.c.b16 %v674, %v670
    %v899 = vpack.c.b16 %v675, %v671
    %v900 = vpack.c.b16 %v680, %v676
    %v901 = vpack.c.b16 %v681, %v677
    %v902 = vpack.c.b16 %v682, %v678
    %v903 = vpack.c.b16 %v683, %v679
    %v904 = vpack.c.b16 %v688, %v684
    %v905 = vpack.c.b16 %v689, %v685
    %v906 = vpack.c.b16 %v690, %v686
    %v907 = vpack.c.b16 %v691, %v687
    %v908 = vpack.c.b16 %v696, %v692
    %v909 = vpack.c.b16 %v697, %v693
    %v910 = vpack.c.b16 %v698, %v694
    %v911 = vpack.c.b16 %v699, %v695
    %v912 = vpack.c.b16 %v704, %v700
    %v913 = vpack.c.b16 %v705, %v701
    %v914 = vpack.c.b16 %v706, %v702
    %v915 = vpack.c.b16 %v707, %v703
    %v916 = vpack.c.b16 %v712, %v708
    %v917 = vpack.c.b16 %v713, %v709
    %v918 = vpack.c.b16 %v714, %v710
    %v919 = vpack.c.b16 %v715, %v711
    %v920 = vpack.c.b16 %v720, %v716
    %v921 = vpack.c.b16 %v721, %v717
    %v922 = vpack.c.b16 %v722, %v718
    %v923 = vpack.c.b16 %v723, %v719
    %v924 = vpack.c.b16 %v728, %v724
    %v925 = vpack.c.b16 %v729, %v725
    %v926 = vpack.c.b16 %v730, %v726
    %v927 = vpack.c.b16 %v731, %v727
    %v928 = vpack.c.b16 %v736, %v732
    %v929 = vpack.c.b16 %v737, %v733
    %v930 = vpack.c.b16 %v738, %v734
    %v931 = vpack.c.b16 %v739, %v735
    %v932 = vpack.c.b16 %v744, %v740
    %v933 = vpack.c.b16 %v745, %v741
    %v934 = vpack.c.b16 %v746, %v742
    %v935 = vpack.c.b16 %v747, %v743
    %v936 = vpack.c.b16 %v752, %v748
    %v937 = vpack.c.b16 %v753, %v749
    %v938 = vpack.c.b16 %v754, %v750
    %v939 = vpack.c.b16 %v755, %v751
    %v940 = vpack.c.b16 %v760, %v756
    %v941 = vpack.c.b16 %v761, %v757
    %v942 = vpack.c.b16 %v762, %v758
    %v943 = vpack.c.b16 %v763, %v759
    %v944 = vpack.c.b16 %v768, %v764
    %v945 = vpack.c.b16 %v769, %v765
    %v946 = vpack.c.b16 %v770, %v766
    %v947 = vpack.c.b16 %v771, %v767
    %v948 = vpack.c.b16 %v776, %v772
    %v949 = vpack.c.b16 %v777, %v773
    %v950 = vpack.c.b16 %v778, %v774
    %v951 = vpack.c.b16 %v779, %v775
    %v952 = vpack.c.b16 %v784, %v780
    %v953 = vpack.c.b16 %v785, %v781
    %v954 = vpack.c.b16 %v786, %v782
    %v955 = vpack.c.b16 %v787, %v783
    %v956 = vpack.c.b16 %v792, %v788
    %v957 = vpack.c.b16 %v793, %v789
    %v958 = vpack.c.b16 %v794, %v790
    %v959 = vpack.c.b16 %v795, %v791
    %v960 = vpack.c.b16 %v800, %v796
    %v961 = vpack.c.b16 %v801, %v797
    %v962 = vpack.c.b16 %v802, %v798
    %v963 = vpack.c.b16 %v803, %v799
    %v964 = vpack.c.b16 %v808, %v804
    %v965 = vpack.c.b16 %v809, %v805
    %v966 = vpack.c.b16 %v810, %v806
    %v967 = vpack.c.b16 %v811, %v807
    %v968 = vpack.c.b16 %v816, %v812
    %v969 = vpack.c.b16 %v817, %v813
    %v970 = vpack.c.b16 %v818, %v814
    %v971 = vpack.c.b16 %v819, %v815
    %v972 = vpack.c.b16 %v824, %v820
    %v973 = vpack.c.b16 %v825, %v821
    %v974 = vpack.c.b16 %v826, %v822
    %v975 = vpack.c.b16 %v827, %v823
    %v976 = vpack.c.b16 %v832, %v828
    %v977 = vpack.c.b16 %v833, %v829
    %v978 = vpack.c.b16 %v834, %v830
    %v979 = vpack.c.b16 %v835, %v831
    %v980 = vpack.c.b16 %v840, %v836
    %v981 = vpack.c.b16 %v841, %v837
    %v982 = vpack.c.b16 %v842, %v838
    %v983 = vpack.c.b16 %v843, %v839
    %v984 = vpack.c.b16 %v848, %v844
    %v985 = vpack.c.b16 %v849, %v845
    %v986 = vpack.c.b16 %v850, %v846
    %v987 = vpack.c.b16 %v851, %v847
    %v988 = vpack.c.b16 %v856, %v852
    %v989 = vpack.c.b16 %v857, %v853
    %v990 = vpack.c.b16 %v858, %v854
    %v991 = vpack.c.b16 %v859, %v855
    %v992 = vpack.c.b16 %v864, %v860
    %v993 = vpack.c.b16 %v865, %v861
    %v994 = vpack.c.b16 %v866, %v862
    %v995 = vpack.c.b16 %v867, %v863
    %1124 = vmatprep.subr.bf16.mxu0 %v869
    %1125 = vmatpush1.bf16.msra.mxu0 %v868
    %1126 = vmatprep.subr.bf16.mxu0 %v873
    %1127 = vmatpush1.bf16.msra.mxu0 %v872
    %1128 = vmatprep.subr.bf16.mxu0 %v877
    %1129 = vmatpush1.bf16.msra.mxu0 %v876
    %1130 = vmatprep.subr.bf16.mxu0 %v881
    %1131 = vmatpush1.bf16.msra.mxu0 %v880
    %1132 = vmatprep.subr.bf16.mxu0 %v885
    %1133 = vmatpush1.bf16.msra.mxu0 %v884
    %1134 = vmatprep.subr.bf16.mxu0 %v889
    %1135 = vmatpush1.bf16.msra.mxu0 %v888
    %1136 = vmatprep.subr.bf16.mxu0 %v893
    %1137 = vmatpush1.bf16.msra.mxu0 %v892
    %1138 = vmatprep.subr.bf16.mxu0 %v897
    %1139 = vmatpush1.bf16.msra.mxu0 %v896
    %1140 = vmatprep.subr.bf16.mxu0 %v901
    %1141 = vmatpush1.bf16.msra.mxu0 %v900
    %1142 = vmatprep.subr.bf16.mxu0 %v905
    %1143 = vmatpush1.bf16.msra.mxu0 %v904
    %1144 = vmatprep.subr.bf16.mxu0 %v909
    %1145 = vmatpush1.bf16.msra.mxu0 %v908
    %1146 = vmatprep.subr.bf16.mxu0 %v913
    %1147 = vmatpush1.bf16.msra.mxu0 %v912
    %1148 = vmatprep.subr.bf16.mxu0 %v917
    %1149 = vmatpush1.bf16.msra.mxu0 %v916
    %1150 = vmatprep.subr.bf16.mxu0 %v921
    %1151 = vmatpush1.bf16.msra.mxu0 %v920
    %1152 = vmatprep.subr.bf16.mxu0 %v925
    %1153 = vmatpush1.bf16.msra.mxu0 %v924
    %1154 = vmatprep.subr.bf16.mxu0 %v929
    %1155 = vmatpush1.bf16.msra.mxu0 %v928
    %1156 = vmatprep.mubr.bf16.mxu0 %v481
    %1157 = vmatmul.mubr.bf16.gmra.mrb[0].mxu0 %v480
    %v1158 = vpop.f32.mrb[0].mxu0
    %v1159 = vadd.f32 0.0, %v1158
    %v1160 = vpop.f32.mrb[0].mxu0
    %v1161 = vadd.f32 0.0, %v1160
    %v1162 = vpop.f32.mrb[0].mxu0
    %v1163 = vpop.f32.mrb[0].mxu0
    %1164 = vdwg.mxu0
    %1165 = vmatprep.subr.bf16.mxu0 %v933
    %1166 = vmatpush1.bf16.msra.mxu0 %v932
    %1167 = vmatprep.subr.bf16.mxu0 %v937
    %1168 = vmatpush1.bf16.msra.mxu0 %v936
    %1169 = vmatprep.subr.bf16.mxu0 %v941
    %1170 = vmatpush1.bf16.msra.mxu0 %v940
    %1171 = vmatprep.subr.bf16.mxu0 %v945
    %1172 = vmatpush1.bf16.msra.mxu0 %v944
    %1173 = vmatprep.subr.bf16.mxu0 %v949
    %1174 = vmatpush1.bf16.msra.mxu0 %v948
    %1175 = vmatprep.subr.bf16.mxu0 %v953
    %1176 = vmatpush1.bf16.msra.mxu0 %v952
    %1177 = vmatprep.subr.bf16.mxu0 %v957
    %1178 = vmatpush1.bf16.msra.mxu0 %v956
    %1179 = vmatprep.subr.bf16.mxu0 %v961
    %1180 = vmatpush1.bf16.msra.mxu0 %v960
    %1181 = vmatprep.subr.bf16.mxu0 %v965
    %1182 = vmatpush1.bf16.msra.mxu0 %v964
    %1183 = vmatprep.subr.bf16.mxu0 %v969
    %1184 = vmatpush1.bf16.msra.mxu0 %v968
    %1185 = vmatprep.subr.bf16.mxu0 %v973
    %1186 = vmatpush1.bf16.msra.mxu0 %v972
    %1187 = vmatprep.subr.bf16.mxu0 %v977
    %1188 = vmatpush1.bf16.msra.mxu0 %v976
    %1189 = vmatprep.subr.bf16.mxu0 %v981
    %1190 = vmatpush1.bf16.msra.mxu0 %v980
    %1191 = vmatprep.subr.bf16.mxu0 %v985
    %1192 = vmatpush1.bf16.msra.mxu0 %v984
    %1193 = vmatprep.subr.bf16.mxu0 %v989
    %1194 = vmatpush1.bf16.msra.mxu0 %v988
    %1195 = vmatprep.subr.bf16.mxu0 %v993
    %1196 = vmatpush1.bf16.msra.mxu0 %v992
    %1197 = vmatprep.mubr.bf16.mxu0 %v483
    %1198 = vmatmul.mubr.bf16.gmra.mrb[0].mxu0 %v482
    %v1199 = vpop.f32.mrb[0].mxu0
    %v1200 = vadd.f32 %v1159, %v1199
    %v1201 = vpop.f32.mrb[0].mxu0
    %v1202 = vadd.f32 %v1161, %v1201
    %v1203 = vpop.f32.mrb[0].mxu0
    %v1204 = vpop.f32.mrb[0].mxu0
    %1205 = vdwg.mxu0
    %1206 = vmatprep.subr.bf16.mxu0 %v871
    %1207 = vmatpush1.bf16.msra.mxu0 %v870
    %1208 = vmatprep.subr.bf16.mxu0 %v875
    %1209 = vmatpush1.bf16.msra.mxu0 %v874
    %1210 = vmatprep.subr.bf16.mxu0 %v879
    %1211 = vmatpush1.bf16.msra.mxu0 %v878
    %1212 = vmatprep.subr.bf16.mxu0 %v883
    %1213 = vmatpush1.bf16.msra.mxu0 %v882
    %1214 = vmatprep.subr.bf16.mxu0 %v887
    %1215 = vmatpush1.bf16.msra.mxu0 %v886
    %1216 = vmatprep.subr.bf16.mxu0 %v891
    %1217 = vmatpush1.bf16.msra.mxu0 %v890
    %1218 = vmatprep.subr.bf16.mxu0 %v895
    %1219 = vmatpush1.bf16.msra.mxu0 %v894
    %1220 = vmatprep.subr.bf16.mxu0 %v899
    %1221 = vmatpush1.bf16.msra.mxu0 %v898
    %1222 = vmatprep.subr.bf16.mxu0 %v903
    %1223 = vmatpush1.bf16.msra.mxu0 %v902
    %1224 = vmatprep.subr.bf16.mxu0 %v907
    %1225 = vmatpush1.bf16.msra.mxu0 %v906
    %1226 = vmatprep.subr.bf16.mxu0 %v911
    %1227 = vmatpush1.bf16.msra.mxu0 %v910
    %1228 = vmatprep.subr.bf16.mxu0 %v915
    %1229 = vmatpush1.bf16.msra.mxu0 %v914
    %1230 = vmatprep.subr.bf16.mxu0 %v919
    %1231 = vmatpush1.bf16.msra.mxu0 %v918
    %1232 = vmatprep.subr.bf16.mxu0 %v923
    %1233 = vmatpush1.bf16.msra.mxu0 %v922
    %1234 = vmatprep.subr.bf16.mxu0 %v927
    %1235 = vmatpush1.bf16.msra.mxu0 %v926
    %1236 = vmatprep.subr.bf16.mxu0 %v931
    %1237 = vmatpush1.bf16.msra.mxu0 %v930
    %1238 = vmatprep.mubr.bf16.mxu0 %v481
    %1239 = vmatmul.mubr.bf16.gmra.mrb[0].mxu0 %v480
    %v1240 = vpop.f32.mrb[0].mxu0
    %v1241 = vadd.f32 0.0, %v1240
    %v1242 = vpop.f32.mrb[0].mxu0
    %v1243 = vadd.f32 0.0, %v1242
    %v1244 = vpop.f32.mrb[0].mxu0
    %v1245 = vpop.f32.mrb[0].mxu0
    %1246 = vdwg.mxu0
    %1247 = vmatprep.subr.bf16.mxu0 %v935
    %1248 = vmatpush1.bf16.msra.mxu0 %v934
    %1249 = vmatprep.subr.bf16.mxu0 %v939
    %1250 = vmatpush1.bf16.msra.mxu0 %v938
    %1251 = vmatprep.subr.bf16.mxu0 %v943
    %1252 = vmatpush1.bf16.msra.mxu0 %v942
    %1253 = vmatprep.subr.bf16.mxu0 %v947
    %1254 = vmatpush1.bf16.msra.mxu0 %v946
    %1255 = vmatprep.subr.bf16.mxu0 %v951
    %1256 = vmatpush1.bf16.msra.mxu0 %v950
    %1257 = vmatprep.subr.bf16.mxu0 %v955
    %1258 = vmatpush1.bf16.msra.mxu0 %v954
    %1259 = vmatprep.subr.bf16.mxu0 %v959
    %1260 = vmatpush1.bf16.msra.mxu0 %v958
    %1261 = vmatprep.subr.bf16.mxu0 %v963
    %1262 = vmatpush1.bf16.msra.mxu0 %v962
    %1263 = vmatprep.subr.bf16.mxu0 %v967
    %1264 = vmatpush1.bf16.msra.mxu0 %v966
    %1265 = vmatprep.subr.bf16.mxu0 %v971
    %1266 = vmatpush1.bf16.msra.mxu0 %v970
    %1267 = vmatprep.subr.bf16.mxu0 %v975
    %1268 = vmatpush1.bf16.msra.mxu0 %v974
    %1269 = vmatprep.subr.bf16.mxu0 %v979
    %1270 = vmatpush1.bf16.msra.mxu0 %v978
    %1271 = vmatprep.subr.bf16.mxu0 %v983
    %1272 = vmatpush1.bf16.msra.mxu0 %v982
    %1273 = vmatprep.subr.bf16.mxu0 %v987
    %1274 = vmatpush1.bf16.msra.mxu0 %v986
    %1275 = vmatprep.subr.bf16.mxu0 %v991
    %1276 = vmatpush1.bf16.msra.mxu0 %v990
    %1277 = vmatprep.subr.bf16.mxu0 %v995
    %1278 = vmatpush1.bf16.msra.mxu0 %v994
    %1279 = vmatprep.mubr.bf16.mxu0 %v483
    %1280 = vmatmul.mubr.bf16.gmra.mrb[0].mxu0 %v482
    %v1281 = vpop.f32.mrb[0].mxu0
    %v1282 = vadd.f32 %v1241, %v1281
    %v1283 = vpop.f32.mrb[0].mxu0
    %v1284 = vadd.f32 %v1243, %v1283
    %v1285 = vpop.f32.mrb[0].mxu0
    %v1286 = vpop.f32.mrb[0].mxu0
    %1287 = vdwg.mxu0
    %v1288 = vld [vmem:[%s2] sm:$0xff]
    %v1289 = vld [vmem:[%s2 + $0x8] sm:$0xff]
    %v1290 = vld [vmem:[%s2 + $0x14] sm:$0x11]
    %v1291 = vld [vmem:[%s2 + $0x1c] sm:$0x11]
    %v1292 = vld [vmem:[%s3] sm:$0xf]
    %v1293 = vld [vmem:[%s3 + $0x4] sm:$0xf]
    %v1294 = vld [vmem:[%s3 + $0x8] sm:$0xf]
    %v1295 = vld [vmem:[%s3 + $0xc] sm:$0xf]
    %v1296 = vld [vmem:[%s3 + $0x10] sm:$0xf]
    %v1297 = vld [vmem:[%s3 + $0x14] sm:$0xf]
    %v1298 = vld [vmem:[%s3 + $0x18] sm:$0xf]
    %v1299 = vld [vmem:[%s3 + $0x1c] sm:$0xf]
    %v1300 = vld [vmem:[%s3 + $0x20] sm:$0xf]
    %v1301 = vld [vmem:[%s3 + $0x24] sm:$0xf]
    %v1302 = vld [vmem:[%s3 + $0x28] sm:$0xf]
    %v1303 = vld [vmem:[%s3 + $0x2c] sm:$0xf]
    %v1304 = vld [vmem:[%s3 + $0x30] sm:$0xf]
    %v1305 = vld [vmem:[%s3 + $0x34] sm:$0xf]
    %v1306 = vld [vmem:[%s3 + $0x38] sm:$0xf]
    %v1307 = vld [vmem:[%s3 + $0x3c] sm:$0xf]
    %v1308 = vld [vmem:[%s3 + $0x40] sm:$0xf]
    %v1309 = vld [vmem:[%s3 + $0x44] sm:$0xf]
    %v1310 = vld [vmem:[%s3 + $0x48] sm:$0xf]
    %v1311 = vld [vmem:[%s3 + $0x4c] sm:$0xf]
    %v1312 = vld [vmem:[%s3 + $0x50] sm:$0xf]
    %v1313 = vld [vmem:[%s3 + $0x54] sm:$0xf]
    %v1314 = vld [vmem:[%s3 + $0x58] sm:$0xf]
    %v1315 = vld [vmem:[%s3 + $0x5c] sm:$0xf]
    %v1316 = vld [vmem:[%s3 + $0x60] sm:$0xf]
    %v1317 = vld [vmem:[%s3 + $0x64] sm:$0xf]
    %v1318 = vld [vmem:[%s3 + $0x68] sm:$0xf]
    %v1319 = vld [vmem:[%s3 + $0x6c] sm:$0xf]
    %v1320 = vld [vmem:[%s3 + $0x70] sm:$0xf]
    %v1321 = vld [vmem:[%s3 + $0x74] sm:$0xf]
    %v1322 = vld [vmem:[%s3 + $0x78] sm:$0xf]
    %v1323 = vld [vmem:[%s3 + $0x7c] sm:$0xf]
    %v1324 = vld [vmem:[%s3 + $0x80] sm:$0xf]
    %v1325 = vld [vmem:[%s3 + $0x84] sm:$0xf]
    %v1326 = vld [vmem:[%s3 + $0x88] sm:$0xf]
    %v1327 = vld [vmem:[%s3 + $0x8c] sm:$0xf]
    %v1328 = vld [vmem:[%s3 + $0x90] sm:$0xf]
    %v1329 = vld [vmem:[%s3 + $0x94] sm:$0xf]
    %v1330 = vld [vmem:[%s3 + $0x98] sm:$0xf]
    %v1331 = vld [vmem:[%s3 + $0x9c] sm:$0xf]
    %v1332 = vld [vmem:[%s3 + $0xa0] sm:$0xf]
    %v1333 = vld [vmem:[%s3 + $0xa4] sm:$0xf]
    %v1334 = vld [vmem:[%s3 + $0xa8] sm:$0xf]
    %v1335 = vld [vmem:[%s3 + $0xac] sm:$0xf]
    %v1336 = vld [vmem:[%s3 + $0xb0] sm:$0xf]
    %v1337 = vld [vmem:[%s3 + $0xb4] sm:$0xf]
    %v1338 = vld [vmem:[%s3 + $0xb8] sm:$0xf]
    %v1339 = vld [vmem:[%s3 + $0xbc] sm:$0xf]
    %v1340 = vld [vmem:[%s3 + $0xc0] sm:$0xf]
    %v1341 = vld [vmem:[%s3 + $0xc4] sm:$0xf]
    %v1342 = vld [vmem:[%s3 + $0xc8] sm:$0xf]
    %v1343 = vld [vmem:[%s3 + $0xcc] sm:$0xf]
    %v1344 = vld [vmem:[%s3 + $0xd0] sm:$0xf]
    %v1345 = vld [vmem:[%s3 + $0xd4] sm:$0xf]
    %v1346 = vld [vmem:[%s3 + $0xd8] sm:$0xf]
    %v1347 = vld [vmem:[%s3 + $0xdc] sm:$0xf]
    %v1348 = vld [vmem:[%s3 + $0xe0] sm:$0xf]
    %v1349 = vld [vmem:[%s3 + $0xe4] sm:$0xf]
    %v1350 = vld [vmem:[%s3 + $0xe8] sm:$0xf]
    %v1351 = vld [vmem:[%s3 + $0xec] sm:$0xf]
    %v1352 = vld [vmem:[%s3 + $0xf0] sm:$0xf]
    %v1353 = vld [vmem:[%s3 + $0xf4] sm:$0xf]
    %v1354 = vld [vmem:[%s3 + $0xf8] sm:$0xf]
    %v1355 = vld [vmem:[%s3 + $0xfc] sm:$0xf]
    %v1356 = vld [vmem:[%s4 + $0x14] sm:$0xf]
    %v1357 = vpack.c.bf16 %v1200, %v1200
    %v1358 = vpack.c.bf16 %v1202, %v1202
    %v1359 = vpack.c.bf16 %v1282, %v1282
    %v1360 = vpack.c.bf16 %v1284, %v1284
    %v1425 = vunpack.c.l.b16 %v1292
    %v1426 = vunpack.c.l.b16 %v1293
    %v1427 = vunpack.c.l.b16 %v1294
    %v1428 = vunpack.c.l.b16 %v1295
    %v1429 = vunpack.c.l.b16 %v1296
    %v1430 = vunpack.c.l.b16 %v1297
    %v1431 = vunpack.c.l.b16 %v1298
    %v1432 = vunpack.c.l.b16 %v1299
    %v1433 = vunpack.c.l.b16 %v1300
    %v1434 = vunpack.c.l.b16 %v1301
    %v1435 = vunpack.c.l.b16 %v1302
    %v1436 = vunpack.c.l.b16 %v1303
    %v1437 = vunpack.c.l.b16 %v1304
    %v1438 = vunpack.c.l.b16 %v1305
    %v1439 = vunpack.c.l.b16 %v1306
    %v1440 = vunpack.c.l.b16 %v1307
    %v1441 = vunpack.c.l.b16 %v1308
    %v1442 = vunpack.c.l.b16 %v1309
    %v1443 = vunpack.c.l.b16 %v1310
    %v1444 = vunpack.c.l.b16 %v1311
    %v1445 = vunpack.c.l.b16 %v1312
    %v1446 = vunpack.c.l.b16 %v1313
    %v1447 = vunpack.c.l.b16 %v1314
    %v1448 = vunpack.c.l.b16 %v1315
    %v1449 = vunpack.c.l.b16 %v1316
    %v1450 = vunpack.c.l.b16 %v1317
    %v1451 = vunpack.c.l.b16 %v1318
    %v1452 = vunpack.c.l.b16 %v1319
    %v1453 = vunpack.c.l.b16 %v1320
    %v1454 = vunpack.c.l.b16 %v1321
    %v1455 = vunpack.c.l.b16 %v1322
    %v1456 = vunpack.c.l.b16 %v1323
    %v1457 = vunpack.c.l.b16 %v1324
    %v1458 = vunpack.c.l.b16 %v1325
    %v1459 = vunpack.c.l.b16 %v1326
    %v1460 = vunpack.c.l.b16 %v1327
    %v1461 = vunpack.c.l.b16 %v1328
    %v1462 = vunpack.c.l.b16 %v1329
    %v1463 = vunpack.c.l.b16 %v1330
    %v1464 = vunpack.c.l.b16 %v1331
    %v1465 = vunpack.c.l.b16 %v1332
    %v1466 = vunpack.c.l.b16 %v1333
    %v1467 = vunpack.c.l.b16 %v1334
    %v1468 = vunpack.c.l.b16 %v1335
    %v1469 = vunpack.c.l.b16 %v1336
    %v1470 = vunpack.c.l.b16 %v1337
    %v1471 = vunpack.c.l.b16 %v1338
    %v1472 = vunpack.c.l.b16 %v1339
    %v1473 = vunpack.c.l.b16 %v1340
    %v1474 = vunpack.c.l.b16 %v1341
    %v1475 = vunpack.c.l.b16 %v1342
    %v1476 = vunpack.c.l.b16 %v1343
    %v1477 = vunpack.c.l.b16 %v1344
    %v1478 = vunpack.c.l.b16 %v1345
    %v1479 = vunpack.c.l.b16 %v1346
    %v1480 = vunpack.c.l.b16 %v1347
    %v1481 = vunpack.c.l.b16 %v1348
    %v1482 = vunpack.c.l.b16 %v1349
    %v1483 = vunpack.c.l.b16 %v1350
    %v1484 = vunpack.c.l.b16 %v1351
    %v1485 = vunpack.c.l.b16 %v1352
    %v1486 = vunpack.c.l.b16 %v1353
    %v1487 = vunpack.c.l.b16 %v1354
    %v1488 = vunpack.c.l.b16 %v1355
    %v1489 = vpack.c.b16 %v1426, %v1425
    %v1490 = vpack.c.b16 %v1428, %v1427
    %v1491 = vpack.c.b16 %v1430, %v1429
    %v1492 = vpack.c.b16 %v1432, %v1431
    %v1493 = vpack.c.b16 %v1434, %v1433
    %v1494 = vpack.c.b16 %v1436, %v1435
    %v1495 = vpack.c.b16 %v1438, %v1437
    %v1496 = vpack.c.b16 %v1440, %v1439
    %v1497 = vpack.c.b16 %v1442, %v1441
    %v1498 = vpack.c.b16 %v1444, %v1443
    %v1499 = vpack.c.b16 %v1446, %v1445
    %v1500 = vpack.c.b16 %v1448, %v1447
    %v1501 = vpack.c.b16 %v1450, %v1449
    %v1502 = vpack.c.b16 %v1452, %v1451
    %v1503 = vpack.c.b16 %v1454, %v1453
    %v1504 = vpack.c.b16 %v1456, %v1455
    %v1505 = vpack.c.b16 %v1458, %v1457
    %v1506 = vpack.c.b16 %v1460, %v1459
    %v1507 = vpack.c.b16 %v1462, %v1461
    %v1508 = vpack.c.b16 %v1464, %v1463
    %v1509 = vpack.c.b16 %v1466, %v1465
    %v1510 = vpack.c.b16 %v1468, %v1467
    %v1511 = vpack.c.b16 %v1470, %v1469
    %v1512 = vpack.c.b16 %v1472, %v1471
    %v1513 = vpack.c.b16 %v1474, %v1473
    %v1514 = vpack.c.b16 %v1476, %v1475
    %v1515 = vpack.c.b16 %v1478, %v1477
    %v1516 = vpack.c.b16 %v1480, %v1479
    %v1517 = vpack.c.b16 %v1482, %v1481
    %v1518 = vpack.c.b16 %v1484, %v1483
    %v1519 = vpack.c.b16 %v1486, %v1485
    %v1520 = vpack.c.b16 %v1488, %v1487
    %1553 = vmatprep.subr.bf16.mxu0 0
    %1554 = vmatpush1.bf16.msra.mxu0 %v1489
    %1555 = vmatprep.subr.bf16.mxu0 0
    %1556 = vmatpush1.bf16.msra.mxu0 %v1490
    %1557 = vmatprep.subr.bf16.mxu0 0
    %1558 = vmatpush1.bf16.msra.mxu0 %v1491
    %1559 = vmatprep.subr.bf16.mxu0 0
    %1560 = vmatpush1.bf16.msra.mxu0 %v1492
    %1561 = vmatprep.subr.bf16.mxu0 0
    %1562 = vmatpush1.bf16.msra.mxu0 %v1493
    %1563 = vmatprep.subr.bf16.mxu0 0
    %1564 = vmatpush1.bf16.msra.mxu0 %v1494
    %1565 = vmatprep.subr.bf16.mxu0 0
    %1566 = vmatpush1.bf16.msra.mxu0 %v1495
    %1567 = vmatprep.subr.bf16.mxu0 0
    %1568 = vmatpush1.bf16.msra.mxu0 %v1496
    %1569 = vmatprep.subr.bf16.mxu0 0
    %1570 = vmatpush1.bf16.msra.mxu0 %v1497
    %1571 = vmatprep.subr.bf16.mxu0 0
    %1572 = vmatpush1.bf16.msra.mxu0 %v1498
    %1573 = vmatprep.subr.bf16.mxu0 0
    %1574 = vmatpush1.bf16.msra.mxu0 %v1499
    %1575 = vmatprep.subr.bf16.mxu0 0
    %1576 = vmatpush1.bf16.msra.mxu0 %v1500
    %1577 = vmatprep.subr.bf16.mxu0 0
    %1578 = vmatpush1.bf16.msra.mxu0 %v1501
    %1579 = vmatprep.subr.bf16.mxu0 0
    %1580 = vmatpush1.bf16.msra.mxu0 %v1502
    %1581 = vmatprep.subr.bf16.mxu0 0
    %1582 = vmatpush1.bf16.msra.mxu0 %v1503
    %1583 = vmatprep.subr.bf16.mxu0 0
    %1584 = vmatpush1.bf16.msra.mxu0 %v1504
    %1585 = vmatprep.mubr.bf16.mxu0 %v1358
    %1586 = vmatmul.mubr.bf16.gmra.mrb[0].mxu0 %v1357
    %v1587 = vpop.f32.mrb[0].mxu0
    %v1588 = vadd.f32 0.0, %v1587
    %v1589 = vpop.f32.mrb[0].mxu0
    %v1590 = vpop.f32.mrb[0].mxu0
    %v1591 = vpop.f32.mrb[0].mxu0
    %1592 = vdwg.mxu0
    %1593 = vmatprep.subr.bf16.mxu0 0
    %1594 = vmatpush1.bf16.msra.mxu0 %v1505
    %1595 = vmatprep.subr.bf16.mxu0 0
    %1596 = vmatpush1.bf16.msra.mxu0 %v1506
    %1597 = vmatprep.subr.bf16.mxu0 0
    %1598 = vmatpush1.bf16.msra.mxu0 %v1507
    %1599 = vmatprep.subr.bf16.mxu0 0
    %1600 = vmatpush1.bf16.msra.mxu0 %v1508
    %1601 = vmatprep.subr.bf16.mxu0 0
    %1602 = vmatpush1.bf16.msra.mxu0 %v1509
    %1603 = vmatprep.subr.bf16.mxu0 0
    %1604 = vmatpush1.bf16.msra.mxu0 %v1510
    %1605 = vmatprep.subr.bf16.mxu0 0
    %1606 = vmatpush1.bf16.msra.mxu0 %v1511
    %1607 = vmatprep.subr.bf16.mxu0 0
    %1608 = vmatpush1.bf16.msra.mxu0 %v1512
    %1609 = vmatprep.subr.bf16.mxu0 0
    %1610 = vmatpush1.bf16.msra.mxu0 %v1513
    %1611 = vmatprep.subr.bf16.mxu0 0
    %1612 = vmatpush1.bf16.msra.mxu0 %v1514
    %1613 = vmatprep.subr.bf16.mxu0 0
    %1614 = vmatpush1.bf16.msra.mxu0 %v1515
    %1615 = vmatprep.subr.bf16.mxu0 0
    %1616 = vmatpush1.bf16.msra.mxu0 %v1516
    %1617 = vmatprep.subr.bf16.mxu0 0
    %1618 = vmatpush1.bf16.msra.mxu0 %v1517
    %1619 = vmatprep.subr.bf16.mxu0 0
    %1620 = vmatpush1.bf16.msra.mxu0 %v1518
    %1621 = vmatprep.subr.bf16.mxu0 0
    %1622 = vmatpush1.bf16.msra.mxu0 %v1519
    %1623 = vmatprep.subr.bf16.mxu0 0
    %1624 = vmatpush1.bf16.msra.mxu0 %v1520
    %1625 = vmatprep.mubr.bf16.mxu0 %v1360
    %1626 = vmatmul.mubr.bf16.gmra.mrb[0].mxu0 %v1359
    %v1627 = vpop.f32.mrb[0].mxu0
    %v1628 = vadd.f32 %v1588, %v1627
    %v1629 = vpop.f32.mrb[0].mxu0
    %v1630 = vpop.f32.mrb[0].mxu0
    %v1631 = vpop.f32.mrb[0].mxu0
    %1632 = vdwg.mxu0
    %vm1633 = vcmask 1043456
    %v1634 = vsel %vm1633, %v1628, 1.0
    %v1635 = vpack.c.bf16 %v1634, %v1634
    %vm1636 = vcmask 39936
    %v1638 = vsel %vm1636, %v1356, 0
    %v1640 = vsel %vm60, 4294967295, 65535
    %v1641 = vsel %vm53, %v1640, 0
    %v1643 = vand.u32 %v1635, %v1641
    %1645 = vmatprep.subr.bf16.mxu0 0
    %1646 = vmatpush1.bf16.msra.mxu0 %v1643
    %1647 = vmatprep.subr.bf16.mxu0 0
    %1648 = vmatpush1.bf16.msra.mxu0 0
    %1649 = vmatprep.subr.bf16.mxu0 0
    %1650 = vmatpush1.bf16.msra.mxu0 0
    %1651 = vmatprep.subr.bf16.mxu0 0
    %1652 = vmatpush1.bf16.msra.mxu0 0
    %1653 = vmatprep.subr.bf16.mxu0 0
    %1654 = vmatpush1.bf16.msra.mxu0 0
    %1655 = vmatprep.subr.bf16.mxu0 0
    %1656 = vmatpush1.bf16.msra.mxu0 0
    %1657 = vmatprep.subr.bf16.mxu0 0
    %1658 = vmatpush1.bf16.msra.mxu0 0
    %1659 = vmatprep.subr.bf16.mxu0 0
    %1660 = vmatpush1.bf16.msra.mxu0 0
    %1661 = vmatprep.subr.bf16.mxu0 0
    %1662 = vmatpush1.bf16.msra.mxu0 0
    %1663 = vmatprep.subr.bf16.mxu0 0
    %1664 = vmatpush1.bf16.msra.mxu0 0
    %1665 = vmatprep.subr.bf16.mxu0 0
    %1666 = vmatpush1.bf16.msra.mxu0 0
    %1667 = vmatprep.subr.bf16.mxu0 0
    %1668 = vmatpush1.bf16.msra.mxu0 0
    %1669 = vmatprep.subr.bf16.mxu0 0
    %1670 = vmatpush1.bf16.msra.mxu0 0
    %1671 = vmatprep.subr.bf16.mxu0 0
    %1672 = vmatpush1.bf16.msra.mxu0 0
    %1673 = vmatprep.subr.bf16.mxu0 0
    %1674 = vmatpush1.bf16.msra.mxu0 0
    %1675 = vmatprep.subr.bf16.mxu0 0
    %1676 = vmatpush1.bf16.msra.mxu0 0
    %1677 = vmatprep.mubr.bf16.mxu0 0
    %1678 = vmatmul.mubr.bf16.gmra.mrb[0].mxu0 %v1638
    %v1679 = vpop.f32.mrb[0].mxu0
    %v1680 = vadd.f32 0.0, %v1679
    %v1681 = vpop.f32.mrb[0].mxu0
    %v1682 = vpop.f32.mrb[0].mxu0
    %v1683 = vpop.f32.mrb[0].mxu0
    %1684 = vdwg.mxu0
    %v1685 = vld [vmem:[%s4 + $0xc] sm:$0x3]
    %1690 = vrot.lane.b32.xlu0 %v1200, 17
    %v1691 = vpop.permute.xlu0 %1690
    %1692 = vrot.lane.b32.xlu0 %v1202, 17
    %v1693 = vpop.permute.xlu0 %1692
    %1694 = vrot.lane.b32.xlu0 %v1282, 17
    %v1695 = vpop.permute.xlu0 %1694
    %1696 = vrot.lane.b32.xlu0 %v1284, 17
    %v1697 = vpop.permute.xlu0 %1696
    %vm1698 = vcmask 138240
    %v1699 = vsel %vm1698, %v1691, %v1693
    %v1700 = vsel %vm1698, %v1693, %v1695
    %v1701 = vsel %vm1698, %v1695, %v1697
    %v1706 = vsel %vm1698, 0.0, %v1691
    %v1707 = vunpack.c.l.bf16 %v1288
    %v1708 = vunpack.c.h.bf16 %v1288
    %v1709 = vunpack.c.l.bf16 %v1289
    %v1710 = vunpack.c.h.bf16 %v1289
    %v1711 = vlaneseq
    %v1712 = vshrl.u32 %v1711, 7
    %v1713 = vsub.s32 0, %v1712
    %v1714 = vrot.slane %v1707, %v1713
    %v1715 = vlaneseq
    %v1716 = vshrl.u32 %v1715, 7
    %v1717 = vsub.s32 0, %v1716
    %v1718 = vrot.slane %v1708, %v1717
    %v1719 = vlaneseq
    %v1720 = vshrl.u32 %v1719, 7
    %v1721 = vsub.s32 0, %v1720
    %v1722 = vrot.slane %v1709, %v1721
    %v1723 = vlaneseq
    %v1724 = vshrl.u32 %v1723, 7
    %v1725 = vsub.s32 0, %v1724
    %v1726 = vrot.slane %v1710, %v1725
    %v1727 = vmul.f32 %v1706, %v1714
    %v1728 = vmul.f32 %v1699, %v1718
    %v1729 = vmul.f32 %v1700, %v1722
    %v1730 = vmul.f32 %v1701, %v1726
    %1731 = vrot.lane.b32.xlu0 %v1200, 16
    %v1732 = vpop.permute.xlu0 %1731
    %1733 = vrot.lane.b32.xlu0 %v1202, 16
    %v1734 = vpop.permute.xlu0 %1733
    %1735 = vrot.lane.b32.xlu0 %v1282, 16
    %v1736 = vpop.permute.xlu0 %1735
    %1737 = vrot.lane.b32.xlu0 %v1284, 16
    %v1738 = vpop.permute.xlu0 %1737
    %vm1739 = vcmask 130048
    %v1740 = vsel %vm1739, %v1732, %v1734
    %v1741 = vsel %vm1739, %v1734, %v1736
    %v1742 = vsel %vm1739, %v1736, %v1738
    %v1747 = vsel %vm1739, 0.0, %v1732
    %v1748 = vlaneseq
    %v1749 = vshrl.u32 %v1748, 7
    %v1750 = vsub.s32 1, %v1749
    %v1751 = vrot.slane %v1707, %v1750
    %v1752 = vlaneseq
    %v1753 = vshrl.u32 %v1752, 7
    %v1754 = vsub.s32 1, %v1753
    %v1755 = vrot.slane %v1708, %v1754
    %v1756 = vlaneseq
    %v1757 = vshrl.u32 %v1756, 7
    %v1758 = vsub.s32 1, %v1757
    %v1759 = vrot.slane %v1709, %v1758
    %v1760 = vlaneseq
    %v1761 = vshrl.u32 %v1760, 7
    %v1762 = vsub.s32 1, %v1761
    %v1763 = vrot.slane %v1710, %v1762
    %v1764 = vmul.f32 %v1747, %v1751
    %v1765 = vmul.f32 %v1740, %v1755
    %v1766 = vmul.f32 %v1741, %v1759
    %v1767 = vmul.f32 %v1742, %v1763
    %1768 = vrot.lane.b32.xlu0 %v1200, 15
    %v1769 = vpop.permute.xlu0 %1768
    %1770 = vrot.lane.b32.xlu0 %v1202, 15
    %v1771 = vpop.permute.xlu0 %1770
    %1772 = vrot.lane.b32.xlu0 %v1282, 15
    %v1773 = vpop.permute.xlu0 %1772
    %1774 = vrot.lane.b32.xlu0 %v1284, 15
    %v1775 = vpop.permute.xlu0 %1774
    %vm1776 = vcmask 121856
    %v1777 = vsel %vm1776, %v1769, %v1771
    %v1778 = vsel %vm1776, %v1771, %v1773
    %v1779 = vsel %vm1776, %v1773, %v1775
    %v1784 = vsel %vm1776, 0.0, %v1769
    %v1785 = vlaneseq
    %v1786 = vshrl.u32 %v1785, 7
    %v1787 = vsub.s32 2, %v1786
    %v1788 = vrot.slane %v1707, %v1787
    %v1789 = vlaneseq
    %v1790 = vshrl.u32 %v1789, 7
    %v1791 = vsub.s32 2, %v1790
    %v1792 = vrot.slane %v1708, %v1791
    %v1793 = vlaneseq
    %v1794 = vshrl.u32 %v1793, 7
    %v1795 = vsub.s32 2, %v1794
    %v1796 = vrot.slane %v1709, %v1795
    %v1797 = vlaneseq
    %v1798 = vshrl.u32 %v1797, 7
    %v1799 = vsub.s32 2, %v1798
    %v1800 = vrot.slane %v1710, %v1799
    %v1801 = vmul.f32 %v1784, %v1788
    %v1802 = vmul.f32 %v1777, %v1792
    %v1803 = vmul.f32 %v1778, %v1796
    %v1804 = vmul.f32 %v1779, %v1800
    %1805 = vrot.lane.b32.xlu0 %v1200, 1
    %v1806 = vpop.permute.xlu0 %1805
    %1807 = vrot.lane.b32.xlu0 %v1202, 1
    %v1808 = vpop.permute.xlu0 %1807
    %1809 = vrot.lane.b32.xlu0 %v1282, 1
    %v1810 = vpop.permute.xlu0 %1809
    %1811 = vrot.lane.b32.xlu0 %v1284, 1
    %v1812 = vpop.permute.xlu0 %1811
    %vm1813 = vcmask 7168
    %v1814 = vsel %vm1813, %v1806, %v1808
    %v1815 = vsel %vm1813, %v1808, %v1810
    %v1816 = vsel %vm1813, %v1810, %v1812
    %v1821 = vsel %vm1813, 0.0, %v1806
    %v1822 = vlaneseq
    %v1823 = vshrl.u32 %v1822, 7
    %v1824 = vsub.s32 3, %v1823
    %v1825 = vrot.slane %v1707, %v1824
    %v1826 = vlaneseq
    %v1827 = vshrl.u32 %v1826, 7
    %v1828 = vsub.s32 3, %v1827
    %v1829 = vrot.slane %v1708, %v1828
    %v1830 = vlaneseq
    %v1831 = vshrl.u32 %v1830, 7
    %v1832 = vsub.s32 3, %v1831
    %v1833 = vrot.slane %v1709, %v1832
    %v1834 = vlaneseq
    %v1835 = vshrl.u32 %v1834, 7
    %v1836 = vsub.s32 3, %v1835
    %v1837 = vrot.slane %v1710, %v1836
    %v1838 = vmul.f32 %v1821, %v1825
    %v1839 = vmul.f32 %v1814, %v1829
    %v1840 = vmul.f32 %v1815, %v1833
    %v1841 = vmul.f32 %v1816, %v1837
    %v1842 = vlaneseq
    %v1843 = vshrl.u32 %v1842, 7
    %v1844 = vsub.s32 4, %v1843
    %v1845 = vrot.slane %v1707, %v1844
    %v1846 = vlaneseq
    %v1847 = vshrl.u32 %v1846, 7
    %v1848 = vsub.s32 4, %v1847
    %v1849 = vrot.slane %v1708, %v1848
    %v1850 = vlaneseq
    %v1851 = vshrl.u32 %v1850, 7
    %v1852 = vsub.s32 4, %v1851
    %v1853 = vrot.slane %v1709, %v1852
    %v1854 = vlaneseq
    %v1855 = vshrl.u32 %v1854, 7
    %v1856 = vsub.s32 4, %v1855
    %v1857 = vrot.slane %v1710, %v1856
    %v1858 = vmul.f32 %v1200, %v1845
    %v1859 = vmul.f32 %v1202, %v1849
    %v1860 = vmul.f32 %v1282, %v1853
    %v1861 = vmul.f32 %v1284, %v1857
    %1862 = vrot.lane.b32.xlu0 %v1200, 127
    %v1863 = vpop.permute.xlu0 %1862
    %1864 = vrot.lane.b32.xlu0 %v1202, 127
    %v1865 = vpop.permute.xlu0 %1864
    %1866 = vrot.lane.b32.xlu0 %v1282, 127
    %v1867 = vpop.permute.xlu0 %1866
    %1868 = vrot.lane.b32.xlu0 %v1284, 127
    %v1869 = vpop.permute.xlu0 %1868
    %vm1870 = vcmask 1039360
    %v1871 = vsel %vm1870, %v1863, %v1865
    %v1872 = vsel %vm1870, %v1865, %v1867
    %v1873 = vsel %vm1870, %v1867, %v1869
    %v1878 = vsel %vm1870, %v1869, 0.0
    %v1879 = vlaneseq
    %v1880 = vshrl.u32 %v1879, 7
    %v1881 = vsub.s32 5, %v1880
    %v1882 = vrot.slane %v1707, %v1881
    %v1883 = vlaneseq
    %v1884 = vshrl.u32 %v1883, 7
    %v1885 = vsub.s32 5, %v1884
    %v1886 = vrot.slane %v1708, %v1885
    %v1887 = vlaneseq
    %v1888 = vshrl.u32 %v1887, 7
    %v1889 = vsub.s32 5, %v1888
    %v1890 = vrot.slane %v1709, %v1889
    %v1891 = vlaneseq
    %v1892 = vshrl.u32 %v1891, 7
    %v1893 = vsub.s32 5, %v1892
    %v1894 = vrot.slane %v1710, %v1893
    %v1895 = vmul.f32 %v1871, %v1882
    %v1896 = vmul.f32 %v1872, %v1886
    %v1897 = vmul.f32 %v1873, %v1890
    %v1898 = vmul.f32 %v1878, %v1894
    %1899 = vrot.lane.b32.xlu0 %v1200, 113
    %v1900 = vpop.permute.xlu0 %1899
    %1901 = vrot.lane.b32.xlu0 %v1202, 113
    %v1902 = vpop.permute.xlu0 %1901
    %1903 = vrot.lane.b32.xlu0 %v1282, 113
    %v1904 = vpop.permute.xlu0 %1903
    %1905 = vrot.lane.b32.xlu0 %v1284, 113
    %v1906 = vpop.permute.xlu0 %1905
    %vm1907 = vcmask 924672
    %v1908 = vsel %vm1907, %v1900, %v1902
    %v1909 = vsel %vm1907, %v1902, %v1904
    %v1910 = vsel %vm1907, %v1904, %v1906
    %v1915 = vsel %vm1907, %v1906, 0.0
    %v1916 = vlaneseq
    %v1917 = vshrl.u32 %v1916, 7
    %v1918 = vsub.s32 6, %v1917
    %v1919 = vrot.slane %v1707, %v1918
    %v1920 = vlaneseq
    %v1921 = vshrl.u32 %v1920, 7
    %v1922 = vsub.s32 6, %v1921
    %v1923 = vrot.slane %v1708, %v1922
    %v1924 = vlaneseq
    %v1925 = vshrl.u32 %v1924, 7
    %v1926 = vsub.s32 6, %v1925
    %v1927 = vrot.slane %v1709, %v1926
    %v1928 = vlaneseq
    %v1929 = vshrl.u32 %v1928, 7
    %v1930 = vsub.s32 6, %v1929
    %v1931 = vrot.slane %v1710, %v1930
    %v1932 = vmul.f32 %v1908, %v1919
    %v1933 = vmul.f32 %v1909, %v1923
    %v1934 = vmul.f32 %v1910, %v1927
    %v1935 = vmul.f32 %v1915, %v1931
    %1936 = vrot.lane.b32.xlu0 %v1200, 112
    %v1937 = vpop.permute.xlu0 %1936
    %1938 = vrot.lane.b32.xlu0 %v1202, 112
    %v1939 = vpop.permute.xlu0 %1938
    %1940 = vrot.lane.b32.xlu0 %v1282, 112
    %v1941 = vpop.permute.xlu0 %1940
    %1942 = vrot.lane.b32.xlu0 %v1284, 112
    %v1943 = vpop.permute.xlu0 %1942
    %vm1944 = vcmask 916480
    %v1945 = vsel %vm1944, %v1937, %v1939
    %v1946 = vsel %vm1944, %v1939, %v1941
    %v1947 = vsel %vm1944, %v1941, %v1943
    %v1952 = vsel %vm1944, %v1943, 0.0
    %v1953 = vlaneseq
    %v1954 = vshrl.u32 %v1953, 7
    %v1955 = vsub.s32 7, %v1954
    %v1956 = vrot.slane %v1707, %v1955
    %v1957 = vlaneseq
    %v1958 = vshrl.u32 %v1957, 7
    %v1959 = vsub.s32 7, %v1958
    %v1960 = vrot.slane %v1708, %v1959
    %v1961 = vlaneseq
    %v1962 = vshrl.u32 %v1961, 7
    %v1963 = vsub.s32 7, %v1962
    %v1964 = vrot.slane %v1709, %v1963
    %v1965 = vlaneseq
    %v1966 = vshrl.u32 %v1965, 7
    %v1967 = vsub.s32 7, %v1966
    %v1968 = vrot.slane %v1710, %v1967
    %v1969 = vmul.f32 %v1945, %v1956
    %v1970 = vmul.f32 %v1946, %v1960
    %v1971 = vmul.f32 %v1947, %v1964
    %v1972 = vmul.f32 %v1952, %v1968
    %1973 = vrot.lane.b32.xlu0 %v1200, 111
    %v1974 = vpop.permute.xlu0 %1973
    %1975 = vrot.lane.b32.xlu0 %v1202, 111
    %v1976 = vpop.permute.xlu0 %1975
    %1977 = vrot.lane.b32.xlu0 %v1282, 111
    %v1978 = vpop.permute.xlu0 %1977
    %1979 = vrot.lane.b32.xlu0 %v1284, 111
    %v1980 = vpop.permute.xlu0 %1979
    %vm1981 = vcmask 908288
    %v1982 = vsel %vm1981, %v1974, %v1976
    %v1983 = vsel %vm1981, %v1976, %v1978
    %v1984 = vsel %vm1981, %v1978, %v1980
    %v1989 = vsel %vm1981, %v1980, 0.0
    %v1990 = vunpack.c.l.bf16 %v1290
    %v1991 = vunpack.c.h.bf16 %v1290
    %v1992 = vunpack.c.l.bf16 %v1291
    %v1993 = vunpack.c.h.bf16 %v1291
    %v1994 = vlaneseq
    %v1995 = vshrl.u32 %v1994, 7
    %v1996 = vsub.s32 0, %v1995
    %v1997 = vrot.slane %v1990, %v1996
    %v1998 = vlaneseq
    %v1999 = vshrl.u32 %v1998, 7
    %v2000 = vsub.s32 0, %v1999
    %v2001 = vrot.slane %v1991, %v2000
    %v2002 = vlaneseq
    %v2003 = vshrl.u32 %v2002, 7
    %v2004 = vsub.s32 0, %v2003
    %v2005 = vrot.slane %v1992, %v2004
    %v2006 = vlaneseq
    %v2007 = vshrl.u32 %v2006, 7
    %v2008 = vsub.s32 0, %v2007
    %v2009 = vrot.slane %v1993, %v2008
    %v2010 = vmul.f32 %v1982, %v1997
    %v2011 = vmul.f32 %v1983, %v2001
    %v2012 = vmul.f32 %v1984, %v2005
    %v2013 = vmul.f32 %v1989, %v2009
    %v2018 = vrot.slane %v1764, 4
    %v2019 = vrot.slane %v1765, 4
    %v2020 = vrot.slane %v1766, 4
    %v2021 = vrot.slane %v1767, 4
    %v2030 = vrot.slane %v1838, 4
    %v2031 = vrot.slane %v1839, 4
    %v2032 = vrot.slane %v1840, 4
    %v2033 = vrot.slane %v1841, 4
    %v2042 = vrot.slane %v1895, 4
    %v2043 = vrot.slane %v1896, 4
    %v2044 = vrot.slane %v1897, 4
    %v2045 = vrot.slane %v1898, 4
    %v2054 = vrot.slane %v1969, 4
    %v2055 = vrot.slane %v1970, 4
    %v2056 = vrot.slane %v1971, 4
    %v2057 = vrot.slane %v1972, 4
    %v2062 = vsel %vm1633, %v1727, %v2018
    %v2063 = vsel %vm1633, %v1728, %v2019
    %v2064 = vsel %vm1633, %v1729, %v2020
    %v2065 = vsel %vm1633, %v1730, %v2021
    %v2066 = vsel %vm1633, %v1801, %v2030
    %v2067 = vsel %vm1633, %v1802, %v2031
    %v2068 = vsel %vm1633, %v1803, %v2032
    %v2069 = vsel %vm1633, %v1804, %v2033
    %v2070 = vsel %vm1633, %v1858, %v2042
    %v2071 = vsel %vm1633, %v1859, %v2043
    %v2072 = vsel %vm1633, %v1860, %v2044
    %v2073 = vsel %vm1633, %v1861, %v2045
    %v2074 = vsel %vm1633, %v1932, %v2054
    %v2075 = vsel %vm1633, %v1933, %v2055
    %v2076 = vsel %vm1633, %v1934, %v2056
    %v2077 = vsel %vm1633, %v1935, %v2057
    %v2078 = vsel %vm1633, %v2010, 1.0
    %v2079 = vsel %vm1633, %v2011, 1.0
    %v2080 = vsel %vm1633, %v2012, 1.0
    %v2081 = vsel %vm1633, %v2013, 1.0
    %v2082 = vpack.c.bf16 %v2066, %v2062
    %v2083 = vpack.c.bf16 %v2067, %v2063
    %v2084 = vpack.c.bf16 %v2068, %v2064
    %v2085 = vpack.c.bf16 %v2069, %v2065
    %v2086 = vpack.c.bf16 %v2074, %v2070
    %v2087 = vpack.c.bf16 %v2075, %v2071
    %v2088 = vpack.c.bf16 %v2076, %v2072
    %v2089 = vpack.c.bf16 %v2077, %v2073
    %v2090 = vpack.c.bf16 %v2078, %v2078
    %v2091 = vpack.c.bf16 %v2079, %v2079
    %v2092 = vpack.c.bf16 %v2080, %v2080
    %v2093 = vpack.c.bf16 %v2081, %v2081
    %vm2094 = vcmask 302080
    %v2096 = vsel %vm2094, %v1685, 0
    %v2099 = vand.u32 %v2090, %v1641
    %v2102 = vand.u32 %v2091, %v1641
    %v2105 = vand.u32 %v2092, %v1641
    %v2108 = vand.u32 %v2093, %v1641
    %2110 = vmatprep.subr.bf16.mxu0 %v2083
    %2111 = vmatpush1.bf16.msra.mxu0 %v2082
    %2112 = vmatprep.subr.bf16.mxu0 %v2087
    %2113 = vmatpush1.bf16.msra.mxu0 %v2086
    %2114 = vmatprep.subr.bf16.mxu0 %v2102
    %2115 = vmatpush1.bf16.msra.mxu0 %v2099
    %2116 = vmatprep.subr.bf16.mxu0 0
    %2117 = vmatpush1.bf16.msra.mxu0 0
    %2118 = vmatprep.subr.bf16.mxu0 0
    %2119 = vmatpush1.bf16.msra.mxu0 0
    %2120 = vmatprep.subr.bf16.mxu0 0
    %2121 = vmatpush1.bf16.msra.mxu0 0
    %2122 = vmatprep.subr.bf16.mxu0 0
    %2123 = vmatpush1.bf16.msra.mxu0 0
    %2124 = vmatprep.subr.bf16.mxu0 0
    %2125 = vmatpush1.bf16.msra.mxu0 0
    %2126 = vmatprep.subr.bf16.mxu0 0
    %2127 = vmatpush1.bf16.msra.mxu0 0
    %2128 = vmatprep.subr.bf16.mxu0 0
    %2129 = vmatpush1.bf16.msra.mxu0 0
    %2130 = vmatprep.subr.bf16.mxu0 0
    %2131 = vmatpush1.bf16.msra.mxu0 0
    %2132 = vmatprep.subr.bf16.mxu0 0
    %2133 = vmatpush1.bf16.msra.mxu0 0
    %2134 = vmatprep.subr.bf16.mxu0 0
    %2135 = vmatpush1.bf16.msra.mxu0 0
    %2136 = vmatprep.subr.bf16.mxu0 0
    %2137 = vmatpush1.bf16.msra.mxu0 0
    %2138 = vmatprep.subr.bf16.mxu0 0
    %2139 = vmatpush1.bf16.msra.mxu0 0
    %2140 = vmatprep.subr.bf16.mxu0 0
    %2141 = vmatpush1.bf16.msra.mxu0 0
    %2142 = vmatprep.mubr.bf16.mxu0 0
    %2143 = vmatmul.mubr.bf16.gmra.mrb[0].mxu0 %v2096
    %v2144 = vpop.f32.mrb[0].mxu0
    %v2145 = vadd.f32 0.0, %v2144
    %v2146 = vpop.f32.mrb[0].mxu0
    %v2147 = vadd.f32 0.0, %v2146
    %v2148 = vpop.f32.mrb[0].mxu0
    %v2149 = vpop.f32.mrb[0].mxu0
    %2150 = vdwg.mxu0
    %2151 = vmatprep.subr.bf16.mxu0 %v2085
    %2152 = vmatpush1.bf16.msra.mxu0 %v2084
    %2153 = vmatprep.subr.bf16.mxu0 %v2089
    %2154 = vmatpush1.bf16.msra.mxu0 %v2088
    %2155 = vmatprep.subr.bf16.mxu0 %v2108
    %2156 = vmatpush1.bf16.msra.mxu0 %v2105
    %2157 = vmatprep.subr.bf16.mxu0 0
    %2158 = vmatpush1.bf16.msra.mxu0 0
    %2159 = vmatprep.subr.bf16.mxu0 0
    %2160 = vmatpush1.bf16.msra.mxu0 0
    %2161 = vmatprep.subr.bf16.mxu0 0
    %2162 = vmatpush1.bf16.msra.mxu0 0
    %2163 = vmatprep.subr.bf16.mxu0 0
    %2164 = vmatpush1.bf16.msra.mxu0 0
    %2165 = vmatprep.subr.bf16.mxu0 0
    %2166 = vmatpush1.bf16.msra.mxu0 0
    %2167 = vmatprep.subr.bf16.mxu0 0
    %2168 = vmatpush1.bf16.msra.mxu0 0
    %2169 = vmatprep.subr.bf16.mxu0 0
    %2170 = vmatpush1.bf16.msra.mxu0 0
    %2171 = vmatprep.subr.bf16.mxu0 0
    %2172 = vmatpush1.bf16.msra.mxu0 0
    %2173 = vmatprep.subr.bf16.mxu0 0
    %2174 = vmatpush1.bf16.msra.mxu0 0
    %2175 = vmatprep.subr.bf16.mxu0 0
    %2176 = vmatpush1.bf16.msra.mxu0 0
    %2177 = vmatprep.subr.bf16.mxu0 0
    %2178 = vmatpush1.bf16.msra.mxu0 0
    %2179 = vmatprep.subr.bf16.mxu0 0
    %2180 = vmatpush1.bf16.msra.mxu0 0
    %2181 = vmatprep.subr.bf16.mxu0 0
    %2182 = vmatpush1.bf16.msra.mxu0 0
    %2183 = vmatprep.mubr.bf16.mxu0 0
    %2184 = vmatmul.mubr.bf16.gmra.mrb[0].mxu0 %v2096
    %v2185 = vpop.f32.mrb[0].mxu0
    %v2186 = vadd.f32 0.0, %v2185
    %v2187 = vpop.f32.mrb[0].mxu0
    %v2188 = vadd.f32 0.0, %v2187
    %v2189 = vpop.f32.mrb[0].mxu0
    %v2190 = vpop.f32.mrb[0].mxu0
    %2191 = vdwg.mxu0
    %vm2192 = vcmp.ge.f32.partialorder %v2145, 0.0
    %vm2193 = vcmp.ge.f32.partialorder %v2147, 0.0
    %vm2194 = vcmp.ge.f32.partialorder %v2186, 0.0
    %vm2195 = vcmp.ge.f32.partialorder %v2188, 0.0
    %v2196 = vmul.f32 %v2145, 0.2
    %v2197 = vmul.f32 %v2147, 0.2
    %v2198 = vmul.f32 %v2186, 0.2
    %v2199 = vmul.f32 %v2188, 0.2
    %v2200 = vsel %vm2192, %v2145, %v2196
    %v2201 = vsel %vm2193, %v2147, %v2197
    %v2202 = vsel %vm2194, %v2186, %v2198
    %v2203 = vsel %vm2195, %v2188, %v2199
    %v2204 = vld [vmem:[%s4 + $0x10] sm:$0xf]
    %2209 = vrot.lane.b32.xlu0 %v2200, 17
    %v2210 = vpop.permute.xlu0 %2209
    %2211 = vrot.lane.b32.xlu0 %v2201, 17
    %v2212 = vpop.permute.xlu0 %2211
    %2213 = vrot.lane.b32.xlu0 %v2202, 17
    %v2214 = vpop.permute.xlu0 %2213
    %2215 = vrot.lane.b32.xlu0 %v2203, 17
    %v2216 = vpop.permute.xlu0 %2215
    %v2217 = vsel %vm1698, %v2210, %v2212
    %v2218 = vsel %vm1698, %v2212, %v2214
    %v2219 = vsel %vm1698, %v2214, %v2216
    %v2224 = vsel %vm1698, 0.0, %v2210
    %v2225 = vmul.f32 %v2224, %v1714
    %v2226 = vmul.f32 %v2217, %v1718
    %v2227 = vmul.f32 %v2218, %v1722
    %v2228 = vmul.f32 %v2219, %v1726
    %2229 = vrot.lane.b32.xlu0 %v2200, 16
    %v2230 = vpop.permute.xlu0 %2229
    %2231 = vrot.lane.b32.xlu0 %v2201, 16
    %v2232 = vpop.permute.xlu0 %2231
    %2233 = vrot.lane.b32.xlu0 %v2202, 16
    %v2234 = vpop.permute.xlu0 %2233
    %2235 = vrot.lane.b32.xlu0 %v2203, 16
    %v2236 = vpop.permute.xlu0 %2235
    %v2237 = vsel %vm1739, %v2230, %v2232
    %v2238 = vsel %vm1739, %v2232, %v2234
    %v2239 = vsel %vm1739, %v2234, %v2236
    %v2244 = vsel %vm1739, 0.0, %v2230
    %v2245 = vmul.f32 %v2244, %v1751
    %v2246 = vmul.f32 %v2237, %v1755
    %v2247 = vmul.f32 %v2238, %v1759
    %v2248 = vmul.f32 %v2239, %v1763
    %2249 = vrot.lane.b32.xlu0 %v2200, 15
    %v2250 = vpop.permute.xlu0 %2249
    %2251 = vrot.lane.b32.xlu0 %v2201, 15
    %v2252 = vpop.permute.xlu0 %2251
    %2253 = vrot.lane.b32.xlu0 %v2202, 15
    %v2254 = vpop.permute.xlu0 %2253
    %2255 = vrot.lane.b32.xlu0 %v2203, 15
    %v2256 = vpop.permute.xlu0 %2255
    %v2257 = vsel %vm1776, %v2250, %v2252
    %v2258 = vsel %vm1776, %v2252, %v2254
    %v2259 = vsel %vm1776, %v2254, %v2256
    %v2264 = vsel %vm1776, 0.0, %v2250
    %v2265 = vmul.f32 %v2264, %v1788
    %v2266 = vmul.f32 %v2257, %v1792
    %v2267 = vmul.f32 %v2258, %v1796
    %v2268 = vmul.f32 %v2259, %v1800
    %2269 = vrot.lane.b32.xlu0 %v2200, 1
    %v2270 = vpop.permute.xlu0 %2269
    %2271 = vrot.lane.b32.xlu0 %v2201, 1
    %v2272 = vpop.permute.xlu0 %2271
    %2273 = vrot.lane.b32.xlu0 %v2202, 1
    %v2274 = vpop.permute.xlu0 %2273
    %2275 = vrot.lane.b32.xlu0 %v2203, 1
    %v2276 = vpop.permute.xlu0 %2275
    %v2277 = vsel %vm1813, %v2270, %v2272
    %v2278 = vsel %vm1813, %v2272, %v2274
    %v2279 = vsel %vm1813, %v2274, %v2276
    %v2284 = vsel %vm1813, 0.0, %v2270
    %v2285 = vmul.f32 %v2284, %v1825
    %v2286 = vmul.f32 %v2277, %v1829
    %v2287 = vmul.f32 %v2278, %v1833
    %v2288 = vmul.f32 %v2279, %v1837
    %v2289 = vmul.f32 %v2200, %v1845
    %v2290 = vmul.f32 %v2201, %v1849
    %v2291 = vmul.f32 %v2202, %v1853
    %v2292 = vmul.f32 %v2203, %v1857
    %2293 = vrot.lane.b32.xlu0 %v2200, 127
    %v2294 = vpop.permute.xlu0 %2293
    %2295 = vrot.lane.b32.xlu0 %v2201, 127
    %v2296 = vpop.permute.xlu0 %2295
    %2297 = vrot.lane.b32.xlu0 %v2202, 127
    %v2298 = vpop.permute.xlu0 %2297
    %2299 = vrot.lane.b32.xlu0 %v2203, 127
    %v2300 = vpop.permute.xlu0 %2299
    %v2301 = vsel %vm1870, %v2294, %v2296
    %v2302 = vsel %vm1870, %v2296, %v2298
    %v2303 = vsel %vm1870, %v2298, %v2300
    %v2308 = vsel %vm1870, %v2300, 0.0
    %v2309 = vmul.f32 %v2301, %v1882
    %v2310 = vmul.f32 %v2302, %v1886
    %v2311 = vmul.f32 %v2303, %v1890
    %v2312 = vmul.f32 %v2308, %v1894
    %2313 = vrot.lane.b32.xlu0 %v2200, 113
    %v2314 = vpop.permute.xlu0 %2313
    %2315 = vrot.lane.b32.xlu0 %v2201, 113
    %v2316 = vpop.permute.xlu0 %2315
    %2317 = vrot.lane.b32.xlu0 %v2202, 113
    %v2318 = vpop.permute.xlu0 %2317
    %2319 = vrot.lane.b32.xlu0 %v2203, 113
    %v2320 = vpop.permute.xlu0 %2319
    %v2321 = vsel %vm1907, %v2314, %v2316
    %v2322 = vsel %vm1907, %v2316, %v2318
    %v2323 = vsel %vm1907, %v2318, %v2320
    %v2328 = vsel %vm1907, %v2320, 0.0
    %v2329 = vmul.f32 %v2321, %v1919
    %v2330 = vmul.f32 %v2322, %v1923
    %v2331 = vmul.f32 %v2323, %v1927
    %v2332 = vmul.f32 %v2328, %v1931
    %2333 = vrot.lane.b32.xlu0 %v2200, 112
    %v2334 = vpop.permute.xlu0 %2333
    %2335 = vrot.lane.b32.xlu0 %v2201, 112
    %v2336 = vpop.permute.xlu0 %2335
    %2337 = vrot.lane.b32.xlu0 %v2202, 112
    %v2338 = vpop.permute.xlu0 %2337
    %2339 = vrot.lane.b32.xlu0 %v2203, 112
    %v2340 = vpop.permute.xlu0 %2339
    %v2341 = vsel %vm1944, %v2334, %v2336
    %v2342 = vsel %vm1944, %v2336, %v2338
    %v2343 = vsel %vm1944, %v2338, %v2340
    %v2348 = vsel %vm1944, %v2340, 0.0
    %v2349 = vmul.f32 %v2341, %v1956
    %v2350 = vmul.f32 %v2342, %v1960
    %v2351 = vmul.f32 %v2343, %v1964
    %v2352 = vmul.f32 %v2348, %v1968
    %2353 = vrot.lane.b32.xlu0 %v2200, 111
    %v2354 = vpop.permute.xlu0 %2353
    %2355 = vrot.lane.b32.xlu0 %v2201, 111
    %v2356 = vpop.permute.xlu0 %2355
    %2357 = vrot.lane.b32.xlu0 %v2202, 111
    %v2358 = vpop.permute.xlu0 %2357
    %2359 = vrot.lane.b32.xlu0 %v2203, 111
    %v2360 = vpop.permute.xlu0 %2359
    %v2361 = vsel %vm1981, %v2354, %v2356
    %v2362 = vsel %vm1981, %v2356, %v2358
    %v2363 = vsel %vm1981, %v2358, %v2360
    %v2368 = vsel %vm1981, %v2360, 0.0
    %v2369 = vmul.f32 %v2361, %v1997
    %v2370 = vmul.f32 %v2362, %v2001
    %v2371 = vmul.f32 %v2363, %v2005
    %v2372 = vmul.f32 %v2368, %v2009
    %v2377 = vrot.slane %v2245, 4
    %v2378 = vrot.slane %v2246, 4
    %v2379 = vrot.slane %v2247, 4
    %v2380 = vrot.slane %v2248, 4
    %v2389 = vrot.slane %v2285, 4
    %v2390 = vrot.slane %v2286, 4
    %v2391 = vrot.slane %v2287, 4
    %v2392 = vrot.slane %v2288, 4
    %v2401 = vrot.slane %v2309, 4
    %v2402 = vrot.slane %v2310, 4
    %v2403 = vrot.slane %v2311, 4
    %v2404 = vrot.slane %v2312, 4
    %v2413 = vrot.slane %v2349, 4
    %v2414 = vrot.slane %v2350, 4
    %v2415 = vrot.slane %v2351, 4
    %v2416 = vrot.slane %v2352, 4
    %v2421 = vsel %vm1633, %v2225, %v2377
    %v2422 = vsel %vm1633, %v2226, %v2378
    %v2423 = vsel %vm1633, %v2227, %v2379
    %v2424 = vsel %vm1633, %v2228, %v2380
    %v2425 = vsel %vm1633, %v2265, %v2389
    %v2426 = vsel %vm1633, %v2266, %v2390
    %v2427 = vsel %vm1633, %v2267, %v2391
    %v2428 = vsel %vm1633, %v2268, %v2392
    %v2429 = vsel %vm1633, %v2289, %v2401
    %v2430 = vsel %vm1633, %v2290, %v2402
    %v2431 = vsel %vm1633, %v2291, %v2403
    %v2432 = vsel %vm1633, %v2292, %v2404
    %v2433 = vsel %vm1633, %v2329, %v2413
    %v2434 = vsel %vm1633, %v2330, %v2414
    %v2435 = vsel %vm1633, %v2331, %v2415
    %v2436 = vsel %vm1633, %v2332, %v2416
    %v2437 = vsel %vm1633, %v2369, 1.0
    %v2438 = vsel %vm1633, %v2370, 1.0
    %v2439 = vsel %vm1633, %v2371, 1.0
    %v2440 = vsel %vm1633, %v2372, 1.0
    %v2441 = vpack.c.bf16 %v2425, %v2421
    %v2442 = vpack.c.bf16 %v2426, %v2422
    %v2443 = vpack.c.bf16 %v2427, %v2423
    %v2444 = vpack.c.bf16 %v2428, %v2424
    %v2445 = vpack.c.bf16 %v2433, %v2429
    %v2446 = vpack.c.bf16 %v2434, %v2430
    %v2447 = vpack.c.bf16 %v2435, %v2431
    %v2448 = vpack.c.bf16 %v2436, %v2432
    %v2449 = vpack.c.bf16 %v2437, %v2437
    %v2450 = vpack.c.bf16 %v2438, %v2438
    %v2451 = vpack.c.bf16 %v2439, %v2439
    %v2452 = vpack.c.bf16 %v2440, %v2440
    %v2454 = vsel %vm2094, %v2204, 0
    %v2457 = vand.u32 %v2449, %v1641
    %v2460 = vand.u32 %v2450, %v1641
    %v2463 = vand.u32 %v2451, %v1641
    %v2466 = vand.u32 %v2452, %v1641
    %2468 = vmatprep.subr.bf16.mxu0 %v2442
    %2469 = vmatpush1.bf16.msra.mxu0 %v2441
    %2470 = vmatprep.subr.bf16.mxu0 %v2446
    %2471 = vmatpush1.bf16.msra.mxu0 %v2445
    %2472 = vmatprep.subr.bf16.mxu0 %v2460
    %2473 = vmatpush1.bf16.msra.mxu0 %v2457
    %2474 = vmatprep.subr.bf16.mxu0 0
    %2475 = vmatpush1.bf16.msra.mxu0 0
    %2476 = vmatprep.subr.bf16.mxu0 0
    %2477 = vmatpush1.bf16.msra.mxu0 0
    %2478 = vmatprep.subr.bf16.mxu0 0
    %2479 = vmatpush1.bf16.msra.mxu0 0
    %2480 = vmatprep.subr.bf16.mxu0 0
    %2481 = vmatpush1.bf16.msra.mxu0 0
    %2482 = vmatprep.subr.bf16.mxu0 0
    %2483 = vmatpush1.bf16.msra.mxu0 0
    %2484 = vmatprep.subr.bf16.mxu0 0
    %2485 = vmatpush1.bf16.msra.mxu0 0
    %2486 = vmatprep.subr.bf16.mxu0 0
    %2487 = vmatpush1.bf16.msra.mxu0 0
    %2488 = vmatprep.subr.bf16.mxu0 0
    %2489 = vmatpush1.bf16.msra.mxu0 0
    %2490 = vmatprep.subr.bf16.mxu0 0
    %2491 = vmatpush1.bf16.msra.mxu0 0
    %2492 = vmatprep.subr.bf16.mxu0 0
    %2493 = vmatpush1.bf16.msra.mxu0 0
    %2494 = vmatprep.subr.bf16.mxu0 0
    %2495 = vmatpush1.bf16.msra.mxu0 0
    %2496 = vmatprep.subr.bf16.mxu0 0
    %2497 = vmatpush1.bf16.msra.mxu0 0
    %2498 = vmatprep.subr.bf16.mxu0 0
    %2499 = vmatpush1.bf16.msra.mxu0 0
    %2500 = vmatprep.mubr.bf16.mxu0 0
    %2501 = vmatmul.mubr.bf16.gmra.mrb[0].mxu0 %v2454
    %v2502 = vpop.f32.mrb[0].mxu0
    %v2503 = vadd.f32 0.0, %v2502
    %v2504 = vpop.f32.mrb[0].mxu0
    %v2505 = vadd.f32 0.0, %v2504
    %v2506 = vpop.f32.mrb[0].mxu0
    %v2507 = vpop.f32.mrb[0].mxu0
    %2508 = vdwg.mxu0
    %2509 = vmatprep.subr.bf16.mxu0 %v2444
    %2510 = vmatpush1.bf16.msra.mxu0 %v2443
    %2511 = vmatprep.subr.bf16.mxu0 %v2448
    %2512 = vmatpush1.bf16.msra.mxu0 %v2447
    %2513 = vmatprep.subr.bf16.mxu0 %v2466
    %2514 = vmatpush1.bf16.msra.mxu0 %v2463
    %2515 = vmatprep.subr.bf16.mxu0 0
    %2516 = vmatpush1.bf16.msra.mxu0 0
    %2517 = vmatprep.subr.bf16.mxu0 0
    %2518 = vmatpush1.bf16.msra.mxu0 0
    %2519 = vmatprep.subr.bf16.mxu0 0
    %2520 = vmatpush1.bf16.msra.mxu0 0
    %2521 = vmatprep.subr.bf16.mxu0 0
    %2522 = vmatpush1.bf16.msra.mxu0 0
    %2523 = vmatprep.subr.bf16.mxu0 0
    %2524 = vmatpush1.bf16.msra.mxu0 0
    %2525 = vmatprep.subr.bf16.mxu0 0
    %2526 = vmatpush1.bf16.msra.mxu0 0
    %2527 = vmatprep.subr.bf16.mxu0 0
    %2528 = vmatpush1.bf16.msra.mxu0 0
    %2529 = vmatprep.subr.bf16.mxu0 0
    %2530 = vmatpush1.bf16.msra.mxu0 0
    %2531 = vmatprep.subr.bf16.mxu0 0
    %2532 = vmatpush1.bf16.msra.mxu0 0
    %2533 = vmatprep.subr.bf16.mxu0 0
    %2534 = vmatpush1.bf16.msra.mxu0 0
    %2535 = vmatprep.subr.bf16.mxu0 0
    %2536 = vmatpush1.bf16.msra.mxu0 0
    %2537 = vmatprep.subr.bf16.mxu0 0
    %2538 = vmatpush1.bf16.msra.mxu0 0
    %2539 = vmatprep.subr.bf16.mxu0 0
    %2540 = vmatpush1.bf16.msra.mxu0 0
    %2541 = vmatprep.mubr.bf16.mxu0 0
    %2542 = vmatmul.mubr.bf16.gmra.mrb[0].mxu0 %v2454
    %v2543 = vpop.f32.mrb[0].mxu0
    %v2544 = vadd.f32 0.0, %v2543
    %v2545 = vpop.f32.mrb[0].mxu0
    %v2546 = vadd.f32 0.0, %v2545
    %v2547 = vpop.f32.mrb[0].mxu0
    %v2548 = vpop.f32.mrb[0].mxu0
    %2549 = vdwg.mxu0
    %vm2550 = vcmp.ge.f32.partialorder %v2503, 0.0
    %vm2551 = vcmp.ge.f32.partialorder %v2505, 0.0
    %vm2552 = vcmp.ge.f32.partialorder %v2544, 0.0
    %vm2553 = vcmp.ge.f32.partialorder %v2546, 0.0
    %v2554 = vmul.f32 %v2503, 0.2
    %v2555 = vmul.f32 %v2505, 0.2
    %v2556 = vmul.f32 %v2544, 0.2
    %v2557 = vmul.f32 %v2546, 0.2
    %v2558 = vsel %vm2550, %v2503, %v2554
    %v2559 = vsel %vm2551, %v2505, %v2555
    %v2560 = vsel %vm2552, %v2544, %v2556
    %v2561 = vsel %vm2553, %v2546, %v2557
    %v2562 = vpack.c.bf16 %v2558, %v2558
    %v2563 = vpack.c.bf16 %v2559, %v2559
    %v2564 = vpack.c.bf16 %v2560, %v2560
    %v2565 = vpack.c.bf16 %v2561, %v2561
    %2566 = vmatprep.subr.bf16.mxu0 0
    %2567 = vmatpush1.bf16.msra.mxu0 %v1489
    %2568 = vmatprep.subr.bf16.mxu0 0
    %2569 = vmatpush1.bf16.msra.mxu0 %v1490
    %2570 = vmatprep.subr.bf16.mxu0 0
    %2571 = vmatpush1.bf16.msra.mxu0 %v1491
    %2572 = vmatprep.subr.bf16.mxu0 0
    %2573 = vmatpush1.bf16.msra.mxu0 %v1492
    %2574 = vmatprep.subr.bf16.mxu0 0
    %2575 = vmatpush1.bf16.msra.mxu0 %v1493
    %2576 = vmatprep.subr.bf16.mxu0 0
    %2577 = vmatpush1.bf16.msra.mxu0 %v1494
    %2578 = vmatprep.subr.bf16.mxu0 0
    %2579 = vmatpush1.bf16.msra.mxu0 %v1495
    %2580 = vmatprep.subr.bf16.mxu0 0
    %2581 = vmatpush1.bf16.msra.mxu0 %v1496
    %2582 = vmatprep.subr.bf16.mxu0 0
    %2583 = vmatpush1.bf16.msra.mxu0 %v1497
    %2584 = vmatprep.subr.bf16.mxu0 0
    %2585 = vmatpush1.bf16.msra.mxu0 %v1498
    %2586 = vmatprep.subr.bf16.mxu0 0
    %2587 = vmatpush1.bf16.msra.mxu0 %v1499
    %2588 = vmatprep.subr.bf16.mxu0 0
    %2589 = vmatpush1.bf16.msra.mxu0 %v1500
    %2590 = vmatprep.subr.bf16.mxu0 0
    %2591 = vmatpush1.bf16.msra.mxu0 %v1501
    %2592 = vmatprep.subr.bf16.mxu0 0
    %2593 = vmatpush1.bf16.msra.mxu0 %v1502
    %2594 = vmatprep.subr.bf16.mxu0 0
    %2595 = vmatpush1.bf16.msra.mxu0 %v1503
    %2596 = vmatprep.subr.bf16.mxu0 0
    %2597 = vmatpush1.bf16.msra.mxu0 %v1504
    %2598 = vmatprep.mubr.bf16.mxu0 %v2563
    %2599 = vmatmul.mubr.bf16.gmra.mrb[0].mxu0 %v2562
    %v2600 = vpop.f32.mrb[0].mxu0
    %v2601 = vadd.f32 %v1680, %v2600
    %v2602 = vpop.f32.mrb[0].mxu0
    %v2603 = vpop.f32.mrb[0].mxu0
    %v2604 = vpop.f32.mrb[0].mxu0
    %2605 = vdwg.mxu0
    %2606 = vmatprep.subr.bf16.mxu0 0
    %2607 = vmatpush1.bf16.msra.mxu0 %v1505
    %2608 = vmatprep.subr.bf16.mxu0 0
    %2609 = vmatpush1.bf16.msra.mxu0 %v1506
    %2610 = vmatprep.subr.bf16.mxu0 0
    %2611 = vmatpush1.bf16.msra.mxu0 %v1507
    %2612 = vmatprep.subr.bf16.mxu0 0
    %2613 = vmatpush1.bf16.msra.mxu0 %v1508
    %2614 = vmatprep.subr.bf16.mxu0 0
    %2615 = vmatpush1.bf16.msra.mxu0 %v1509
    %2616 = vmatprep.subr.bf16.mxu0 0
    %2617 = vmatpush1.bf16.msra.mxu0 %v1510
    %2618 = vmatprep.subr.bf16.mxu0 0
    %2619 = vmatpush1.bf16.msra.mxu0 %v1511
    %2620 = vmatprep.subr.bf16.mxu0 0
    %2621 = vmatpush1.bf16.msra.mxu0 %v1512
    %2622 = vmatprep.subr.bf16.mxu0 0
    %2623 = vmatpush1.bf16.msra.mxu0 %v1513
    %2624 = vmatprep.subr.bf16.mxu0 0
    %2625 = vmatpush1.bf16.msra.mxu0 %v1514
    %2626 = vmatprep.subr.bf16.mxu0 0
    %2627 = vmatpush1.bf16.msra.mxu0 %v1515
    %2628 = vmatprep.subr.bf16.mxu0 0
    %2629 = vmatpush1.bf16.msra.mxu0 %v1516
    %2630 = vmatprep.subr.bf16.mxu0 0
    %2631 = vmatpush1.bf16.msra.mxu0 %v1517
    %2632 = vmatprep.subr.bf16.mxu0 0
    %2633 = vmatpush1.bf16.msra.mxu0 %v1518
    %2634 = vmatprep.subr.bf16.mxu0 0
    %2635 = vmatpush1.bf16.msra.mxu0 %v1519
    %2636 = vmatprep.subr.bf16.mxu0 0
    %2637 = vmatpush1.bf16.msra.mxu0 %v1520
    %2638 = vmatprep.mubr.bf16.mxu0 %v2565
    %2639 = vmatmul.mubr.bf16.gmra.mrb[0].mxu0 %v2564
    %v2640 = vpop.f32.mrb[0].mxu0
    %v2641 = vadd.f32 %v2601, %v2640
    %v2642 = vpop.f32.mrb[0].mxu0
    %v2643 = vpop.f32.mrb[0].mxu0
    %v2644 = vpop.f32.mrb[0].mxu0
    %2645 = vdwg.mxu0
    %v2646 = vmul.f32 %v2641, 0.70710677
    %v2647 = vld [vmem:[%s2 + $0x10] sm:$0xf]
    %v2648 = vld [vmem:[%s2 + $0x24] sm:$0x1]
    %v2649 = vld [vmem:[%s3 + $0x100] sm:$0xf]
    %v2650 = vld [vmem:[%s3 + $0x104] sm:$0xf]
    %v2651 = vld [vmem:[%s3 + $0x108] sm:$0xf]
    %v2652 = vld [vmem:[%s3 + $0x10c] sm:$0xf]
    %v2653 = vld [vmem:[%s3 + $0x110] sm:$0xf]
    %v2654 = vld [vmem:[%s3 + $0x114] sm:$0xf]
    %v2655 = vld [vmem:[%s3 + $0x118] sm:$0xf]
    %v2656 = vld [vmem:[%s3 + $0x11c] sm:$0xf]
    %v2657 = vld [vmem:[%s3 + $0x120] sm:$0xf]
    %v2658 = vld [vmem:[%s3 + $0x124] sm:$0xf]
    %v2659 = vld [vmem:[%s3 + $0x128] sm:$0xf]
    %v2660 = vld [vmem:[%s3 + $0x12c] sm:$0xf]
    %v2661 = vld [vmem:[%s3 + $0x130] sm:$0xf]
    %v2662 = vld [vmem:[%s3 + $0x134] sm:$0xf]
    %v2663 = vld [vmem:[%s3 + $0x138] sm:$0xf]
    %v2664 = vld [vmem:[%s3 + $0x13c] sm:$0xf]
    %v2665 = vld [vmem:[%s4 + $0x20] sm:$0xf]
    %v2666 = vpack.c.bf16 %v2646, %v2646
    %v2683 = vunpack.c.l.b16 %v2649
    %v2684 = vunpack.c.l.b16 %v2650
    %v2685 = vunpack.c.l.b16 %v2651
    %v2686 = vunpack.c.l.b16 %v2652
    %v2687 = vunpack.c.l.b16 %v2653
    %v2688 = vunpack.c.l.b16 %v2654
    %v2689 = vunpack.c.l.b16 %v2655
    %v2690 = vunpack.c.l.b16 %v2656
    %v2691 = vunpack.c.l.b16 %v2657
    %v2692 = vunpack.c.l.b16 %v2658
    %v2693 = vunpack.c.l.b16 %v2659
    %v2694 = vunpack.c.l.b16 %v2660
    %v2695 = vunpack.c.l.b16 %v2661
    %v2696 = vunpack.c.l.b16 %v2662
    %v2697 = vunpack.c.l.b16 %v2663
    %v2698 = vunpack.c.l.b16 %v2664
    %v2699 = vpack.c.b16 %v2684, %v2683
    %v2700 = vpack.c.b16 %v2686, %v2685
    %v2701 = vpack.c.b16 %v2688, %v2687
    %v2702 = vpack.c.b16 %v2690, %v2689
    %v2703 = vpack.c.b16 %v2692, %v2691
    %v2704 = vpack.c.b16 %v2694, %v2693
    %v2705 = vpack.c.b16 %v2696, %v2695
    %v2706 = vpack.c.b16 %v2698, %v2697
    %2715 = vmatprep.subr.bf16.mxu0 0
    %2716 = vmatpush1.bf16.msra.mxu0 %v2699
    %2717 = vmatprep.subr.bf16.mxu0 0
    %2718 = vmatpush1.bf16.msra.mxu0 %v2700
    %2719 = vmatprep.subr.bf16.mxu0 0
    %2720 = vmatpush1.bf16.msra.mxu0 %v2701
    %2721 = vmatprep.subr.bf16.mxu0 0
    %2722 = vmatpush1.bf16.msra.mxu0 %v2702
    %2723 = vmatprep.subr.bf16.mxu0 0
    %2724 = vmatpush1.bf16.msra.mxu0 %v2703
    %2725 = vmatprep.subr.bf16.mxu0 0
    %2726 = vmatpush1.bf16.msra.mxu0 %v2704
    %2727 = vmatprep.subr.bf16.mxu0 0
    %2728 = vmatpush1.bf16.msra.mxu0 %v2705
    %2729 = vmatprep.subr.bf16.mxu0 0
    %2730 = vmatpush1.bf16.msra.mxu0 %v2706
    %2731 = vmatprep.subr.bf16.mxu0 0
    %2732 = vmatpush1.bf16.msra.mxu0 0
    %2733 = vmatprep.subr.bf16.mxu0 0
    %2734 = vmatpush1.bf16.msra.mxu0 0
    %2735 = vmatprep.subr.bf16.mxu0 0
    %2736 = vmatpush1.bf16.msra.mxu0 0
    %2737 = vmatprep.subr.bf16.mxu0 0
    %2738 = vmatpush1.bf16.msra.mxu0 0
    %2739 = vmatprep.subr.bf16.mxu0 0
    %2740 = vmatpush1.bf16.msra.mxu0 0
    %2741 = vmatprep.subr.bf16.mxu0 0
    %2742 = vmatpush1.bf16.msra.mxu0 0
    %2743 = vmatprep.subr.bf16.mxu0 0
    %2744 = vmatpush1.bf16.msra.mxu0 0
    %2745 = vmatprep.subr.bf16.mxu0 0
    %2746 = vmatpush1.bf16.msra.mxu0 0
    %2747 = vmatprep.mubr.bf16.mxu0 0
    %2748 = vmatmul.mubr.bf16.gmra.mrb[0].mxu0 %v2666
    %v2749 = vpop.f32.mrb[0].mxu0
    %v2750 = vadd.f32 0.0, %v2749
    %v2751 = vpop.f32.mrb[0].mxu0
    %v2752 = vpop.f32.mrb[0].mxu0
    %v2753 = vpop.f32.mrb[0].mxu0
    %2754 = vdwg.mxu0
    %v2755 = vpack.c.bf16 1.0, %v2750
    %vm2756 = vcmask 72704
    %v2758 = vsel %vm2756, %v2665, 0
    %vm2760 = vcmask 1044480
    %v2761 = vsel %vm1633, 4294967295, 65535
    %v2762 = vsel %vm2760, %v2761, 0
    %v2764 = vand.u32 %v2755, %v2762
    %2766 = vmatprep.subr.bf16.mxu0 0
    %2767 = vmatpush1.bf16.msra.mxu0 %v2764
    %2768 = vmatprep.subr.bf16.mxu0 0
    %2769 = vmatpush1.bf16.msra.mxu0 0
    %2770 = vmatprep.subr.bf16.mxu0 0
    %2771 = vmatpush1.bf16.msra.mxu0 0
    %2772 = vmatprep.subr.bf16.mxu0 0
    %2773 = vmatpush1.bf16.msra.mxu0 0
    %2774 = vmatprep.subr.bf16.mxu0 0
    %2775 = vmatpush1.bf16.msra.mxu0 0
    %2776 = vmatprep.subr.bf16.mxu0 0
    %2777 = vmatpush1.bf16.msra.mxu0 0
    %2778 = vmatprep.subr.bf16.mxu0 0
    %2779 = vmatpush1.bf16.msra.mxu0 0
    %2780 = vmatprep.subr.bf16.mxu0 0
    %2781 = vmatpush1.bf16.msra.mxu0 0
    %2782 = vmatprep.subr.bf16.mxu0 0
    %2783 = vmatpush1.bf16.msra.mxu0 0
    %2784 = vmatprep.subr.bf16.mxu0 0
    %2785 = vmatpush1.bf16.msra.mxu0 0
    %2786 = vmatprep.subr.bf16.mxu0 0
    %2787 = vmatpush1.bf16.msra.mxu0 0
    %2788 = vmatprep.subr.bf16.mxu0 0
    %2789 = vmatpush1.bf16.msra.mxu0 0
    %2790 = vmatprep.subr.bf16.mxu0 0
    %2791 = vmatpush1.bf16.msra.mxu0 0
    %2792 = vmatprep.subr.bf16.mxu0 0
    %2793 = vmatpush1.bf16.msra.mxu0 0
    %2794 = vmatprep.subr.bf16.mxu0 0
    %2795 = vmatpush1.bf16.msra.mxu0 0
    %2796 = vmatprep.subr.bf16.mxu0 0
    %2797 = vmatpush1.bf16.msra.mxu0 0
    %2798 = vmatprep.mubr.bf16.mxu0 0
    %2799 = vmatmul.mubr.bf16.gmra.mrb[0].mxu0 %v2758
    %v2800 = vpop.f32.mrb[0].mxu0
    %v2801 = vadd.f32 0.0, %v2800
    %v2802 = vpop.f32.mrb[0].mxu0
    %v2803 = vpop.f32.mrb[0].mxu0
    %v2804 = vpop.f32.mrb[0].mxu0
    %2805 = vdwg.mxu0
    %v2806 = vld [vmem:[%s4 + $0x18] sm:$0xf]
    %2808 = vrot.lane.b32.xlu0 %v2646, 9
    %v2809 = vpop.permute.xlu0 %2808
    %v2811 = vsel %vm2756, 0.0, %v2809
    %v2812 = vunpack.c.l.bf16 %v2647
    %v2813 = vlaneseq
    %v2814 = vshrl.u32 %v2813, 7
    %v2815 = vsub.s32 0, %v2814
    %v2816 = vrot.slane %v2812, %v2815
    %v2817 = vmul.f32 %v2811, %v2816
    %2818 = vrot.lane.b32.xlu0 %v2646, 8
    %v2819 = vpop.permute.xlu0 %2818
    %vm2821 = vcmask 64512
    %v2822 = vsel %vm2821, 0.0, %v2819
    %v2823 = vlaneseq
    %v2824 = vshrl.u32 %v2823, 7
    %v2825 = vsub.s32 1, %v2824
    %v2826 = vrot.slane %v2812, %v2825
    %v2827 = vmul.f32 %v2822, %v2826
    %2828 = vrot.lane.b32.xlu0 %v2646, 7
    %v2829 = vpop.permute.xlu0 %2828
    %vm2831 = vcmask 56320
    %v2832 = vsel %vm2831, 0.0, %v2829
    %v2833 = vlaneseq
    %v2834 = vshrl.u32 %v2833, 7
    %v2835 = vsub.s32 2, %v2834
    %v2836 = vrot.slane %v2812, %v2835
    %v2837 = vmul.f32 %v2832, %v2836
    %2838 = vrot.lane.b32.xlu0 %v2646, 1
    %v2839 = vpop.permute.xlu0 %2838
    %v2841 = vsel %vm1813, 0.0, %v2839
    %v2842 = vlaneseq
    %v2843 = vshrl.u32 %v2842, 7
    %v2844 = vsub.s32 3, %v2843
    %v2845 = vrot.slane %v2812, %v2844
    %v2846 = vmul.f32 %v2841, %v2845
    %v2847 = vlaneseq
    %v2848 = vshrl.u32 %v2847, 7
    %v2849 = vsub.s32 4, %v2848
    %v2850 = vrot.slane %v2812, %v2849
    %v2851 = vmul.f32 %v2646, %v2850
    %2852 = vrot.lane.b32.xlu0 %v2646, 127
    %v2853 = vpop.permute.xlu0 %2852
    %v2855 = vsel %vm1870, %v2853, 0.0
    %v2856 = vlaneseq
    %v2857 = vshrl.u32 %v2856, 7
    %v2858 = vsub.s32 5, %v2857
    %v2859 = vrot.slane %v2812, %v2858
    %v2860 = vmul.f32 %v2855, %v2859
    %2861 = vrot.lane.b32.xlu0 %v2646, 121
    %v2862 = vpop.permute.xlu0 %2861
    %vm2864 = vcmask 990208
    %v2865 = vsel %vm2864, %v2862, 0.0
    %v2866 = vlaneseq
    %v2867 = vshrl.u32 %v2866, 7
    %v2868 = vsub.s32 6, %v2867
    %v2869 = vrot.slane %v2812, %v2868
    %v2870 = vmul.f32 %v2865, %v2869
    %2871 = vrot.lane.b32.xlu0 %v2646, 120
    %v2872 = vpop.permute.xlu0 %2871
    %vm2874 = vcmask 982016
    %v2875 = vsel %vm2874, %v2872, 0.0
    %v2876 = vlaneseq
    %v2877 = vshrl.u32 %v2876, 7
    %v2878 = vsub.s32 7, %v2877
    %v2879 = vrot.slane %v2812, %v2878
    %v2880 = vmul.f32 %v2875, %v2879
    %2881 = vrot.lane.b32.xlu0 %v2646, 119
    %v2882 = vpop.permute.xlu0 %2881
    %vm2884 = vcmask 973824
    %v2885 = vsel %vm2884, %v2882, 0.0
    %v2886 = vunpack.c.l.bf16 %v2648
    %v2887 = vlaneseq
    %v2888 = vshrl.u32 %v2887, 7
    %v2889 = vsub.s32 0, %v2888
    %v2890 = vrot.slane %v2886, %v2889
    %v2891 = vmul.f32 %v2885, %v2890
    %v2892 = vpack.c.bf16 %v2827, %v2817
    %v2893 = vpack.c.bf16 %v2846, %v2837
    %v2894 = vpack.c.bf16 %v2860, %v2851
    %v2895 = vpack.c.bf16 %v2880, %v2870
    %v2896 = vpack.c.bf16 1.0, %v2891
    %vm2897 = vcmask 596992
    %v2899 = vsel %vm2897, %v2806, 0
    %v2902 = vand.u32 %v2896, %v2762
    %2904 = vmatprep.subr.bf16.mxu0 0
    %2905 = vmatpush1.bf16.msra.mxu0 %v2892
    %2906 = vmatprep.subr.bf16.mxu0 0
    %2907 = vmatpush1.bf16.msra.mxu0 %v2893
    %2908 = vmatprep.subr.bf16.mxu0 0
    %2909 = vmatpush1.bf16.msra.mxu0 %v2894
    %2910 = vmatprep.subr.bf16.mxu0 0
    %2911 = vmatpush1.bf16.msra.mxu0 %v2895
    %2912 = vmatprep.subr.bf16.mxu0 0
    %2913 = vmatpush1.bf16.msra.mxu0 %v2902
    %2914 = vmatprep.subr.bf16.mxu0 0
    %2915 = vmatpush1.bf16.msra.mxu0 0
    %2916 = vmatprep.subr.bf16.mxu0 0
    %2917 = vmatpush1.bf16.msra.mxu0 0
    %2918 = vmatprep.subr.bf16.mxu0 0
    %2919 = vmatpush1.bf16.msra.mxu0 0
    %2920 = vmatprep.subr.bf16.mxu0 0
    %2921 = vmatpush1.bf16.msra.mxu0 0
    %2922 = vmatprep.subr.bf16.mxu0 0
    %2923 = vmatpush1.bf16.msra.mxu0 0
    %2924 = vmatprep.subr.bf16.mxu0 0
    %2925 = vmatpush1.bf16.msra.mxu0 0
    %2926 = vmatprep.subr.bf16.mxu0 0
    %2927 = vmatpush1.bf16.msra.mxu0 0
    %2928 = vmatprep.subr.bf16.mxu0 0
    %2929 = vmatpush1.bf16.msra.mxu0 0
    %2930 = vmatprep.subr.bf16.mxu0 0
    %2931 = vmatpush1.bf16.msra.mxu0 0
    %2932 = vmatprep.subr.bf16.mxu0 0
    %2933 = vmatpush1.bf16.msra.mxu0 0
    %2934 = vmatprep.subr.bf16.mxu0 0
    %2935 = vmatpush1.bf16.msra.mxu0 0
    %2936 = vmatprep.mubr.bf16.mxu0 0
    %2937 = vmatmul.mubr.bf16.gmra.mrb[0].mxu0 %v2899
    %v2938 = vpop.f32.mrb[0].mxu0
    %v2939 = vadd.f32 0.0, %v2938
    %v2940 = vpop.f32.mrb[0].mxu0
    %v2941 = vpop.f32.mrb[0].mxu0
    %v2942 = vpop.f32.mrb[0].mxu0
    %2943 = vdwg.mxu0
    %vm2944 = vcmp.ge.f32.partialorder %v2939, 0.0
    %v2945 = vmul.f32 %v2939, 0.2
    %v2946 = vsel %vm2944, %v2939, %v2945
    %v2947 = vld [vmem:[%s4 + $0x1c] sm:$0xf]
    %2949 = vrot.lane.b32.xlu0 %v2946, 9
    %v2950 = vpop.permute.xlu0 %2949
    %v2952 = vsel %vm2756, 0.0, %v2950
    %v2953 = vmul.f32 %v2952, %v2816
    %2954 = vrot.lane.b32.xlu0 %v2946, 8
    %v2955 = vpop.permute.xlu0 %2954
    %v2957 = vsel %vm2821, 0.0, %v2955
    %v2958 = vmul.f32 %v2957, %v2826
    %2959 = vrot.lane.b32.xlu0 %v2946, 7
    %v2960 = vpop.permute.xlu0 %2959
    %v2962 = vsel %vm2831, 0.0, %v2960
    %v2963 = vmul.f32 %v2962, %v2836
    %2964 = vrot.lane.b32.xlu0 %v2946, 1
    %v2965 = vpop.permute.xlu0 %2964
    %v2967 = vsel %vm1813, 0.0, %v2965
    %v2968 = vmul.f32 %v2967, %v2845
    %v2969 = vmul.f32 %v2946, %v2850
    %2970 = vrot.lane.b32.xlu0 %v2946, 127
    %v2971 = vpop.permute.xlu0 %2970
    %v2973 = vsel %vm1870, %v2971, 0.0
    %v2974 = vmul.f32 %v2973, %v2859
    %2975 = vrot.lane.b32.xlu0 %v2946, 121
    %v2976 = vpop.permute.xlu0 %2975
    %v2978 = vsel %vm2864, %v2976, 0.0
    %v2979 = vmul.f32 %v2978, %v2869
    %2980 = vrot.lane.b32.xlu0 %v2946, 120
    %v2981 = vpop.permute.xlu0 %2980
    %v2983 = vsel %vm2874, %v2981, 0.0
    %v2984 = vmul.f32 %v2983, %v2879
    %2985 = vrot.lane.b32.xlu0 %v2946, 119
    %v2986 = vpop.permute.xlu0 %2985
    %v2988 = vsel %vm2884, %v2986, 0.0
    %v2989 = vmul.f32 %v2988, %v2890
    %v2990 = vpack.c.bf16 %v2958, %v2953
    %v2991 = vpack.c.bf16 %v2968, %v2963
    %v2992 = vpack.c.bf16 %v2974, %v2969
    %v2993 = vpack.c.bf16 %v2984, %v2979
    %v2994 = vpack.c.bf16 1.0, %v2989
    %v2996 = vsel %vm2897, %v2947, 0
    %v2999 = vand.u32 %v2994, %v2762
    %3001 = vmatprep.subr.bf16.mxu0 0
    %3002 = vmatpush1.bf16.msra.mxu0 %v2990
    %3003 = vmatprep.subr.bf16.mxu0 0
    %3004 = vmatpush1.bf16.msra.mxu0 %v2991
    %3005 = vmatprep.subr.bf16.mxu0 0
    %3006 = vmatpush1.bf16.msra.mxu0 %v2992
    %3007 = vmatprep.subr.bf16.mxu0 0
    %3008 = vmatpush1.bf16.msra.mxu0 %v2993
    %3009 = vmatprep.subr.bf16.mxu0 0
    %3010 = vmatpush1.bf16.msra.mxu0 %v2999
    %3011 = vmatprep.subr.bf16.mxu0 0
    %3012 = vmatpush1.bf16.msra.mxu0 0
    %3013 = vmatprep.subr.bf16.mxu0 0
    %3014 = vmatpush1.bf16.msra.mxu0 0
    %3015 = vmatprep.subr.bf16.mxu0 0
    %3016 = vmatpush1.bf16.msra.mxu0 0
    %3017 = vmatprep.subr.bf16.mxu0 0
    %3018 = vmatpush1.bf16.msra.mxu0 0
    %3019 = vmatprep.subr.bf16.mxu0 0
    %3020 = vmatpush1.bf16.msra.mxu0 0
    %3021 = vmatprep.subr.bf16.mxu0 0
    %3022 = vmatpush1.bf16.msra.mxu0 0
    %3023 = vmatprep.subr.bf16.mxu0 0
    %3024 = vmatpush1.bf16.msra.mxu0 0
    %3025 = vmatprep.subr.bf16.mxu0 0
    %3026 = vmatpush1.bf16.msra.mxu0 0
    %3027 = vmatprep.subr.bf16.mxu0 0
    %3028 = vmatpush1.bf16.msra.mxu0 0
    %3029 = vmatprep.subr.bf16.mxu0 0
    %3030 = vmatpush1.bf16.msra.mxu0 0
    %3031 = vmatprep.subr.bf16.mxu0 0
    %3032 = vmatpush1.bf16.msra.mxu0 0
    %3033 = vmatprep.mubr.bf16.mxu0 0
    %3034 = vmatmul.mubr.bf16.gmra.mrb[0].mxu0 %v2996
    %v3035 = vpop.f32.mrb[0].mxu0
    %v3036 = vadd.f32 0.0, %v3035
    %v3037 = vpop.f32.mrb[0].mxu0
    %v3038 = vpop.f32.mrb[0].mxu0
    %v3039 = vpop.f32.mrb[0].mxu0
    %3040 = vdwg.mxu0
    %vm3041 = vcmp.ge.f32.partialorder %v3036, 0.0
    %v3042 = vmul.f32 %v3036, 0.2
    %v3043 = vsel %vm3041, %v3036, %v3042
    %v3044 = vpack.c.bf16 %v3043, %v3043
    %3045 = vmatprep.subr.bf16.mxu0 0
    %3046 = vmatpush1.bf16.msra.mxu0 %v2699
    %3047 = vmatprep.subr.bf16.mxu0 0
    %3048 = vmatpush1.bf16.msra.mxu0 %v2700
    %3049 = vmatprep.subr.bf16.mxu0 0
    %3050 = vmatpush1.bf16.msra.mxu0 %v2701
    %3051 = vmatprep.subr.bf16.mxu0 0
    %3052 = vmatpush1.bf16.msra.mxu0 %v2702
    %3053 = vmatprep.subr.bf16.mxu0 0
    %3054 = vmatpush1.bf16.msra.mxu0 %v2703
    %3055 = vmatprep.subr.bf16.mxu0 0
    %3056 = vmatpush1.bf16.msra.mxu0 %v2704
    %3057 = vmatprep.subr.bf16.mxu0 0
    %3058 = vmatpush1.bf16.msra.mxu0 %v2705
    %3059 = vmatprep.subr.bf16.mxu0 0
    %3060 = vmatpush1.bf16.msra.mxu0 %v2706
    %3061 = vmatprep.subr.bf16.mxu0 0
    %3062 = vmatpush1.bf16.msra.mxu0 0
    %3063 = vmatprep.subr.bf16.mxu0 0
    %3064 = vmatpush1.bf16.msra.mxu0 0
    %3065 = vmatprep.subr.bf16.mxu0 0
    %3066 = vmatpush1.bf16.msra.mxu0 0
    %3067 = vmatprep.subr.bf16.mxu0 0
    %3068 = vmatpush1.bf16.msra.mxu0 0
    %3069 = vmatprep.subr.bf16.mxu0 0
    %3070 = vmatpush1.bf16.msra.mxu0 0
    %3071 = vmatprep.subr.bf16.mxu0 0
    %3072 = vmatpush1.bf16.msra.mxu0 0
    %3073 = vmatprep.subr.bf16.mxu0 0
    %3074 = vmatpush1.bf16.msra.mxu0 0
    %3075 = vmatprep.subr.bf16.mxu0 0
    %3076 = vmatpush1.bf16.msra.mxu0 0
    %3077 = vmatprep.mubr.bf16.mxu0 0
    %3078 = vmatmul.mubr.bf16.gmra.mrb[0].mxu0 %v3044
    %v3079 = vpop.f32.mrb[0].mxu0
    %v3080 = vadd.f32 %v2801, %v3079
    %v3081 = vpop.f32.mrb[0].mxu0
    %v3082 = vpop.f32.mrb[0].mxu0
    %v3083 = vpop.f32.mrb[0].mxu0
    %3084 = vdwg.mxu0
    %v3085 = vmul.f32 %v3080, 0.70710677
    %v3086 = vadd.f32 %v3085, 0.0
    %3088 = vrot.lane.b32.xlu0 %v3085, 112
    %v3089 = vpop.permute.xlu0 %3088
    %v3091 = vadd.f32 %v3086, %v3089
    %v3092 = vrcp.pop 2.0
    %v3093 = vmul.f32 %v3091, %v3092
    %v3094 = vsub.f32 %v3085, %v3093
    %v3095 = vmul.f32 %v3094, %v3094
    %v3096 = vadd.f32 %v3095, 0.0
    %3098 = vrot.lane.b32.xlu0 %v3093, 16
    %v3099 = vpop.permute.xlu0 %3098
    %v3101 = vsub.f32 %v3085, %v3099
    %v3102 = vmul.f32 %v3101, %v3101
    %3104 = vrot.lane.b32.xlu0 %v3102, 112
    %v3105 = vpop.permute.xlu0 %3104
    %v3107 = vadd.f32 %v3096, %v3105
    %v3108 = vrsqrt.pop %v3107
    %v3109 = vmul.f32 %v3107, %v3108
    %vm3110 = vcmp.eq.f32.partialorder %v3107, inf
    %v3111 = vsel %vm3110, %v3107, %v3109
    %vm3112 = vcmp.eq.f32.partialorder %v3107, 0.0
    %v3113 = vand.u32 %v3107, 2147483648
    %v3114 = vsel %vm3112, %v3113, %v3111
    %v3115 = vsel %vm1739, %v3114, 0.0
    %3116 = vadd.xlane.f32.xlu0 %v3115
    %v3117 = vpop.xlane.xlu0 %3116
    %v3118 = vrot.slane %v3117, 4
    %v3119 = vadd.f32 %v3117, %v3118
    %v3120 = vrot.slane %v3119, 2
    %v3121 = vadd.f32 %v3119, %v3120
    %v3122 = vrot.slane %v3121, 1
    %v3123 = vadd.f32 %v3121, %v3122
    %s3124 = vtos %v3123
    %v3125 = vrcp.pop 128.0
    %s3126 = vtos %v3125
    %s3127 = smul.f32 %s3124, %s3126
    %v3128 = vstv %s3127
    %v3129 = vadd.f32 %v3128, 0.0
    %v3130 = vld [vmem:[%s3 + $0x140] sm:$0xf]
    %v3131 = vld [vmem:[%s3 + $0x144] sm:$0xf]
    %v3132 = vld [vmem:[%s3 + $0x148] sm:$0xf]
    %v3133 = vld [vmem:[%s3 + $0x14c] sm:$0xf]
    %v3134 = vld [vmem:[%s3 + $0x150] sm:$0xf]
    %v3135 = vld [vmem:[%s3 + $0x154] sm:$0xf]
    %v3136 = vld [vmem:[%s3 + $0x158] sm:$0xf]
    %v3137 = vld [vmem:[%s3 + $0x15c] sm:$0xf]
    %v3138 = vld [vmem:[%s3 + $0x160] sm:$0xf]
    %v3139 = vld [vmem:[%s3 + $0x164] sm:$0xf]
    %v3140 = vld [vmem:[%s3 + $0x168] sm:$0xf]
    %v3141 = vld [vmem:[%s3 + $0x16c] sm:$0xf]
    %v3142 = vld [vmem:[%s3 + $0x170] sm:$0xf]
    %v3143 = vld [vmem:[%s3 + $0x174] sm:$0xf]
    %v3144 = vld [vmem:[%s3 + $0x178] sm:$0xf]
    %v3145 = vld [vmem:[%s3 + $0x17c] sm:$0xf]
    %v3146 = vld [vmem:[%s3 + $0x180] sm:$0xf]
    %v3147 = vld [vmem:[%s3 + $0x184] sm:$0xf]
    %v3148 = vld [vmem:[%s3 + $0x188] sm:$0xf]
    %v3149 = vld [vmem:[%s3 + $0x18c] sm:$0xf]
    %v3150 = vld [vmem:[%s3 + $0x190] sm:$0xf]
    %v3151 = vld [vmem:[%s3 + $0x194] sm:$0xf]
    %v3152 = vld [vmem:[%s3 + $0x198] sm:$0xf]
    %v3153 = vld [vmem:[%s3 + $0x19c] sm:$0xf]
    %v3154 = vld [vmem:[%s3 + $0x1a0] sm:$0xf]
    %v3155 = vld [vmem:[%s3 + $0x1a4] sm:$0xf]
    %v3156 = vld [vmem:[%s3 + $0x1a8] sm:$0xf]
    %v3157 = vld [vmem:[%s3 + $0x1ac] sm:$0xf]
    %v3158 = vld [vmem:[%s3 + $0x1b0] sm:$0xf]
    %v3159 = vld [vmem:[%s3 + $0x1b4] sm:$0xf]
    %v3160 = vld [vmem:[%s3 + $0x1b8] sm:$0xf]
    %v3161 = vld [vmem:[%s3 + $0x1bc] sm:$0xf]
    %v3162 = vld [vmem:[%s3 + $0x1c0] sm:$0xf]
    %v3163 = vld [vmem:[%s3 + $0x1c4] sm:$0xf]
    %v3164 = vld [vmem:[%s3 + $0x1c8] sm:$0xf]
    %v3165 = vld [vmem:[%s3 + $0x1cc] sm:$0xf]
    %v3166 = vpack.c.bf16 %v3129, %v3085
    %v3171 = vunpack.c.l.b16 %v3130
    %v3172 = vunpack.c.l.b16 %v3131
    %v3173 = vunpack.c.l.b16 %v3132
    %v3174 = vunpack.c.l.b16 %v3133
    %v3175 = vpack.c.b16 %v3172, %v3171
    %v3176 = vpack.c.b16 %v3174, %v3173
    %vm3179 = vcmask 261120
    %v3181 = vsel %vm3179, %v3166, 0
    %3183 = vmatprep.subr.bf16.mxu0 0
    %3184 = vmatpush1.bf16.msra.mxu0 %v3175
    %3185 = vmatprep.subr.bf16.mxu0 0
    %3186 = vmatpush1.bf16.msra.mxu0 %v3176
    %3187 = vmatprep.subr.bf16.mxu0 0
    %3188 = vmatpush1.bf16.msra.mxu0 0
    %3189 = vmatprep.subr.bf16.mxu0 0
    %3190 = vmatpush1.bf16.msra.mxu0 0
    %3191 = vmatprep.subr.bf16.mxu0 0
    %3192 = vmatpush1.bf16.msra.mxu0 0
    %3193 = vmatprep.subr.bf16.mxu0 0
    %3194 = vmatpush1.bf16.msra.mxu0 0
    %3195 = vmatprep.subr.bf16.mxu0 0
    %3196 = vmatpush1.bf16.msra.mxu0 0
    %3197 = vmatprep.subr.bf16.mxu0 0
    %3198 = vmatpush1.bf16.msra.mxu0 0
    %3199 = vmatprep.subr.bf16.mxu0 0
    %3200 = vmatpush1.bf16.msra.mxu0 0
    %3201 = vmatprep.subr.bf16.mxu0 0
    %3202 = vmatpush1.bf16.msra.mxu0 0
    %3203 = vmatprep.subr.bf16.mxu0 0
    %3204 = vmatpush1.bf16.msra.mxu0 0
    %3205 = vmatprep.subr.bf16.mxu0 0
    %3206 = vmatpush1.bf16.msra.mxu0 0
    %3207 = vmatprep.subr.bf16.mxu0 0
    %3208 = vmatpush1.bf16.msra.mxu0 0
    %3209 = vmatprep.subr.bf16.mxu0 0
    %3210 = vmatpush1.bf16.msra.mxu0 0
    %3211 = vmatprep.subr.bf16.mxu0 0
    %3212 = vmatpush1.bf16.msra.mxu0 0
    %3213 = vmatprep.subr.bf16.mxu0 0
    %3214 = vmatpush1.bf16.msra.mxu0 0
    %3215 = vmatprep.mubr.bf16.mxu0 0
    %3216 = vmatmul.mubr.bf16.gmra.mrb[0].mxu0 %v3181
    %v3217 = vpop.f32.mrb[0].mxu0
    %v3218 = vadd.f32 0.0, %v3217
    %v3219 = vpop.f32.mrb[0].mxu0
    %v3220 = vpop.f32.mrb[0].mxu0
    %v3221 = vadd.f32 0.0, %v3220
    %v3222 = vpop.f32.mrb[0].mxu0
    %3223 = vdwg.mxu0
    %v3228 = vunpack.c.l.b16 %v3134
    %v3229 = vunpack.c.l.b16 %v3135
    %v3230 = vunpack.c.l.b16 %v3136
    %v3231 = vunpack.c.l.b16 %v3137
    %v3232 = vpack.c.b16 %v3229, %v3228
    %v3233 = vpack.c.b16 %v3231, %v3230
    %3236 = vmatprep.subr.bf16.mxu0 0
    %3237 = vmatpush1.bf16.msra.mxu0 %v3232
    %3238 = vmatprep.subr.bf16.mxu0 0
    %3239 = vmatpush1.bf16.msra.mxu0 %v3233
    %3240 = vmatprep.subr.bf16.mxu0 0
    %3241 = vmatpush1.bf16.msra.mxu0 0
    %3242 = vmatprep.subr.bf16.mxu0 0
    %3243 = vmatpush1.bf16.msra.mxu0 0
    %3244 = vmatprep.subr.bf16.mxu0 0
    %3245 = vmatpush1.bf16.msra.mxu0 0
    %3246 = vmatprep.subr.bf16.mxu0 0
    %3247 = vmatpush1.bf16.msra.mxu0 0
    %3248 = vmatprep.subr.bf16.mxu0 0
    %3249 = vmatpush1.bf16.msra.mxu0 0
    %3250 = vmatprep.subr.bf16.mxu0 0
    %3251 = vmatpush1.bf16.msra.mxu0 0
    %3252 = vmatprep.subr.bf16.mxu0 0
    %3253 = vmatpush1.bf16.msra.mxu0 0
    %3254 = vmatprep.subr.bf16.mxu0 0
    %3255 = vmatpush1.bf16.msra.mxu0 0
    %3256 = vmatprep.subr.bf16.mxu0 0
    %3257 = vmatpush1.bf16.msra.mxu0 0
    %3258 = vmatprep.subr.bf16.mxu0 0
    %3259 = vmatpush1.bf16.msra.mxu0 0
    %3260 = vmatprep.subr.bf16.mxu0 0
    %3261 = vmatpush1.bf16.msra.mxu0 0
    %3262 = vmatprep.subr.bf16.mxu0 0
    %3263 = vmatpush1.bf16.msra.mxu0 0
    %3264 = vmatprep.subr.bf16.mxu0 0
    %3265 = vmatpush1.bf16.msra.mxu0 0
    %3266 = vmatprep.subr.bf16.mxu0 0
    %3267 = vmatpush1.bf16.msra.mxu0 0
    %3268 = vmatprep.mubr.bf16.mxu0 0
    %3269 = vmatmul.mubr.bf16.gmra.mrb[0].mxu0 %v3181
    %v3270 = vpop.f32.mrb[0].mxu0
    %v3271 = vadd.f32 0.0, %v3270
    %v3272 = vpop.f32.mrb[0].mxu0
    %v3273 = vpop.f32.mrb[0].mxu0
    %v3274 = vadd.f32 0.0, %v3273
    %v3275 = vpop.f32.mrb[0].mxu0
    %3276 = vdwg.mxu0
    %v3281 = vunpack.c.l.b16 %v3138
    %v3282 = vunpack.c.l.b16 %v3139
    %v3283 = vunpack.c.l.b16 %v3140
    %v3284 = vunpack.c.l.b16 %v3141
    %v3285 = vpack.c.b16 %v3282, %v3281
    %v3286 = vpack.c.b16 %v3284, %v3283
    %3289 = vmatprep.subr.bf16.mxu0 0
    %3290 = vmatpush1.bf16.msra.mxu0 %v3285
    %3291 = vmatprep.subr.bf16.mxu0 0
    %3292 = vmatpush1.bf16.msra.mxu0 %v3286
    %3293 = vmatprep.subr.bf16.mxu0 0
    %3294 = vmatpush1.bf16.msra.mxu0 0
    %3295 = vmatprep.subr.bf16.mxu0 0
    %3296 = vmatpush1.bf16.msra.mxu0 0
    %3297 = vmatprep.subr.bf16.mxu0 0
    %3298 = vmatpush1.bf16.msra.mxu0 0
    %3299 = vmatprep.subr.bf16.mxu0 0
    %3300 = vmatpush1.bf16.msra.mxu0 0
    %3301 = vmatprep.subr.bf16.mxu0 0
    %3302 = vmatpush1.bf16.msra.mxu0 0
    %3303 = vmatprep.subr.bf16.mxu0 0
    %3304 = vmatpush1.bf16.msra.mxu0 0
    %3305 = vmatprep.subr.bf16.mxu0 0
    %3306 = vmatpush1.bf16.msra.mxu0 0
    %3307 = vmatprep.subr.bf16.mxu0 0
    %3308 = vmatpush1.bf16.msra.mxu0 0
    %3309 = vmatprep.subr.bf16.mxu0 0
    %3310 = vmatpush1.bf16.msra.mxu0 0
    %3311 = vmatprep.subr.bf16.mxu0 0
    %3312 = vmatpush1.bf16.msra.mxu0 0
    %3313 = vmatprep.subr.bf16.mxu0 0
    %3314 = vmatpush1.bf16.msra.mxu0 0
    %3315 = vmatprep.subr.bf16.mxu0 0
    %3316 = vmatpush1.bf16.msra.mxu0 0
    %3317 = vmatprep.subr.bf16.mxu0 0
    %3318 = vmatpush1.bf16.msra.mxu0 0
    %3319 = vmatprep.subr.bf16.mxu0 0
    %3320 = vmatpush1.bf16.msra.mxu0 0
    %3321 = vmatprep.mubr.bf16.mxu0 0
    %3322 = vmatmul.mubr.bf16.gmra.mrb[0].mxu0 %v3181
    %v3323 = vpop.f32.mrb[0].mxu0
    %v3324 = vadd.f32 0.0, %v3323
    %v3325 = vpop.f32.mrb[0].mxu0
    %v3326 = vpop.f32.mrb[0].mxu0
    %v3327 = vadd.f32 0.0, %v3326
    %v3328 = vpop.f32.mrb[0].mxu0
    %3329 = vdwg.mxu0
    %v3334 = vunpack.c.l.b16 %v3142
    %v3335 = vunpack.c.l.b16 %v3143
    %v3336 = vunpack.c.l.b16 %v3144
    %v3337 = vunpack.c.l.b16 %v3145
    %v3338 = vpack.c.b16 %v3335, %v3334
    %v3339 = vpack.c.b16 %v3337, %v3336
    %3342 = vmatprep.subr.bf16.mxu0 0
    %3343 = vmatpush1.bf16.msra.mxu0 %v3338
    %3344 = vmatprep.subr.bf16.mxu0 0
    %3345 = vmatpush1.bf16.msra.mxu0 %v3339
    %3346 = vmatprep.subr.bf16.mxu0 0
    %3347 = vmatpush1.bf16.msra.mxu0 0
    %3348 = vmatprep.subr.bf16.mxu0 0
    %3349 = vmatpush1.bf16.msra.mxu0 0
    %3350 = vmatprep.subr.bf16.mxu0 0
    %3351 = vmatpush1.bf16.msra.mxu0 0
    %3352 = vmatprep.subr.bf16.mxu0 0
    %3353 = vmatpush1.bf16.msra.mxu0 0
    %3354 = vmatprep.subr.bf16.mxu0 0
    %3355 = vmatpush1.bf16.msra.mxu0 0
    %3356 = vmatprep.subr.bf16.mxu0 0
    %3357 = vmatpush1.bf16.msra.mxu0 0
    %3358 = vmatprep.subr.bf16.mxu0 0
    %3359 = vmatpush1.bf16.msra.mxu0 0
    %3360 = vmatprep.subr.bf16.mxu0 0
    %3361 = vmatpush1.bf16.msra.mxu0 0
    %3362 = vmatprep.subr.bf16.mxu0 0
    %3363 = vmatpush1.bf16.msra.mxu0 0
    %3364 = vmatprep.subr.bf16.mxu0 0
    %3365 = vmatpush1.bf16.msra.mxu0 0
    %3366 = vmatprep.subr.bf16.mxu0 0
    %3367 = vmatpush1.bf16.msra.mxu0 0
    %3368 = vmatprep.subr.bf16.mxu0 0
    %3369 = vmatpush1.bf16.msra.mxu0 0
    %3370 = vmatprep.subr.bf16.mxu0 0
    %3371 = vmatpush1.bf16.msra.mxu0 0
    %3372 = vmatprep.subr.bf16.mxu0 0
    %3373 = vmatpush1.bf16.msra.mxu0 0
    %3374 = vmatprep.mubr.bf16.mxu0 0
    %3375 = vmatmul.mubr.bf16.gmra.mrb[0].mxu0 %v3181
    %v3376 = vpop.f32.mrb[0].mxu0
    %v3377 = vadd.f32 0.0, %v3376
    %v3378 = vpop.f32.mrb[0].mxu0
    %v3379 = vpop.f32.mrb[0].mxu0
    %v3380 = vadd.f32 0.0, %v3379
    %v3381 = vpop.f32.mrb[0].mxu0
    %3382 = vdwg.mxu0
    %v3387 = vunpack.c.l.b16 %v3146
    %v3388 = vunpack.c.l.b16 %v3147
    %v3389 = vunpack.c.l.b16 %v3148
    %v3390 = vunpack.c.l.b16 %v3149
    %v3391 = vpack.c.b16 %v3388, %v3387
    %v3392 = vpack.c.b16 %v3390, %v3389
    %3395 = vmatprep.subr.bf16.mxu0 0
    %3396 = vmatpush1.bf16.msra.mxu0 %v3391
    %3397 = vmatprep.subr.bf16.mxu0 0
    %3398 = vmatpush1.bf16.msra.mxu0 %v3392
    %3399 = vmatprep.subr.bf16.mxu0 0
    %3400 = vmatpush1.bf16.msra.mxu0 0
    %3401 = vmatprep.subr.bf16.mxu0 0
    %3402 = vmatpush1.bf16.msra.mxu0 0
    %3403 = vmatprep.subr.bf16.mxu0 0
    %3404 = vmatpush1.bf16.msra.mxu0 0
    %3405 = vmatprep.subr.bf16.mxu0 0
    %3406 = vmatpush1.bf16.msra.mxu0 0
    %3407 = vmatprep.subr.bf16.mxu0 0
    %3408 = vmatpush1.bf16.msra.mxu0 0
    %3409 = vmatprep.subr.bf16.mxu0 0
    %3410 = vmatpush1.bf16.msra.mxu0 0
    %3411 = vmatprep.subr.bf16.mxu0 0
    %3412 = vmatpush1.bf16.msra.mxu0 0
    %3413 = vmatprep.subr.bf16.mxu0 0
    %3414 = vmatpush1.bf16.msra.mxu0 0
    %3415 = vmatprep.subr.bf16.mxu0 0
    %3416 = vmatpush1.bf16.msra.mxu0 0
    %3417 = vmatprep.subr.bf16.mxu0 0
    %3418 = vmatpush1.bf16.msra.mxu0 0
    %3419 = vmatprep.subr.bf16.mxu0 0
    %3420 = vmatpush1.bf16.msra.mxu0 0
    %3421 = vmatprep.subr.bf16.mxu0 0
    %3422 = vmatpush1.bf16.msra.mxu0 0
    %3423 = vmatprep.subr.bf16.mxu0 0
    %3424 = vmatpush1.bf16.msra.mxu0 0
    %3425 = vmatprep.subr.bf16.mxu0 0
    %3426 = vmatpush1.bf16.msra.mxu0 0
    %3427 = vmatprep.mubr.bf16.mxu0 0
    %3428 = vmatmul.mubr.bf16.gmra.mrb[0].mxu0 %v3181
    %v3429 = vpop.f32.mrb[0].mxu0
    %v3430 = vadd.f32 0.0, %v3429
    %v3431 = vpop.f32.mrb[0].mxu0
    %v3432 = vpop.f32.mrb[0].mxu0
    %v3433 = vadd.f32 0.0, %v3432
    %v3434 = vpop.f32.mrb[0].mxu0
    %3435 = vdwg.mxu0
    %v3440 = vunpack.c.l.b16 %v3150
    %v3441 = vunpack.c.l.b16 %v3151
    %v3442 = vunpack.c.l.b16 %v3152
    %v3443 = vunpack.c.l.b16 %v3153
    %v3444 = vpack.c.b16 %v3441, %v3440
    %v3445 = vpack.c.b16 %v3443, %v3442
    %3448 = vmatprep.subr.bf16.mxu0 0
    %3449 = vmatpush1.bf16.msra.mxu0 %v3444
    %3450 = vmatprep.subr.bf16.mxu0 0
    %3451 = vmatpush1.bf16.msra.mxu0 %v3445
    %3452 = vmatprep.subr.bf16.mxu0 0
    %3453 = vmatpush1.bf16.msra.mxu0 0
    %3454 = vmatprep.subr.bf16.mxu0 0
    %3455 = vmatpush1.bf16.msra.mxu0 0
    %3456 = vmatprep.subr.bf16.mxu0 0
    %3457 = vmatpush1.bf16.msra.mxu0 0
    %3458 = vmatprep.subr.bf16.mxu0 0
    %3459 = vmatpush1.bf16.msra.mxu0 0
    %3460 = vmatprep.subr.bf16.mxu0 0
    %3461 = vmatpush1.bf16.msra.mxu0 0
    %3462 = vmatprep.subr.bf16.mxu0 0
    %3463 = vmatpush1.bf16.msra.mxu0 0
    %3464 = vmatprep.subr.bf16.mxu0 0
    %3465 = vmatpush1.bf16.msra.mxu0 0
    %3466 = vmatprep.subr.bf16.mxu0 0
    %3467 = vmatpush1.bf16.msra.mxu0 0
    %3468 = vmatprep.subr.bf16.mxu0 0
    %3469 = vmatpush1.bf16.msra.mxu0 0
    %3470 = vmatprep.subr.bf16.mxu0 0
    %3471 = vmatpush1.bf16.msra.mxu0 0
    %3472 = vmatprep.subr.bf16.mxu0 0
    %3473 = vmatpush1.bf16.msra.mxu0 0
    %3474 = vmatprep.subr.bf16.mxu0 0
    %3475 = vmatpush1.bf16.msra.mxu0 0
    %3476 = vmatprep.subr.bf16.mxu0 0
    %3477 = vmatpush1.bf16.msra.mxu0 0
    %3478 = vmatprep.subr.bf16.mxu0 0
    %3479 = vmatpush1.bf16.msra.mxu0 0
    %3480 = vmatprep.mubr.bf16.mxu0 0
    %3481 = vmatmul.mubr.bf16.gmra.mrb[0].mxu0 %v3181
    %v3482 = vpop.f32.mrb[0].mxu0
    %v3483 = vadd.f32 0.0, %v3482
    %v3484 = vpop.f32.mrb[0].mxu0
    %v3485 = vpop.f32.mrb[0].mxu0
    %v3486 = vadd.f32 0.0, %v3485
    %v3487 = vpop.f32.mrb[0].mxu0
    %3488 = vdwg.mxu0
    %v3493 = vunpack.c.l.b16 %v3154
    %v3494 = vunpack.c.l.b16 %v3155
    %v3495 = vunpack.c.l.b16 %v3156
    %v3496 = vunpack.c.l.b16 %v3157
    %v3497 = vpack.c.b16 %v3494, %v3493
    %v3498 = vpack.c.b16 %v3496, %v3495
    %3501 = vmatprep.subr.bf16.mxu0 0
    %3502 = vmatpush1.bf16.msra.mxu0 %v3497
    %3503 = vmatprep.subr.bf16.mxu0 0
    %3504 = vmatpush1.bf16.msra.mxu0 %v3498
    %3505 = vmatprep.subr.bf16.mxu0 0
    %3506 = vmatpush1.bf16.msra.mxu0 0
    %3507 = vmatprep.subr.bf16.mxu0 0
    %3508 = vmatpush1.bf16.msra.mxu0 0
    %3509 = vmatprep.subr.bf16.mxu0 0
    %3510 = vmatpush1.bf16.msra.mxu0 0
    %3511 = vmatprep.subr.bf16.mxu0 0
    %3512 = vmatpush1.bf16.msra.mxu0 0
    %3513 = vmatprep.subr.bf16.mxu0 0
    %3514 = vmatpush1.bf16.msra.mxu0 0
    %3515 = vmatprep.subr.bf16.mxu0 0
    %3516 = vmatpush1.bf16.msra.mxu0 0
    %3517 = vmatprep.subr.bf16.mxu0 0
    %3518 = vmatpush1.bf16.msra.mxu0 0
    %3519 = vmatprep.subr.bf16.mxu0 0
    %3520 = vmatpush1.bf16.msra.mxu0 0
    %3521 = vmatprep.subr.bf16.mxu0 0
    %3522 = vmatpush1.bf16.msra.mxu0 0
    %3523 = vmatprep.subr.bf16.mxu0 0
    %3524 = vmatpush1.bf16.msra.mxu0 0
    %3525 = vmatprep.subr.bf16.mxu0 0
    %3526 = vmatpush1.bf16.msra.mxu0 0
    %3527 = vmatprep.subr.bf16.mxu0 0
    %3528 = vmatpush1.bf16.msra.mxu0 0
    %3529 = vmatprep.subr.bf16.mxu0 0
    %3530 = vmatpush1.bf16.msra.mxu0 0
    %3531 = vmatprep.subr.bf16.mxu0 0
    %3532 = vmatpush1.bf16.msra.mxu0 0
    %3533 = vmatprep.mubr.bf16.mxu0 0
    %3534 = vmatmul.mubr.bf16.gmra.mrb[0].mxu0 %v3181
    %v3535 = vpop.f32.mrb[0].mxu0
    %v3536 = vadd.f32 0.0, %v3535
    %v3537 = vpop.f32.mrb[0].mxu0
    %v3538 = vpop.f32.mrb[0].mxu0
    %v3539 = vadd.f32 0.0, %v3538
    %v3540 = vpop.f32.mrb[0].mxu0
    %3541 = vdwg.mxu0
    %v3546 = vunpack.c.l.b16 %v3158
    %v3547 = vunpack.c.l.b16 %v3159
    %v3548 = vunpack.c.l.b16 %v3160
    %v3549 = vunpack.c.l.b16 %v3161
    %v3550 = vpack.c.b16 %v3547, %v3546
    %v3551 = vpack.c.b16 %v3549, %v3548
    %3554 = vmatprep.subr.bf16.mxu0 0
    %3555 = vmatpush1.bf16.msra.mxu0 %v3550
    %3556 = vmatprep.subr.bf16.mxu0 0
    %3557 = vmatpush1.bf16.msra.mxu0 %v3551
    %3558 = vmatprep.subr.bf16.mxu0 0
    %3559 = vmatpush1.bf16.msra.mxu0 0
    %3560 = vmatprep.subr.bf16.mxu0 0
    %3561 = vmatpush1.bf16.msra.mxu0 0
    %3562 = vmatprep.subr.bf16.mxu0 0
    %3563 = vmatpush1.bf16.msra.mxu0 0
    %3564 = vmatprep.subr.bf16.mxu0 0
    %3565 = vmatpush1.bf16.msra.mxu0 0
    %3566 = vmatprep.subr.bf16.mxu0 0
    %3567 = vmatpush1.bf16.msra.mxu0 0
    %3568 = vmatprep.subr.bf16.mxu0 0
    %3569 = vmatpush1.bf16.msra.mxu0 0
    %3570 = vmatprep.subr.bf16.mxu0 0
    %3571 = vmatpush1.bf16.msra.mxu0 0
    %3572 = vmatprep.subr.bf16.mxu0 0
    %3573 = vmatpush1.bf16.msra.mxu0 0
    %3574 = vmatprep.subr.bf16.mxu0 0
    %3575 = vmatpush1.bf16.msra.mxu0 0
    %3576 = vmatprep.subr.bf16.mxu0 0
    %3577 = vmatpush1.bf16.msra.mxu0 0
    %3578 = vmatprep.subr.bf16.mxu0 0
    %3579 = vmatpush1.bf16.msra.mxu0 0
    %3580 = vmatprep.subr.bf16.mxu0 0
    %3581 = vmatpush1.bf16.msra.mxu0 0
    %3582 = vmatprep.subr.bf16.mxu0 0
    %3583 = vmatpush1.bf16.msra.mxu0 0
    %3584 = vmatprep.subr.bf16.mxu0 0
    %3585 = vmatpush1.bf16.msra.mxu0 0
    %3586 = vmatprep.mubr.bf16.mxu0 0
    %3587 = vmatmul.mubr.bf16.gmra.mrb[0].mxu0 %v3181
    %v3588 = vpop.f32.mrb[0].mxu0
    %v3589 = vadd.f32 0.0, %v3588
    %v3590 = vpop.f32.mrb[0].mxu0
    %v3591 = vpop.f32.mrb[0].mxu0
    %v3592 = vadd.f32 0.0, %v3591
    %v3593 = vpop.f32.mrb[0].mxu0
    %3594 = vdwg.mxu0
    %v3599 = vunpack.c.l.b16 %v3162
    %v3600 = vunpack.c.l.b16 %v3163
    %v3601 = vunpack.c.l.b16 %v3164
    %v3602 = vunpack.c.l.b16 %v3165
    %v3603 = vpack.c.b16 %v3600, %v3599
    %v3604 = vpack.c.b16 %v3602, %v3601
    %3607 = vmatprep.subr.bf16.mxu0 0
    %3608 = vmatpush1.bf16.msra.mxu0 %v3603
    %3609 = vmatprep.subr.bf16.mxu0 0
    %3610 = vmatpush1.bf16.msra.mxu0 %v3604
    %3611 = vmatprep.subr.bf16.mxu0 0
    %3612 = vmatpush1.bf16.msra.mxu0 0
    %3613 = vmatprep.subr.bf16.mxu0 0
    %3614 = vmatpush1.bf16.msra.mxu0 0
    %3615 = vmatprep.subr.bf16.mxu0 0
    %3616 = vmatpush1.bf16.msra.mxu0 0
    %3617 = vmatprep.subr.bf16.mxu0 0
    %3618 = vmatpush1.bf16.msra.mxu0 0
    %3619 = vmatprep.subr.bf16.mxu0 0
    %3620 = vmatpush1.bf16.msra.mxu0 0
    %3621 = vmatprep.subr.bf16.mxu0 0
    %3622 = vmatpush1.bf16.msra.mxu0 0
    %3623 = vmatprep.subr.bf16.mxu0 0
    %3624 = vmatpush1.bf16.msra.mxu0 0
    %3625 = vmatprep.subr.bf16.mxu0 0
    %3626 = vmatpush1.bf16.msra.mxu0 0
    %3627 = vmatprep.subr.bf16.mxu0 0
    %3628 = vmatpush1.bf16.msra.mxu0 0
    %3629 = vmatprep.subr.bf16.mxu0 0
    %3630 = vmatpush1.bf16.msra.mxu0 0
    %3631 = vmatprep.subr.bf16.mxu0 0
    %3632 = vmatpush1.bf16.msra.mxu0 0
    %3633 = vmatprep.subr.bf16.mxu0 0
    %3634 = vmatpush1.bf16.msra.mxu0 0
    %3635 = vmatprep.subr.bf16.mxu0 0
    %3636 = vmatpush1.bf16.msra.mxu0 0
    %3637 = vmatprep.subr.bf16.mxu0 0
    %3638 = vmatpush1.bf16.msra.mxu0 0
    %3639 = vmatprep.mubr.bf16.mxu0 0
    %3640 = vmatmul.mubr.bf16.gmra.mrb[0].mxu0 %v3181
    %v3641 = vpop.f32.mrb[0].mxu0
    %v3642 = vadd.f32 0.0, %v3641
    %v3643 = vpop.f32.mrb[0].mxu0
    %v3644 = vpop.f32.mrb[0].mxu0
    %v3645 = vadd.f32 0.0, %v3644
    %v3646 = vpop.f32.mrb[0].mxu0
    %3647 = vdwg.mxu0
    %v3648 = vld [vmem:[%s4 + $0x24] sm:$0xf]
    %v3649 = vld [vmem:[%s4 + $0x28] sm:$0x1]
    %vm3652 = vcmask 1040384
    %v3653 = vrot.slane %v3271, 7
    %v3654 = vrot.slane %v3274, 7
    %v3655 = vsel %vm3652, %v3653, %v3654
    %v3660 = vrot.slane %v3324, 6
    %v3661 = vrot.slane %v3327, 6
    %v3662 = vsel %vm60, %v3660, %v3661
    %v3667 = vrot.slane %v3377, 5
    %v3668 = vrot.slane %v3380, 5
    %v3669 = vsel %vm53, %v3667, %v3668
    %v3674 = vrot.slane %v3430, 4
    %v3675 = vrot.slane %v3433, 4
    %v3676 = vsel %vm1633, %v3674, %v3675
    %v3681 = vrot.slane %v3483, 3
    %v3682 = vrot.slane %v3486, 3
    %v3683 = vsel %vm2760, %v3681, %v3682
    %vm3688 = vcmask 1045504
    %v3689 = vrot.slane %v3536, 2
    %v3690 = vrot.slane %v3539, 2
    %v3691 = vsel %vm3688, %v3689, %v3690
    %vm3696 = vcmask 1046528
    %v3697 = vrot.slane %v3589, 1
    %v3698 = vrot.slane %v3592, 1
    %v3699 = vsel %vm3696, %v3697, %v3698
    %v3702 = vsel %vm3652, %v3221, %v3653
    %v3703 = vsel %vm60, %v3655, %v3660
    %v3704 = vsel %vm53, %v3662, %v3667
    %v3705 = vsel %vm1633, %v3669, %v3674
    %v3706 = vsel %vm2760, %v3676, %v3681
    %v3707 = vsel %vm3688, %v3683, %v3689
    %v3708 = vsel %vm3696, %v3691, %v3697
    %v3709 = vsel %vm3652, %v3645, 1.0
    %v3710 = vpack.c.bf16 %v3702, %v3218
    %v3711 = vpack.c.bf16 %v3704, %v3703
    %v3712 = vpack.c.bf16 %v3706, %v3705
    %v3713 = vpack.c.bf16 %v3708, %v3707
    %v3714 = vpack.c.bf16 %v3642, %v3699
    %v3715 = vpack.c.bf16 %v3709, %v3709
    %v3718 = vunpack.c.l.b16 %v3648
    %v3719 = vunpack.c.l.b16 %v3649
    %v3720 = vpack.c.b16 %v3719, %v3718
    %vm3721 = vcmask 670720
    %v3723 = vsel %vm3721, %v3720, 0
    %v3726 = vsel %vm3652, %v3715, 0
    %3728 = vmatprep.subr.bf16.mxu0 0
    %3729 = vmatpush1.bf16.msra.mxu0 %v3710
    %3730 = vmatprep.subr.bf16.mxu0 0
    %3731 = vmatpush1.bf16.msra.mxu0 %v3711
    %3732 = vmatprep.subr.bf16.mxu0 0
    %3733 = vmatpush1.bf16.msra.mxu0 %v3712
    %3734 = vmatprep.subr.bf16.mxu0 0
    %3735 = vmatpush1.bf16.msra.mxu0 %v3713
    %3736 = vmatprep.subr.bf16.mxu0 0
    %3737 = vmatpush1.bf16.msra.mxu0 %v3714
    %3738 = vmatprep.subr.bf16.mxu0 0
    %3739 = vmatpush1.bf16.msra.mxu0 %v3726
    %3740 = vmatprep.subr.bf16.mxu0 0
    %3741 = vmatpush1.bf16.msra.mxu0 0
    %3742 = vmatprep.subr.bf16.mxu0 0
    %3743 = vmatpush1.bf16.msra.mxu0 0
    %3744 = vmatprep.subr.bf16.mxu0 0
    %3745 = vmatpush1.bf16.msra.mxu0 0
    %3746 = vmatprep.subr.bf16.mxu0 0
    %3747 = vmatpush1.bf16.msra.mxu0 0
    %3748 = vmatprep.subr.bf16.mxu0 0
    %3749 = vmatpush1.bf16.msra.mxu0 0
    %3750 = vmatprep.subr.bf16.mxu0 0
    %3751 = vmatpush1.bf16.msra.mxu0 0
    %3752 = vmatprep.subr.bf16.mxu0 0
    %3753 = vmatpush1.bf16.msra.mxu0 0
    %3754 = vmatprep.subr.bf16.mxu0 0
    %3755 = vmatpush1.bf16.msra.mxu0 0
    %3756 = vmatprep.subr.bf16.mxu0 0
    %3757 = vmatpush1.bf16.msra.mxu0 0
    %3758 = vmatprep.subr.bf16.mxu0 0
    %3759 = vmatpush1.bf16.msra.mxu0 0
    %3760 = vmatprep.mubr.bf16.mxu0 0
    %3761 = vmatmul.mubr.bf16.gmra.mrb[0].mxu0 %v3723
    %v3762 = vpop.f32.mrb[0].mxu0
    %v3763 = vadd.f32 0.0, %v3762
    %v3764 = vpop.f32.mrb[0].mxu0
    %v3765 = vpop.f32.mrb[0].mxu0
    %v3766 = vadd.f32 0.0, %v3765
    %v3767 = vpop.f32.mrb[0].mxu0
    %3768 = vdwg.mxu0
    %v3769 = vld [vmem:[%s5] sm:$0xff]
    %v3770 = vld [vmem:[%s5 + $0x8] sm:$0x1]
    %v3771 = vmul.f32 %v3763, %v3769
    %v3772 = vmul.f32 %v3766, %v3770
    %v3773 = vsel %vm56, %v3771, 0.0
    %vm3774 = vcmask 24576
    %v3775 = vsel %vm3774, %v3772, 0.0
    %v3776 = vadd.f32 %v3773, %v3775
    %3777 = vadd.xlane.f32.xlu0 %v3776
    %v3778 = vpop.xlane.xlu0 %3777
    %v3779 = vrot.slane %v3778, 4
    %v3780 = vadd.f32 %v3778, %v3779
    %v3781 = vrot.slane %v3780, 2
    %v3782 = vadd.f32 %v3780, %v3781
    %v3783 = vrot.slane %v3782, 1
    %v3784 = vadd.f32 %v3782, %v3783
    %s3785 = vtos %v3784
    %v3786 = vstv %s3785
    %3789 = vrot.lane.b32.xlu0 %v3769, 4
    %v3790 = vpop.permute.xlu0 %3789
    %3791 = vrot.lane.b32.xlu0 %v3770, 4
    %v3792 = vpop.permute.xlu0 %3791
    %v3795 = vmul.f32 %v3763, %v3790
    %v3796 = vmul.f32 %v3766, %v3792
    %3799 = vrot.lane.b32.xlu0 %v3795, 124
    %v3800 = vpop.permute.xlu0 %3799
    %3801 = vrot.lane.b32.xlu0 %v3796, 124
    %v3802 = vpop.permute.xlu0 %3801
    %v3805 = vsel %vm56, %v3800, 0.0
    %v3806 = vsel %vm3774, %v3802, 0.0
    %v3807 = vadd.f32 %v3805, %v3806
    %3808 = vadd.xlane.f32.xlu0 %v3807
    %v3809 = vpop.xlane.xlu0 %3808
    %v3810 = vrot.slane %v3809, 4
    %v3811 = vadd.f32 %v3809, %v3810
    %v3812 = vrot.slane %v3811, 2
    %v3813 = vadd.f32 %v3811, %v3812
    %v3814 = vrot.slane %v3813, 1
    %v3815 = vadd.f32 %v3813, %v3814
    %s3816 = vtos %v3815
    %v3817 = vstv %s3816
    %v3818 = vsel %vm1813, %v3786, %v3817
    %v3819 = vld [vmem:[#allocation2] sm:$0x1]
    %3821 = vset.pattern.permute.xlu0 0
    %3822 = vperm.xlu0 %3821, %v3819
    %v3823 = vpop.permute.xlu0 %3822
    %v3825 = vlaneseq
    %v3826 = vshrl.u32 %v3825, 7
    %v3827 = vsub.s32 0, %v3826
    %v3828 = vrot.slane %v3823, %v3827
    %v3829 = vadd.f32 %v3818, %v3828
    %vm3830 = vcmask 8192
    %3831 = vst.msk [vmem:[#allocation3] sm:$0x1] %vm3830, %v3829
    // Predicated region
    $region30: #{wave_discriminator_forward.1} parent=1 // pred_check
      _
    $region31: #{wave_discriminator_forward.1} parent=1 // pred_check_branch
      %3833 = sbr.rel (0) target = $region33
    $region32: #{wave_discriminator_forward.1} parent=1 // pred_region
      %s3835 = ssub.s32 16, 16
      %3836 = vsyncadd [#allocation4], %s3835
      %s3838 = sshll.u32 [#allocation3], 4
      %s3839 = int_to_ptr.vmem [resolvable:$true] %s3838
      %3841 = dma.vmem_to_hbm [thread:$0]  %s3839, 16, %s7, [#allocation4]
    $region33: #{wave_discriminator_forward.1} parent=1 // pred_fallthru
      _
    // Predicated region
    $region34: #{wave_discriminator_forward.1} parent=1 // pred_check
      _
    $region35: #{wave_discriminator_forward.1} parent=1 // pred_check_branch
      %3843 = sbr.rel (0) target = $region37
    $region36: #{wave_discriminator_forward.1} parent=1 // pred_region
      %3844 = dma.done [#allocation4], 16
    $region37: #{wave_discriminator_forward.1} parent=1 // pred_fallthru
      _
    %3845 = vsyncpa [#allocation4], 1

</llo_original>
